<compile_context>
chip_gen: v6e
topology: v6e:2x2x1
jax: 0.10.0
libtpu: 0.0.40
codegen_flags: <defaults>
</compile_context>

<pallas_src>
import functools
import math

import jax
import jax.numpy as jnp
from jax.experimental import pallas as pl
from jax.experimental.pallas import tpu as pltpu


# ---------------------------------------------------------------------------
# Kernel 1: fused per-head QKV projection.   x:(B,S,D) -> q,k,v:(B,H,S,hd)
# ---------------------------------------------------------------------------
def _qkv_proj_kernel(x_ref, wq_ref, wk_ref, wv_ref, bq_ref, bk_ref, bv_ref,
                     q_ref, k_ref, v_ref):
    x = x_ref[0]                                    # (ts, D), native dtype

    def _proj(w_ref, b_ref, o_ref):
        y = jnp.dot(x, w_ref[0], preferred_element_type=jnp.float32)
        y = y + b_ref[0].astype(jnp.float32)        # (1, hd) broadcast
        o_ref[0, 0] = y.astype(o_ref.dtype)

    _proj(wq_ref, bq_ref, q_ref)
    _proj(wk_ref, bk_ref, k_ref)
    _proj(wv_ref, bv_ref, v_ref)


# ---------------------------------------------------------------------------
# Kernel 2: flash-style causal attention + fused output projection.
# Grid: (B, num_q_tiles, H, num_kv_tiles)
# ---------------------------------------------------------------------------
def _make_flash_attn_kernel(tq, tk, scale):
    def kernel(q_ref, k_ref, v_ref, wo_ref, bo_ref, o_ref,
               m_sc, l_sc, acc_sc, out_sc):
        qi = pl.program_id(1)
        h = pl.program_id(2)
        kv = pl.program_id(3)
        n_h = pl.num_programs(2)
        n_kv = pl.num_programs(3)

        @pl.when(kv == 0)
        def _():                                    # per-head online-softmax init
            m_sc[...] = jnp.full_like(m_sc, -jnp.inf)
            l_sc[...] = jnp.zeros_like(l_sc)
            acc_sc[...] = jnp.zeros_like(acc_sc)

        @pl.when(jnp.logical_and(h == 0, kv == 0))
        def _():                                    # per-(b, q-tile) output init
            out_sc[...] = jnp.zeros_like(out_sc)

        q_start = qi * tq
        kv_start = kv * tk

        # Causal tile skipping: KV tiles entirely above the diagonal contribute
        # exactly 0 (exp(-10000 - m) underflows), so skip their compute.
        @pl.when(kv_start <= q_start + (tq - 1))
        def _():
            q = q_ref[0, 0]                         # (tq, hd), native dtype
            k = k_ref[0, 0]                         # (tk, hd)
            # q @ k^T on the MXU, f32 accumulation.
            s = jax.lax.dot_general(
                q, k, (((1,), (1,)), ((), ())),
                preferred_element_type=jnp.float32) * scale
            rows = q_start + jax.lax.broadcasted_iota(jnp.int32, (tq, tk), 0)
            cols = kv_start + jax.lax.broadcasted_iota(jnp.int32, (tq, tk), 1)
            s = jnp.where(rows >= cols, s, jnp.float32(-10000.0))

            m_prev = m_sc[...]
            m_new = jnp.maximum(m_prev, jnp.max(s, axis=-1, keepdims=True))
            alpha = jnp.exp(m_prev - m_new)
            p = jnp.exp(s - m_new)
            l_sc[...] = alpha * l_sc[...] + jnp.sum(p, axis=-1, keepdims=True)
            acc_sc[...] = alpha * acc_sc[...] + jnp.dot(
                p.astype(v_ref.dtype), v_ref[0, 0],
                preferred_element_type=jnp.float32)
            m_sc[...] = m_new

        # Finalize this head: normalize and fold its context into the output
        # projection accumulator (contraction over heads happens here; no
        # concatenate / merge-heads relayout is ever materialized).
        @pl.when(kv == n_kv - 1)
        def _():
            ctx = acc_sc[...] * pl.reciprocal(l_sc[...], approx=True)
            out_sc[...] += jnp.dot(ctx.astype(wo_ref.dtype), wo_ref[0],
                                   preferred_element_type=jnp.float32)

        @pl.when(jnp.logical_and(h == n_h - 1, kv == n_kv - 1))
        def _():
            o_ref[0] = (out_sc[...] + bo_ref[...].astype(jnp.float32)
                        ).astype(o_ref.dtype)

    return kernel


@functools.partial(jax.jit, static_argnames=("num_heads",))
def gpt_self_attention(x, wqkv, bqkv, wo, bo, num_heads):
    B, S, D = x.shape
    H = num_heads
    assert D % H == 0
    hd = D // H

    # ---- one-time host-side weight re-layout: split the interleaved
    # [head | q,k,v | hd] columns of Wqkv into per-head (H, D, hd) slabs and Wo
    # into per-head (H, hd, D) row slabs.  All head handling in the kernels is
    # then expressed through BlockSpec indexing only.
    wqkv_r = wqkv.reshape(D, H, 3, hd)
    wq = jnp.transpose(wqkv_r[:, :, 0, :], (1, 0, 2))      # (H, D, hd)
    wk = jnp.transpose(wqkv_r[:, :, 1, :], (1, 0, 2))
    wv = jnp.transpose(wqkv_r[:, :, 2, :], (1, 0, 2))
    bqkv_r = bqkv.reshape(H, 3, hd)
    bq = bqkv_r[:, 0:1, :]                                  # (H, 1, hd)
    bk = bqkv_r[:, 1:2, :]
    bv = bqkv_r[:, 2:3, :]
    wo_h = wo.reshape(H, hd, D)                             # (H, hd, D)

    # ---- 128-aligned tiles when the sequence allows it (fallback: full S).
    tile = 128 if S % 128 == 0 else S
    ts = tq = tk = tile
    ns, nq, nkv = S // ts, S // tq, S // tk

    vmem_limit = 32 * 1024 * 1024   # explicit budget; safe on v5e/v6e/v7x

    # ------------------ kernel 1: QKV projection ------------------
    q, k, v = pl.pallas_call(
        _qkv_proj_kernel,
        out_shape=(jax.ShapeDtypeStruct((B, H, S, hd), x.dtype),) * 3,
        grid_spec=pltpu.PrefetchScalarGridSpec(
            num_scalar_prefetch=0,
            grid=(B, ns, H),
            in_specs=[
                pl.BlockSpec((1, ts, D), lambda b, si, h: (b, si, 0)),   # x
                pl.BlockSpec((1, D, hd), lambda b, si, h: (h, 0, 0)),    # Wq
                pl.BlockSpec((1, D, hd), lambda b, si, h: (h, 0, 0)),    # Wk
                pl.BlockSpec((1, D, hd), lambda b, si, h: (h, 0, 0)),    # Wv
                pl.BlockSpec((1, 1, hd), lambda b, si, h: (h, 0, 0)),    # bq
                pl.BlockSpec((1, 1, hd), lambda b, si, h: (h, 0, 0)),    # bk
                pl.BlockSpec((1, 1, hd), lambda b, si, h: (h, 0, 0)),    # bv
            ],
            out_specs=(
                pl.BlockSpec((1, 1, ts, hd), lambda b, si, h: (b, h, si, 0)),
                pl.BlockSpec((1, 1, ts, hd), lambda b, si, h: (b, h, si, 0)),
                pl.BlockSpec((1, 1, ts, hd), lambda b, si, h: (b, h, si, 0)),
            ),
        ),
        compiler_params=pltpu.CompilerParams(
            dimension_semantics=("parallel", "parallel", "parallel"),
            vmem_limit_bytes=vmem_limit),
    )(x, wq, wk, wv, bq, bk, bv)

    # ------------- kernel 2: flash attention + output projection -------------
    scale = 1.0 / math.sqrt(hd)
    attn_kernel = _make_flash_attn_kernel(tq, tk, scale)

    out = pl.pallas_call(
        attn_kernel,
        out_shape=jax.ShapeDtypeStruct((B, S, D), x.dtype),
        grid_spec=pltpu.PrefetchScalarGridSpec(
            num_scalar_prefetch=0,
            grid=(B, nq, H, nkv),
            in_specs=[
                pl.BlockSpec((1, 1, tq, hd), lambda b, qi, h, kv: (b, h, qi, 0)),  # q
                pl.BlockSpec((1, 1, tk, hd), lambda b, qi, h, kv: (b, h, kv, 0)),  # k
                pl.BlockSpec((1, 1, tk, hd), lambda b, qi, h, kv: (b, h, kv, 0)),  # v
                pl.BlockSpec((1, hd, D), lambda b, qi, h, kv: (h, 0, 0)),          # Wo (per head)
                pl.BlockSpec((1, D), lambda b, qi, h, kv: (0, 0)),                 # bo
            ],
            out_specs=pl.BlockSpec((1, tq, D), lambda b, qi, h, kv: (b, qi, 0)),
            scratch_shapes=[
                pltpu.VMEM((tq, 1), jnp.float32),    # running max
                pltpu.VMEM((tq, 1), jnp.float32),    # running sum
                pltpu.VMEM((tq, hd), jnp.float32),   # per-head context acc
                pltpu.VMEM((tq, D), jnp.float32),    # output-projection acc
            ],
        ),
        compiler_params=pltpu.CompilerParams(
            dimension_semantics=("parallel", "parallel", "arbitrary", "arbitrary"),
            vmem_limit_bytes=vmem_limit),
    )(q, k, v, wo_h, bo)

    return out


def gpt_self_attention_ref(x, wqkv, bqkv, wo, bo, num_heads):
    """Pure-JAX reference mirroring the PyTorch forward (eval, no attn mask)."""
    B, S, D = x.shape
    hd = D // num_heads
    qkv = x @ wqkv + bqkv[0]                                 # (B,S,3D)
    qkv = qkv.reshape(B, S, num_heads, 3 * hd).transpose(0, 2, 1, 3)
    q, k, v = jnp.split(qkv, 3, axis=-1)                     # (B,H,S,hd)
    scores = jnp.einsum("bhqd,bhkd->bhqk", q, k) / math.sqrt(hd)
    causal = jnp.tril(jnp.ones((S, S), dtype=bool))[None, None]
    scores = jnp.where(causal, scores, jnp.float32(-10000.0))
    p = jax.nn.softmax(scores, axis=-1)
    ctx = jnp.einsum("bhqk,bhkd->bhqd", p, v)
    ctx = ctx.transpose(0, 2, 1, 3).reshape(B, S, D)
    return ctx @ wo + bo[0]


if __name__ == "__main__":
    # Small but tile-exercising shapes: 2 query tiles x 2 kv tiles, 4 heads,
    # head_dim=32, lane-dense (D=128) output stores.
    B, S, D, H = 2, 256, 128, 4

    key = jax.random.PRNGKey(0)
    kx, kw1, kb1, kw2, kb2 = jax.random.split(key, 5)

    x    = jax.random.normal(kx,  (B, S, D), dtype=jnp.float32)
    wqkv = jax.random.normal(kw1, (D, 3 * D), dtype=jnp.float32) * (1.0 / math.sqrt(D))
    bqkv = jax.random.normal(kb1, (1, 3 * D), dtype=jnp.float32) * 0.02
    wo   = jax.random.normal(kw2, (D, D), dtype=jnp.float32) * (1.0 / math.sqrt(D))
    bo   = jax.random.normal(kb2, (1, D), dtype=jnp.float32) * 0.02

    out = gpt_self_attention(x, wqkv, bqkv, wo, bo, H)
    out = jax.block_until_ready(out)

    ref = gpt_self_attention_ref(x, wqkv, bqkv, wo, bo, H)
    # Tolerance accounts for approx (EUP) reciprocal + online-softmax reordering.
    assert jnp.allclose(out, ref, atol=2e-2, rtol=2e-2), "mismatch vs reference"

    # TODO(synk): attention_dropout / dropout are identity here (eval / p=0);
    # optional attention_mask input is assumed None; fused-scale-mask-softmax
    # path is the same math and is handled by the plain causal path.
    print("KERNEL_OK")
</pallas_src>

<mosaic_0001>
module attributes {stable_mosaic.version = 11 : i64} {
  func.func @_qkv_proj_kernel(%arg0: i32, %arg1: i32, %arg2: i32, %arg3: memref<1x128x128xf32, #tpu.memory_space<vmem>>, %arg4: memref<1x128x32xf32, #tpu.memory_space<vmem>>, %arg5: memref<1x128x32xf32, #tpu.memory_space<vmem>>, %arg6: memref<1x128x32xf32, #tpu.memory_space<vmem>>, %arg7: memref<1x1x32xf32, #tpu.memory_space<vmem>>, %arg8: memref<1x1x32xf32, #tpu.memory_space<vmem>>, %arg9: memref<1x1x32xf32, #tpu.memory_space<vmem>>, %arg10: memref<1x1x128x32xf32, #tpu.memory_space<vmem>>, %arg11: memref<1x1x128x32xf32, #tpu.memory_space<vmem>>, %arg12: memref<1x1x128x32xf32, #tpu.memory_space<vmem>>) attributes {dimension_semantics = [#tpu.dimension_semantics<parallel>, #tpu.dimension_semantics<parallel>, #tpu.dimension_semantics<parallel>], iteration_bounds = array<i64: 2, 2, 4>, scalar_prefetch = 0 : i64, scratch_operands = 0 : i64, tpu.core_type = #tpu.core_type<tc>, window_params = [{transform_indices = @transform_0, window_bounds = array<i64: 1, 128, 128>}, {transform_indices = @transform_1, window_bounds = array<i64: 1, 128, 32>}, {transform_indices = @transform_2, window_bounds = array<i64: 1, 128, 32>}, {transform_indices = @transform_3, window_bounds = array<i64: 1, 128, 32>}, {transform_indices = @transform_4, window_bounds = array<i64: 1, 1, 32>}, {transform_indices = @transform_5, window_bounds = array<i64: 1, 1, 32>}, {transform_indices = @transform_6, window_bounds = array<i64: 1, 1, 32>}, {transform_indices = @transform_7, window_bounds = array<i64: 1, 1, 128, 32>}, {transform_indices = @transform_8, window_bounds = array<i64: 1, 1, 128, 32>}, {transform_indices = @transform_9, window_bounds = array<i64: 1, 1, 128, 32>}]} {
    %c0 = arith.constant 0 : index
    %c0_0 = arith.constant 0 : index
    %c0_1 = arith.constant 0 : index
    %0 = vector.load %arg3[%c0, %c0_0, %c0_1] : memref<1x128x128xf32, #tpu.memory_space<vmem>>, vector<1x128x128xf32>
    %1 = vector.shape_cast %0 : vector<1x128x128xf32> to vector<128x128xf32>
    %c0_2 = arith.constant 0 : index
    %c0_3 = arith.constant 0 : index
    %c0_4 = arith.constant 0 : index
    %2 = vector.load %arg4[%c0_2, %c0_3, %c0_4] : memref<1x128x32xf32, #tpu.memory_space<vmem>>, vector<1x128x32xf32>
    %3 = vector.shape_cast %2 : vector<1x128x32xf32> to vector<128x32xf32>
    %cst = arith.constant dense<0.000000e+00> : vector<128x32xf32>
    %4 = tpu.matmul %1, %3, %cst {dimension_numbers = #tpu.dot_dimension_numbers<[1], [0], [0], [1], [0, 0, 1, 1], [], []>} : vector<128x128xf32>, vector<128x32xf32>, vector<128x32xf32> -> vector<128x32xf32>
    %c0_5 = arith.constant 0 : index
    %c0_6 = arith.constant 0 : index
    %c0_7 = arith.constant 0 : index
    %5 = vector.load %arg7[%c0_5, %c0_6, %c0_7] : memref<1x1x32xf32, #tpu.memory_space<vmem>>, vector<1x1x32xf32>
    %6 = vector.shape_cast %5 : vector<1x1x32xf32> to vector<1x32xf32>
    %7 = vector.broadcast %6 : vector<1x32xf32> to vector<128x32xf32>
    %8 = arith.addf %4, %7 : vector<128x32xf32>
    %c0_8 = arith.constant 0 : index
    %c0_9 = arith.constant 0 : index
    %c0_10 = arith.constant 0 : index
    %c0_11 = arith.constant 0 : index
    %9 = vector.load %arg10[%c0_8, %c0_9, %c0_10, %c0_11] : memref<1x1x128x32xf32, #tpu.memory_space<vmem>>, vector<1x1x128x32xf32>
    %10 = vector.shape_cast %9 : vector<1x1x128x32xf32> to vector<128x32xf32>
    %11 = vector.shape_cast %8 : vector<128x32xf32> to vector<1x1x128x32xf32>
    tpu.vector_store %arg10[%c0_8, %c0_9, %c0_10, %c0_11], %11 {strides = array<i32>} : memref<1x1x128x32xf32, #tpu.memory_space<vmem>>, vector<1x1x128x32xf32>,
    %c0_12 = arith.constant 0 : index
    %c0_13 = arith.constant 0 : index
    %c0_14 = arith.constant 0 : index
    %12 = vector.load %arg5[%c0_12, %c0_13, %c0_14] : memref<1x128x32xf32, #tpu.memory_space<vmem>>, vector<1x128x32xf32>
    %13 = vector.shape_cast %12 : vector<1x128x32xf32> to vector<128x32xf32>
    %cst_15 = arith.constant dense<0.000000e+00> : vector<128x32xf32>
    %14 = tpu.matmul %1, %13, %cst_15 {dimension_numbers = #tpu.dot_dimension_numbers<[1], [0], [0], [1], [0, 0, 1, 1], [], []>} : vector<128x128xf32>, vector<128x32xf32>, vector<128x32xf32> -> vector<128x32xf32>
    %c0_16 = arith.constant 0 : index
    %c0_17 = arith.constant 0 : index
    %c0_18 = arith.constant 0 : index
    %15 = vector.load %arg8[%c0_16, %c0_17, %c0_18] : memref<1x1x32xf32, #tpu.memory_space<vmem>>, vector<1x1x32xf32>
    %16 = vector.shape_cast %15 : vector<1x1x32xf32> to vector<1x32xf32>
    %17 = vector.broadcast %16 : vector<1x32xf32> to vector<128x32xf32>
    %18 = arith.addf %14, %17 : vector<128x32xf32>
    %c0_19 = arith.constant 0 : index
    %c0_20 = arith.constant 0 : index
    %c0_21 = arith.constant 0 : index
    %c0_22 = arith.constant 0 : index
    %19 = vector.load %arg11[%c0_19, %c0_20, %c0_21, %c0_22] : memref<1x1x128x32xf32, #tpu.memory_space<vmem>>, vector<1x1x128x32xf32>
    %20 = vector.shape_cast %19 : vector<1x1x128x32xf32> to vector<128x32xf32>
    %21 = vector.shape_cast %18 : vector<128x32xf32> to vector<1x1x128x32xf32>
    tpu.vector_store %arg11[%c0_19, %c0_20, %c0_21, %c0_22], %21 {strides = array<i32>} : memref<1x1x128x32xf32, #tpu.memory_space<vmem>>, vector<1x1x128x32xf32>,
    %c0_23 = arith.constant 0 : index
    %c0_24 = arith.constant 0 : index
    %c0_25 = arith.constant 0 : index
    %22 = vector.load %arg6[%c0_23, %c0_24, %c0_25] : memref<1x128x32xf32, #tpu.memory_space<vmem>>, vector<1x128x32xf32>
    %23 = vector.shape_cast %22 : vector<1x128x32xf32> to vector<128x32xf32>
    %cst_26 = arith.constant dense<0.000000e+00> : vector<128x32xf32>
    %24 = tpu.matmul %1, %23, %cst_26 {dimension_numbers = #tpu.dot_dimension_numbers<[1], [0], [0], [1], [0, 0, 1, 1], [], []>} : vector<128x128xf32>, vector<128x32xf32>, vector<128x32xf32> -> vector<128x32xf32>
    %c0_27 = arith.constant 0 : index
    %c0_28 = arith.constant 0 : index
    %c0_29 = arith.constant 0 : index
    %25 = vector.load %arg9[%c0_27, %c0_28, %c0_29] : memref<1x1x32xf32, #tpu.memory_space<vmem>>, vector<1x1x32xf32>
    %26 = vector.shape_cast %25 : vector<1x1x32xf32> to vector<1x32xf32>
    %27 = vector.broadcast %26 : vector<1x32xf32> to vector<128x32xf32>
    %28 = arith.addf %24, %27 : vector<128x32xf32>
    %c0_30 = arith.constant 0 : index
    %c0_31 = arith.constant 0 : index
    %c0_32 = arith.constant 0 : index
    %c0_33 = arith.constant 0 : index
    %29 = vector.load %arg12[%c0_30, %c0_31, %c0_32, %c0_33] : memref<1x1x128x32xf32, #tpu.memory_space<vmem>>, vector<1x1x128x32xf32>
    %30 = vector.shape_cast %29 : vector<1x1x128x32xf32> to vector<128x32xf32>
    %31 = vector.shape_cast %28 : vector<128x32xf32> to vector<1x1x128x32xf32>
    tpu.vector_store %arg12[%c0_30, %c0_31, %c0_32, %c0_33], %31 {strides = array<i32>} : memref<1x1x128x32xf32, #tpu.memory_space<vmem>>, vector<1x1x128x32xf32>,
    return
  }
  func.func @transform_0(%arg0: i32, %arg1: i32, %arg2: i32) -> (i32, i32, i32) {
    %c0_i32 = arith.constant 0 : i32
    %c0_i32_0 = arith.constant 0 : i32
    return %arg0, %arg1, %c0_i32 : i32, i32, i32
  }
  func.func @transform_1(%arg0: i32, %arg1: i32, %arg2: i32) -> (i32, i32, i32) {
    %c0_i32 = arith.constant 0 : i32
    %c0_i32_0 = arith.constant 0 : i32
    %c0_i32_1 = arith.constant 0 : i32
    return %arg2, %c0_i32, %c0_i32_0 : i32, i32, i32
  }
  func.func @transform_2(%arg0: i32, %arg1: i32, %arg2: i32) -> (i32, i32, i32) {
    %c0_i32 = arith.constant 0 : i32
    %c0_i32_0 = arith.constant 0 : i32
    %c0_i32_1 = arith.constant 0 : i32
    return %arg2, %c0_i32, %c0_i32_0 : i32, i32, i32
  }
  func.func @transform_3(%arg0: i32, %arg1: i32, %arg2: i32) -> (i32, i32, i32) {
    %c0_i32 = arith.constant 0 : i32
    %c0_i32_0 = arith.constant 0 : i32
    %c0_i32_1 = arith.constant 0 : i32
    return %arg2, %c0_i32, %c0_i32_0 : i32, i32, i32
  }
  func.func @transform_4(%arg0: i32, %arg1: i32, %arg2: i32) -> (i32, i32, i32) {
    %c0_i32 = arith.constant 0 : i32
    %c0_i32_0 = arith.constant 0 : i32
    %c0_i32_1 = arith.constant 0 : i32
    return %arg2, %c0_i32, %c0_i32_0 : i32, i32, i32
  }
  func.func @transform_5(%arg0: i32, %arg1: i32, %arg2: i32) -> (i32, i32, i32) {
    %c0_i32 = arith.constant 0 : i32
    %c0_i32_0 = arith.constant 0 : i32
    %c0_i32_1 = arith.constant 0 : i32
    return %arg2, %c0_i32, %c0_i32_0 : i32, i32, i32
  }
  func.func @transform_6(%arg0: i32, %arg1: i32, %arg2: i32) -> (i32, i32, i32) {
    %c0_i32 = arith.constant 0 : i32
    %c0_i32_0 = arith.constant 0 : i32
    %c0_i32_1 = arith.constant 0 : i32
    return %arg2, %c0_i32, %c0_i32_0 : i32, i32, i32
  }
  func.func @transform_7(%arg0: i32, %arg1: i32, %arg2: i32) -> (i32, i32, i32, i32) {
    %c0_i32 = arith.constant 0 : i32
    %c0_i32_0 = arith.constant 0 : i32
    return %arg0, %arg2, %arg1, %c0_i32 : i32, i32, i32, i32
  }
  func.func @transform_8(%arg0: i32, %arg1: i32, %arg2: i32) -> (i32, i32, i32, i32) {
    %c0_i32 = arith.constant 0 : i32
    %c0_i32_0 = arith.constant 0 : i32
    return %arg0, %arg2, %arg1, %c0_i32 : i32, i32, i32, i32
  }
  func.func @transform_9(%arg0: i32, %arg1: i32, %arg2: i32) -> (i32, i32, i32, i32) {
    %c0_i32 = arith.constant 0 : i32
    %c0_i32_0 = arith.constant 0 : i32
    return %arg0, %arg2, %arg1, %c0_i32 : i32, i32, i32, i32
  }
}

module attributes {stable_mosaic.version = 11 : i64} {
  func.func @kernel(%arg0: i32, %arg1: i32, %arg2: i32, %arg3: i32, %arg4: memref<1x1x128x32xf32, #tpu.memory_space<vmem>>, %arg5: memref<1x1x128x32xf32, #tpu.memory_space<vmem>>, %arg6: memref<1x1x128x32xf32, #tpu.memory_space<vmem>>, %arg7: memref<1x32x128xf32, #tpu.memory_space<vmem>>, %arg8: memref<1x128xf32, #tpu.memory_space<vmem>>, %arg9: memref<1x128x128xf32, #tpu.memory_space<vmem>>, %arg10: memref<128x1xf32, #tpu.memory_space<vmem>>, %arg11: memref<128x1xf32, #tpu.memory_space<vmem>>, %arg12: memref<128x32xf32, #tpu.memory_space<vmem>>, %arg13: memref<128x128xf32, #tpu.memory_space<vmem>>) attributes {dimension_semantics = [#tpu.dimension_semantics<parallel>, #tpu.dimension_semantics<parallel>, #tpu.dimension_semantics<arbitrary>, #tpu.dimension_semantics<arbitrary>], iteration_bounds = array<i64: 2, 2, 4, 2>, scalar_prefetch = 0 : i64, scratch_operands = 4 : i64, tpu.core_type = #tpu.core_type<tc>, window_params = [{transform_indices = @transform_0, window_bounds = array<i64: 1, 1, 128, 32>}, {transform_indices = @transform_1, window_bounds = array<i64: 1, 1, 128, 32>}, {transform_indices = @transform_2, window_bounds = array<i64: 1, 1, 128, 32>}, {transform_indices = @transform_3, window_bounds = array<i64: 1, 32, 128>}, {pipeline_mode = #tpu.pipeline_mode<synchronous>, transform_indices = @transform_4, window_bounds = array<i64: 1, 128>}, {transform_indices = @transform_5, window_bounds = array<i64: 1, 128, 128>}]} {
    %c0_i32 = arith.constant 0 : i32
    %0 = arith.cmpi eq, %arg3, %c0_i32 : i32
    %1 = arith.extui %0 : i1 to i32
    %c0_i32_0 = arith.constant 0 : i32
    %2 = arith.cmpi ne, %1, %c0_i32_0 : i32
    scf.if %2 {
      %cst = arith.constant 0xFF800000 : f32
      %22 = vector.broadcast %cst : f32 to vector<128x1xf32>
      %c0 = arith.constant 0 : index
      %c0_9 = arith.constant 0 : index
      %23 = vector.load %arg10[%c0, %c0_9] : memref<128x1xf32, #tpu.memory_space<vmem>>, vector<128x1xf32>
      tpu.vector_store %arg10[%c0, %c0_9], %22 {strides = array<i32>} : memref<128x1xf32, #tpu.memory_space<vmem>>, vector<128x1xf32>,
      %cst_10 = arith.constant 0.000000e+00 : f32
      %24 = vector.broadcast %cst_10 : f32 to vector<128x1xf32>
      %c0_11 = arith.constant 0 : index
      %c0_12 = arith.constant 0 : index
      %25 = vector.load %arg11[%c0_11, %c0_12] : memref<128x1xf32, #tpu.memory_space<vmem>>, vector<128x1xf32>
      tpu.vector_store %arg11[%c0_11, %c0_12], %24 {strides = array<i32>} : memref<128x1xf32, #tpu.memory_space<vmem>>, vector<128x1xf32>,
      %cst_13 = arith.constant 0.000000e+00 : f32
      %26 = vector.broadcast %cst_13 : f32 to vector<128x32xf32>
      %c0_14 = arith.constant 0 : index
      %c0_15 = arith.constant 0 : index
      %27 = vector.load %arg12[%c0_14, %c0_15] : memref<128x32xf32, #tpu.memory_space<vmem>>, vector<128x32xf32>
      tpu.vector_store %arg12[%c0_14, %c0_15], %26 {strides = array<i32>} : memref<128x32xf32, #tpu.memory_space<vmem>>, vector<128x32xf32>,
    } else {
    }
    %c0_i32_1 = arith.constant 0 : i32
    %3 = arith.cmpi eq, %arg2, %c0_i32_1 : i32
    %c0_i32_2 = arith.constant 0 : i32
    %4 = arith.cmpi eq, %arg3, %c0_i32_2 : i32
    %5 = arith.andi %3, %4 : i1
    %6 = arith.extui %5 : i1 to i32
    %c0_i32_3 = arith.constant 0 : i32
    %7 = arith.cmpi ne, %6, %c0_i32_3 : i32
    scf.if %7 {
      %cst = arith.constant 0.000000e+00 : f32
      %22 = vector.broadcast %cst : f32 to vector<128x128xf32>
      %c0 = arith.constant 0 : index
      %c0_9 = arith.constant 0 : index
      %23 = vector.load %arg13[%c0, %c0_9] : memref<128x128xf32, #tpu.memory_space<vmem>>, vector<128x128xf32>
      tpu.vector_store %arg13[%c0, %c0_9], %22 {strides = array<i32>} : memref<128x128xf32, #tpu.memory_space<vmem>>, vector<128x128xf32>,
    } else {
    }
    %c128_i32 = arith.constant 128 : i32
    %8 = arith.muli %arg1, %c128_i32 : i32
    %c128_i32_4 = arith.constant 128 : i32
    %9 = arith.muli %arg3, %c128_i32_4 : i32
    %c127_i32 = arith.constant 127 : i32
    %10 = arith.addi %8, %c127_i32 : i32
    %11 = arith.cmpi sle, %9, %10 : i32
    %12 = arith.extui %11 : i1 to i32
    %c0_i32_5 = arith.constant 0 : i32
    %13 = arith.cmpi ne, %12, %c0_i32_5 : i32
    scf.if %13 {
      %c0 = arith.constant 0 : index
      %c0_9 = arith.constant 0 : index
      %c0_10 = arith.constant 0 : index
      %c0_11 = arith.constant 0 : index
      %22 = vector.load %arg4[%c0, %c0_9, %c0_10, %c0_11] : memref<1x1x128x32xf32, #tpu.memory_space<vmem>>, vector<1x1x128x32xf32>
      %23 = vector.shape_cast %22 : vector<1x1x128x32xf32> to vector<128x32xf32>
      %c0_12 = arith.constant 0 : index
      %c0_13 = arith.constant 0 : index
      %c0_14 = arith.constant 0 : index
      %c0_15 = arith.constant 0 : index
      %24 = vector.load %arg5[%c0_12, %c0_13, %c0_14, %c0_15] : memref<1x1x128x32xf32, #tpu.memory_space<vmem>>, vector<1x1x128x32xf32>
      %25 = vector.shape_cast %24 : vector<1x1x128x32xf32> to vector<128x32xf32>
      %cst = arith.constant dense<0.000000e+00> : vector<128x128xf32>
      %26 = tpu.matmul %23, %25, %cst {dimension_numbers = #tpu.dot_dimension_numbers<[1], [1], [0], [0], [0, 0, 1, 0], [], []>} : vector<128x32xf32>, vector<128x32xf32>, vector<128x128xf32> -> vector<128x128xf32>
      %cst_16 = arith.constant 0.176776692 : f32
      %27 = vector.broadcast %cst_16 : f32 to vector<128x128xf32>
      %28 = arith.mulf %26, %27 : vector<128x128xf32>
      %29 = tpu.iota {dimensions = array<i32: 0>} : vector<128x128xi32>
      %30 = vector.broadcast %8 : i32 to vector<128x128xi32>
      %31 = arith.addi %30, %29 : vector<128x128xi32>
      %32 = tpu.iota {dimensions = array<i32: 1>} : vector<128x128xi32>
      %33 = vector.broadcast %9 : i32 to vector<128x128xi32>
      %34 = arith.addi %33, %32 : vector<128x128xi32>
      %35 = arith.cmpi sge, %31, %34 : vector<128x128xi32>
      %cst_17 = arith.constant -1.000000e+04 : f32
      %36 = vector.broadcast %cst_17 : f32 to vector<128x128xf32>
      %37 = arith.select %35, %28, %36 : vector<128x128xi1>, vector<128x128xf32>
      %c0_18 = arith.constant 0 : index
      %c0_19 = arith.constant 0 : index
      %38 = vector.load %arg10[%c0_18, %c0_19] : memref<128x1xf32, #tpu.memory_space<vmem>>, vector<128x1xf32>
      %cst_20 = arith.constant dense<0xFF800000> : vector<128xf32>
      %39 = vector.multi_reduction <maximumf>, %37, %cst_20 [1] : vector<128x128xf32> to vector<128xf32>
      %40 = vector.shape_cast %39 : vector<128xf32> to vector<128x1xf32>
      %41 = arith.maximumf %38, %40 : vector<128x1xf32>
      %42 = arith.subf %38, %41 : vector<128x1xf32>
      %43 = math.exp %42 : vector<128x1xf32>
      %44 = vector.broadcast %41 : vector<128x1xf32> to vector<128x128xf32>
      %45 = arith.subf %37, %44 : vector<128x128xf32>
      %46 = math.exp %45 : vector<128x128xf32>
      %c0_21 = arith.constant 0 : index
      %c0_22 = arith.constant 0 : index
      %47 = vector.load %arg11[%c0_21, %c0_22] : memref<128x1xf32, #tpu.memory_space<vmem>>, vector<128x1xf32>
      %48 = arith.mulf %43, %47 : vector<128x1xf32>
      %cst_23 = arith.constant dense<0.000000e+00> : vector<128xf32>
      %49 = vector.multi_reduction <add>, %46, %cst_23 [1] : vector<128x128xf32> to vector<128xf32>
      %50 = vector.shape_cast %49 : vector<128xf32> to vector<128x1xf32>
      %51 = arith.addf %48, %50 : vector<128x1xf32>
      %c0_24 = arith.constant 0 : index
      %c0_25 = arith.constant 0 : index
      %52 = vector.load %arg11[%c0_24, %c0_25] : memref<128x1xf32, #tpu.memory_space<vmem>>, vector<128x1xf32>
      tpu.vector_store %arg11[%c0_24, %c0_25], %51 {strides = array<i32>} : memref<128x1xf32, #tpu.memory_space<vmem>>, vector<128x1xf32>,
      %c0_26 = arith.constant 0 : index
      %c0_27 = arith.constant 0 : index
      %53 = vector.load %arg12[%c0_26, %c0_27] : memref<128x32xf32, #tpu.memory_space<vmem>>, vector<128x32xf32>
      %54 = vector.broadcast %43 : vector<128x1xf32> to vector<128x32xf32>
      %55 = arith.mulf %54, %53 : vector<128x32xf32>
      %c0_28 = arith.constant 0 : index
      %c0_29 = arith.constant 0 : index
      %c0_30 = arith.constant 0 : index
      %c0_31 = arith.constant 0 : index
      %56 = vector.load %arg6[%c0_28, %c0_29, %c0_30, %c0_31] : memref<1x1x128x32xf32, #tpu.memory_space<vmem>>, vector<1x1x128x32xf32>
      %57 = vector.shape_cast %56 : vector<1x1x128x32xf32> to vector<128x32xf32>
      %cst_32 = arith.constant dense<0.000000e+00> : vector<128x32xf32>
      %58 = tpu.matmul %46, %57, %cst_32 {dimension_numbers = #tpu.dot_dimension_numbers<[1], [0], [0], [1], [0, 0, 1, 1], [], []>} : vector<128x128xf32>, vector<128x32xf32>, vector<128x32xf32> -> vector<128x32xf32>
      %59 = arith.addf %55, %58 : vector<128x32xf32>
      %c0_33 = arith.constant 0 : index
      %c0_34 = arith.constant 0 : index
      %60 = vector.load %arg12[%c0_33, %c0_34] : memref<128x32xf32, #tpu.memory_space<vmem>>, vector<128x32xf32>
      tpu.vector_store %arg12[%c0_33, %c0_34], %59 {strides = array<i32>} : memref<128x32xf32, #tpu.memory_space<vmem>>, vector<128x32xf32>,
      %c0_35 = arith.constant 0 : index
      %c0_36 = arith.constant 0 : index
      %61 = vector.load %arg10[%c0_35, %c0_36] : memref<128x1xf32, #tpu.memory_space<vmem>>, vector<128x1xf32>
      tpu.vector_store %arg10[%c0_35, %c0_36], %41 {strides = array<i32>} : memref<128x1xf32, #tpu.memory_space<vmem>>, vector<128x1xf32>,
    } else {
    }
    %c1_i32 = arith.constant 1 : i32
    %14 = arith.cmpi eq, %arg3, %c1_i32 : i32
    %15 = arith.extui %14 : i1 to i32
    %c0_i32_6 = arith.constant 0 : i32
    %16 = arith.cmpi ne, %15, %c0_i32_6 : i32
    scf.if %16 {
      %c0 = arith.constant 0 : index
      %c0_9 = arith.constant 0 : index
      %22 = vector.load %arg12[%c0, %c0_9] : memref<128x32xf32, #tpu.memory_space<vmem>>, vector<128x32xf32>
      %c0_10 = arith.constant 0 : index
      %c0_11 = arith.constant 0 : index
      %23 = vector.load %arg11[%c0_10, %c0_11] : memref<128x1xf32, #tpu.memory_space<vmem>>, vector<128x1xf32>
      %24 = tpu.reciprocal %23 {approx = true} : vector<128x1xf32> -> vector<128x1xf32>
      %25 = vector.broadcast %24 : vector<128x1xf32> to vector<128x32xf32>
      %26 = arith.mulf %22, %25 : vector<128x32xf32>
      %c0_12 = arith.constant 0 : index
      %c0_13 = arith.constant 0 : index
      %27 = vector.load %arg13[%c0_12, %c0_13] : memref<128x128xf32, #tpu.memory_space<vmem>>, vector<128x128xf32>
      %c0_14 = arith.constant 0 : index
      %c0_15 = arith.constant 0 : index
      %c0_16 = arith.constant 0 : index
      %28 = vector.load %arg7[%c0_14, %c0_15, %c0_16] : memref<1x32x128xf32, #tpu.memory_space<vmem>>, vector<1x32x128xf32>
      %29 = vector.shape_cast %28 : vector<1x32x128xf32> to vector<32x128xf32>
      %cst = arith.constant dense<0.000000e+00> : vector<128x128xf32>
      %30 = tpu.matmul %26, %29, %cst {dimension_numbers = #tpu.dot_dimension_numbers<[1], [0], [0], [1], [0, 0, 1, 1], [], []>} : vector<128x32xf32>, vector<32x128xf32>, vector<128x128xf32> -> vector<128x128xf32>
      %31 = arith.addf %27, %30 : vector<128x128xf32>
      %c0_17 = arith.constant 0 : index
      %c0_18 = arith.constant 0 : index
      %32 = vector.load %arg13[%c0_17, %c0_18] : memref<128x128xf32, #tpu.memory_space<vmem>>, vector<128x128xf32>
      tpu.vector_store %arg13[%c0_17, %c0_18], %31 {strides = array<i32>} : memref<128x128xf32, #tpu.memory_space<vmem>>, vector<128x128xf32>,
    } else {
    }
    %c3_i32 = arith.constant 3 : i32
    %17 = arith.cmpi eq, %arg2, %c3_i32 : i32
    %c1_i32_7 = arith.constant 1 : i32
    %18 = arith.cmpi eq, %arg3, %c1_i32_7 : i32
    %19 = arith.andi %17, %18 : i1
    %20 = arith.extui %19 : i1 to i32
    %c0_i32_8 = arith.constant 0 : i32
    %21 = arith.cmpi ne, %20, %c0_i32_8 : i32
    scf.if %21 {
      %c0 = arith.constant 0 : index
      %c0_9 = arith.constant 0 : index
      %22 = vector.load %arg13[%c0, %c0_9] : memref<128x128xf32, #tpu.memory_space<vmem>>, vector<128x128xf32>
      %c0_10 = arith.constant 0 : index
      %c0_11 = arith.constant 0 : index
      %23 = vector.load %arg8[%c0_10, %c0_11] : memref<1x128xf32, #tpu.memory_space<vmem>>, vector<1x128xf32>
      %24 = vector.broadcast %23 : vector<1x128xf32> to vector<128x128xf32>
      %25 = arith.addf %22, %24 : vector<128x128xf32>
      %c0_12 = arith.constant 0 : index
      %c0_13 = arith.constant 0 : index
      %c0_14 = arith.constant 0 : index
      %26 = vector.load %arg9[%c0_12, %c0_13, %c0_14] : memref<1x128x128xf32, #tpu.memory_space<vmem>>, vector<1x128x128xf32>
      %27 = vector.shape_cast %26 : vector<1x128x128xf32> to vector<128x128xf32>
      %28 = vector.shape_cast %25 : vector<128x128xf32> to vector<1x128x128xf32>
      tpu.vector_store %arg9[%c0_12, %c0_13, %c0_14], %28 {strides = array<i32>} : memref<1x128x128xf32, #tpu.memory_space<vmem>>, vector<1x128x128xf32>,
    } else {
    }
    return
  }
  func.func @transform_0(%arg0: i32, %arg1: i32, %arg2: i32, %arg3: i32) -> (i32, i32, i32, i32) {
    %c0_i32 = arith.constant 0 : i32
    %c0_i32_0 = arith.constant 0 : i32
    return %arg0, %arg2, %arg1, %c0_i32 : i32, i32, i32, i32
  }
  func.func @transform_1(%arg0: i32, %arg1: i32, %arg2: i32, %arg3: i32) -> (i32, i32, i32, i32) {
    %c0_i32 = arith.constant 0 : i32
    %c0_i32_0 = arith.constant 0 : i32
    return %arg0, %arg2, %arg3, %c0_i32 : i32, i32, i32, i32
  }
  func.func @transform_2(%arg0: i32, %arg1: i32, %arg2: i32, %arg3: i32) -> (i32, i32, i32, i32) {
    %c0_i32 = arith.constant 0 : i32
    %c0_i32_0 = arith.constant 0 : i32
    return %arg0, %arg2, %arg3, %c0_i32 : i32, i32, i32, i32
  }
  func.func @transform_3(%arg0: i32, %arg1: i32, %arg2: i32, %arg3: i32) -> (i32, i32, i32) {
    %c0_i32 = arith.constant 0 : i32
    %c0_i32_0 = arith.constant 0 : i32
    %c0_i32_1 = arith.constant 0 : i32
    return %arg2, %c0_i32, %c0_i32_0 : i32, i32, i32
  }
  func.func @transform_4(%arg0: i32, %arg1: i32, %arg2: i32, %arg3: i32) -> (i32, i32) {
    %c0_i32 = arith.constant 0 : i32
    %c0_i32_0 = arith.constant 0 : i32
    %c0_i32_1 = arith.constant 0 : i32
    return %c0_i32, %c0_i32_0 : i32, i32
  }
  func.func @transform_5(%arg0: i32, %arg1: i32, %arg2: i32, %arg3: i32) -> (i32, i32, i32) {
    %c0_i32 = arith.constant 0 : i32
    %c0_i32_0 = arith.constant 0 : i32
    return %arg0, %arg1, %c0_i32 : i32, i32, i32
  }
}

</mosaic_0001>

<llo_original>
// kernel: gpt_self_attention.2
$region0: #{gpt_self_attention.2}
  #allocation0 [shape = 'u32[]', space=smem, size = 0x4, offset = 0x4, fixed_abs, tag = 'smem constant byte address 0x4 - core index']
  #allocation1 [shape = 'u32[144,128]{1,0:T(1,128)}', space=vmem, size = 0x12000, scoped, tag = 'internal scratch']
  %s0 = inlined_call_operand.vmem [shape: f32[2,256,128], index: 0, kind: input, shape index: {}]
  %s1 = inlined_call_operand.vmem [shape: f32[4,128,32], index: 1, kind: input, shape index: {}]
  %s2 = inlined_call_operand.vmem [shape: f32[4,128,32], index: 2, kind: input, shape index: {}]
  %s3 = inlined_call_operand.vmem [shape: f32[4,128,32], index: 3, kind: input, shape index: {}]
  %s4 = inlined_call_operand.vmem [shape: f32[4,1,32], index: 4, kind: input, shape index: {}]
  %s5 = inlined_call_operand.vmem [shape: f32[4,1,32], index: 5, kind: input, shape index: {}]
  %s6 = inlined_call_operand.vmem [shape: f32[4,1,32], index: 6, kind: input, shape index: {}]
  %s7 = inlined_call_operand.vmem [shape: f32[2,4,256,32], index: 7, kind: output, shape index: {0}]
  %s8 = inlined_call_operand.vmem [shape: f32[2,4,256,32], index: 8, kind: output, shape index: {1}]
  %s9 = inlined_call_operand.vmem [shape: f32[2,4,256,32], index: 9, kind: output, shape index: {2}]
  %10 = xla_tuple %s7, %s8, %s9
  %s11 = sld [smem:[#allocation0]]
  $region77: #{gpt_self_attention.2} parent=0
    _
  %s13 = ssub.s32 1, %s11
  %s14 = scalar_select 0, %s13, %s11
  loop: start=0, step=1, limit=18
  $region2: #{gpt_self_attention.2} parent=0 // loop_pre_header
    _
  $region3: #{gpt_self_attention.2} parent=0 // loop_header
    %s16 = sphi 0, %s20
    %p17 = scmp.ge.s32.totalorder %s16, 18
    %s23 = sphi 0, %s42
    %s24 = sphi 0, %s38
    %s25 = sphi 0, %s34
    %s26 = sphi 0, %s23
    %s27 = sphi 0, %s24
    %s28 = sphi 0, %s25
    %s29 = sphi 0, %s26
    %s30 = sphi 0, %s27
    %s31 = sphi 0, %s28
    %s47 = sphi 0, %s49
    %s50 = sphi 0, %s47
    %s51 = sphi 0, %s50
    %s67 = sphi 0, %s51
    %s73 = sphi 0, %s75
    %s76 = sphi 0, %s73
    %s77 = sphi 0, %s76
    %s93 = sphi 0, %s77
    %s99 = sphi 0, %s101
    %s102 = sphi 0, %s99
    %s103 = sphi 0, %s102
    %s119 = sphi 0, %s103
    %s125 = sphi 0, %s127
    %s128 = sphi 0, %s125
    %s129 = sphi 0, %s128
    %s145 = sphi 0, %s129
    %s151 = sphi 0, %s153
    %s154 = sphi 0, %s151
    %s155 = sphi 0, %s154
    %s171 = sphi 0, %s155
    %s177 = sphi 0, %s179
    %s180 = sphi 0, %s177
    %s181 = sphi 0, %s180
    %s197 = sphi 0, %s181
    %s203 = sphi 0, %s205
    %s206 = sphi 0, %s203
    %s207 = sphi 0, %s206
    %s223 = sphi 0, %s207
    %s233 = sphi 0, %s235
    %s236 = sphi 0, %s233
    %s237 = sphi 0, %s236
    %s253 = sphi 0, %s237
    %s263 = sphi 0, %s265
    %s266 = sphi 0, %s263
    %s267 = sphi 0, %s266
    %s283 = sphi 0, %s267
    %s293 = sphi 0, %s295
    %s296 = sphi 0, %s293
    %s297 = sphi 0, %s296
    %s313 = sphi 0, %s297
  $region4: #{gpt_self_attention.2} parent=0 // loop_header_branch
    %19 = sbr.rel (%p17) target = $region8
  $region5: #{gpt_self_attention.2} parent=0 // loop_body
    %s21 = ssub.s32 %s16, 1
    %s22 = ssub.s32 %s16, 2
    %s32 = sadd.s32 1, %s25
    %p33 = scmp.ge.s32.totalorder %s32, 4
    %s34 = scalar_select %p33, 0, %s32
    %s35 = sadd.s32 1, %s24
    %s36 = scalar_select %p33, %s35, %s24
    %p37 = scmp.ge.s32.totalorder %s36, 2
    %s38 = scalar_select %p37, 0, %s36
    %s39 = sadd.s32 1, %s23
    %s40 = scalar_select %p37, %s39, %s23
    %p41 = scmp.ge.s32.totalorder %s40, 2
    %s42 = scalar_select %p41, 0, %s40
    %s43 = ssub.s32 %s23, %s42
    %s44 = ssub.s32 %s24, %s38
    %s45 = sor.u32 %s43, %s44
    %p46 = scmp.eq.s32.totalorder %s45, 0
    %s48 = sadd.s32 %s47, 1
    %s49 = scalar_select %p46, %s47, %s48
    %p52 = pneg %p46
    %p53 = scmp.eq.s32.totalorder %s16, 15
    %p54 = por %p52, %p53
    %p55 = scmp.ne.s32.totalorder %s47, %s50
    %p56 = scmp.eq.s32.totalorder %s16, 0
    %p57 = por %p55, %p56
    %p58 = scmp.ne.s32.totalorder %s47, %s50
    %p59 = scmp.eq.s32.totalorder %s21, 15
    %p60 = por %p58, %p59
    %p61 = scmp.ne.s32.totalorder %s50, %s51
    %p62 = scmp.eq.s32.totalorder %s21, 0
    %p63 = por %p61, %p62
    %p64 = scmp.ne.s32.totalorder %s50, %s51
    %p65 = scmp.eq.s32.totalorder %s22, 15
    %p66 = por %p64, %p65
    %p68 = scmp.ne.s32.totalorder %s51, %s67
    %p69 = scmp.eq.s32.totalorder %s22, 0
    %p70 = por %p68, %p69
    %s71 = ssub.s32 %s25, %s34
    %p72 = scmp.eq.s32.totalorder %s71, 0
    %s74 = sadd.s32 %s73, 1
    %s75 = scalar_select %p72, %s73, %s74
    %p78 = pneg %p72
    %p79 = scmp.eq.s32.totalorder %s16, 15
    %p80 = por %p78, %p79
    %p81 = scmp.ne.s32.totalorder %s73, %s76
    %p82 = scmp.eq.s32.totalorder %s16, 0
    %p83 = por %p81, %p82
    %p84 = scmp.ne.s32.totalorder %s73, %s76
    %p85 = scmp.eq.s32.totalorder %s21, 15
    %p86 = por %p84, %p85
    %p87 = scmp.ne.s32.totalorder %s76, %s77
    %p88 = scmp.eq.s32.totalorder %s21, 0
    %p89 = por %p87, %p88
    %p90 = scmp.ne.s32.totalorder %s76, %s77
    %p91 = scmp.eq.s32.totalorder %s22, 15
    %p92 = por %p90, %p91
    %p94 = scmp.ne.s32.totalorder %s77, %s93
    %p95 = scmp.eq.s32.totalorder %s22, 0
    %p96 = por %p94, %p95
    %s97 = ssub.s32 %s25, %s34
    %p98 = scmp.eq.s32.totalorder %s97, 0
    %s100 = sadd.s32 %s99, 1
    %s101 = scalar_select %p98, %s99, %s100
    %p104 = pneg %p98
    %p105 = scmp.eq.s32.totalorder %s16, 15
    %p106 = por %p104, %p105
    %p107 = scmp.ne.s32.totalorder %s99, %s102
    %p108 = scmp.eq.s32.totalorder %s16, 0
    %p109 = por %p107, %p108
    %p110 = scmp.ne.s32.totalorder %s99, %s102
    %p111 = scmp.eq.s32.totalorder %s21, 15
    %p112 = por %p110, %p111
    %p113 = scmp.ne.s32.totalorder %s102, %s103
    %p114 = scmp.eq.s32.totalorder %s21, 0
    %p115 = por %p113, %p114
    %p116 = scmp.ne.s32.totalorder %s102, %s103
    %p117 = scmp.eq.s32.totalorder %s22, 15
    %p118 = por %p116, %p117
    %p120 = scmp.ne.s32.totalorder %s103, %s119
    %p121 = scmp.eq.s32.totalorder %s22, 0
    %p122 = por %p120, %p121
    %s123 = ssub.s32 %s25, %s34
    %p124 = scmp.eq.s32.totalorder %s123, 0
    %s126 = sadd.s32 %s125, 1
    %s127 = scalar_select %p124, %s125, %s126
    %p130 = pneg %p124
    %p131 = scmp.eq.s32.totalorder %s16, 15
    %p132 = por %p130, %p131
    %p133 = scmp.ne.s32.totalorder %s125, %s128
    %p134 = scmp.eq.s32.totalorder %s16, 0
    %p135 = por %p133, %p134
    %p136 = scmp.ne.s32.totalorder %s125, %s128
    %p137 = scmp.eq.s32.totalorder %s21, 15
    %p138 = por %p136, %p137
    %p139 = scmp.ne.s32.totalorder %s128, %s129
    %p140 = scmp.eq.s32.totalorder %s21, 0
    %p141 = por %p139, %p140
    %p142 = scmp.ne.s32.totalorder %s128, %s129
    %p143 = scmp.eq.s32.totalorder %s22, 15
    %p144 = por %p142, %p143
    %p146 = scmp.ne.s32.totalorder %s129, %s145
    %p147 = scmp.eq.s32.totalorder %s22, 0
    %p148 = por %p146, %p147
    %s149 = ssub.s32 %s25, %s34
    %p150 = scmp.eq.s32.totalorder %s149, 0
    %s152 = sadd.s32 %s151, 1
    %s153 = scalar_select %p150, %s151, %s152
    %p156 = pneg %p150
    %p157 = scmp.eq.s32.totalorder %s16, 15
    %p158 = por %p156, %p157
    %p159 = scmp.ne.s32.totalorder %s151, %s154
    %p160 = scmp.eq.s32.totalorder %s16, 0
    %p161 = por %p159, %p160
    %p162 = scmp.ne.s32.totalorder %s151, %s154
    %p163 = scmp.eq.s32.totalorder %s21, 15
    %p164 = por %p162, %p163
    %p165 = scmp.ne.s32.totalorder %s154, %s155
    %p166 = scmp.eq.s32.totalorder %s21, 0
    %p167 = por %p165, %p166
    %p168 = scmp.ne.s32.totalorder %s154, %s155
    %p169 = scmp.eq.s32.totalorder %s22, 15
    %p170 = por %p168, %p169
    %p172 = scmp.ne.s32.totalorder %s155, %s171
    %p173 = scmp.eq.s32.totalorder %s22, 0
    %p174 = por %p172, %p173
    %s175 = ssub.s32 %s25, %s34
    %p176 = scmp.eq.s32.totalorder %s175, 0
    %s178 = sadd.s32 %s177, 1
    %s179 = scalar_select %p176, %s177, %s178
    %p182 = pneg %p176
    %p183 = scmp.eq.s32.totalorder %s16, 15
    %p184 = por %p182, %p183
    %p185 = scmp.ne.s32.totalorder %s177, %s180
    %p186 = scmp.eq.s32.totalorder %s16, 0
    %p187 = por %p185, %p186
    %p188 = scmp.ne.s32.totalorder %s177, %s180
    %p189 = scmp.eq.s32.totalorder %s21, 15
    %p190 = por %p188, %p189
    %p191 = scmp.ne.s32.totalorder %s180, %s181
    %p192 = scmp.eq.s32.totalorder %s21, 0
    %p193 = por %p191, %p192
    %p194 = scmp.ne.s32.totalorder %s180, %s181
    %p195 = scmp.eq.s32.totalorder %s22, 15
    %p196 = por %p194, %p195
    %p198 = scmp.ne.s32.totalorder %s181, %s197
    %p199 = scmp.eq.s32.totalorder %s22, 0
    %p200 = por %p198, %p199
    %s201 = ssub.s32 %s25, %s34
    %p202 = scmp.eq.s32.totalorder %s201, 0
    %s204 = sadd.s32 %s203, 1
    %s205 = scalar_select %p202, %s203, %s204
    %p208 = pneg %p202
    %p209 = scmp.eq.s32.totalorder %s16, 15
    %p210 = por %p208, %p209
    %p211 = scmp.ne.s32.totalorder %s203, %s206
    %p212 = scmp.eq.s32.totalorder %s16, 0
    %p213 = por %p211, %p212
    %p214 = scmp.ne.s32.totalorder %s203, %s206
    %p215 = scmp.eq.s32.totalorder %s21, 15
    %p216 = por %p214, %p215
    %p217 = scmp.ne.s32.totalorder %s206, %s207
    %p218 = scmp.eq.s32.totalorder %s21, 0
    %p219 = por %p217, %p218
    %p220 = scmp.ne.s32.totalorder %s206, %s207
    %p221 = scmp.eq.s32.totalorder %s22, 15
    %p222 = por %p220, %p221
    %p224 = scmp.ne.s32.totalorder %s207, %s223
    %p225 = scmp.eq.s32.totalorder %s22, 0
    %p226 = por %p224, %p225
    %s227 = ssub.s32 %s23, %s42
    %s228 = ssub.s32 %s25, %s34
    %s229 = sor.u32 %s227, %s228
    %s230 = ssub.s32 %s24, %s38
    %s231 = sor.u32 %s229, %s230
    %p232 = scmp.eq.s32.totalorder %s231, 0
    %s234 = sadd.s32 %s233, 1
    %s235 = scalar_select %p232, %s233, %s234
    %p238 = pneg %p232
    %p239 = scmp.eq.s32.totalorder %s16, 15
    %p240 = por %p238, %p239
    %p241 = scmp.ne.s32.totalorder %s233, %s236
    %p242 = scmp.eq.s32.totalorder %s16, 0
    %p243 = por %p241, %p242
    %p244 = scmp.ne.s32.totalorder %s233, %s236
    %p245 = scmp.eq.s32.totalorder %s21, 15
    %p246 = por %p244, %p245
    %p247 = scmp.ne.s32.totalorder %s236, %s237
    %p248 = scmp.eq.s32.totalorder %s21, 0
    %p249 = por %p247, %p248
    %p250 = scmp.ne.s32.totalorder %s236, %s237
    %p251 = scmp.eq.s32.totalorder %s22, 15
    %p252 = por %p250, %p251
    %p254 = scmp.ne.s32.totalorder %s237, %s253
    %p255 = scmp.eq.s32.totalorder %s22, 0
    %p256 = por %p254, %p255
    %s257 = ssub.s32 %s23, %s42
    %s258 = ssub.s32 %s25, %s34
    %s259 = sor.u32 %s257, %s258
    %s260 = ssub.s32 %s24, %s38
    %s261 = sor.u32 %s259, %s260
    %p262 = scmp.eq.s32.totalorder %s261, 0
    %s264 = sadd.s32 %s263, 1
    %s265 = scalar_select %p262, %s263, %s264
    %p268 = pneg %p262
    %p269 = scmp.eq.s32.totalorder %s16, 15
    %p270 = por %p268, %p269
    %p271 = scmp.ne.s32.totalorder %s263, %s266
    %p272 = scmp.eq.s32.totalorder %s16, 0
    %p273 = por %p271, %p272
    %p274 = scmp.ne.s32.totalorder %s263, %s266
    %p275 = scmp.eq.s32.totalorder %s21, 15
    %p276 = por %p274, %p275
    %p277 = scmp.ne.s32.totalorder %s266, %s267
    %p278 = scmp.eq.s32.totalorder %s21, 0
    %p279 = por %p277, %p278
    %p280 = scmp.ne.s32.totalorder %s266, %s267
    %p281 = scmp.eq.s32.totalorder %s22, 15
    %p282 = por %p280, %p281
    %p284 = scmp.ne.s32.totalorder %s267, %s283
    %p285 = scmp.eq.s32.totalorder %s22, 0
    %p286 = por %p284, %p285
    %s287 = ssub.s32 %s23, %s42
    %s288 = ssub.s32 %s25, %s34
    %s289 = sor.u32 %s287, %s288
    %s290 = ssub.s32 %s24, %s38
    %s291 = sor.u32 %s289, %s290
    %p292 = scmp.eq.s32.totalorder %s291, 0
    %s294 = sadd.s32 %s293, 1
    %s295 = scalar_select %p292, %s293, %s294
    %p298 = pneg %p292
    %p299 = scmp.eq.s32.totalorder %s16, 15
    %p300 = por %p298, %p299
    %p301 = scmp.ne.s32.totalorder %s293, %s296
    %p302 = scmp.eq.s32.totalorder %s16, 0
    %p303 = por %p301, %p302
    %p304 = scmp.ne.s32.totalorder %s293, %s296
    %p305 = scmp.eq.s32.totalorder %s21, 15
    %p306 = por %p304, %p305
    %p307 = scmp.ne.s32.totalorder %s296, %s297
    %p308 = scmp.eq.s32.totalorder %s21, 0
    %p309 = por %p307, %p308
    %p310 = scmp.ne.s32.totalorder %s296, %s297
    %p311 = scmp.eq.s32.totalorder %s22, 15
    %p312 = por %p310, %p311
    %p314 = scmp.ne.s32.totalorder %s297, %s313
    %p315 = scmp.eq.s32.totalorder %s22, 0
    %p316 = por %p314, %p315
    %p317 = scmp.le.s32.totalorder 1, %s16
    %p318 = scmp.lt.s32.totalorder %s16, 17
    %p319 = pnand %p317, %p318
    %p320 = pneg %p319
    // Predicated region
    $region9: #{gpt_self_attention.2} parent=5 // pred_check
      _
    $region10: #{gpt_self_attention.2} parent=5 // pred_check_branch
      %322 = sbr.rel (%p319) target = $region12
    $region11: #{gpt_self_attention.2} parent=5 // pred_region
      %s323 = ssub.s32 %s16, 1
    $region12: #{gpt_self_attention.2} parent=5 // pred_fallthru
      _
    %p324 = scmp.lt.s32.totalorder %s16, 16
    // Predicated region
    $region13: #{gpt_self_attention.2} parent=5 // pred_check
      %p325 = pneg %p324
    $region14: #{gpt_self_attention.2} parent=5 // pred_check_branch
      %327 = sbr.rel (%p325) target = $region16
    $region15: #{gpt_self_attention.2} parent=5 // pred_region
      // Predicated region
      $region17: #{gpt_self_attention.2} parent=15 // pred_check
        %p328 = pneg %p57
      $region18: #{gpt_self_attention.2} parent=15 // pred_check_branch
        %330 = sbr.rel (%p328) target = $region20
      $region19: #{gpt_self_attention.2} parent=15 // pred_region
        %s331 = smul.u32 16, %s24
        %p332 = scmp.lt.s32.totalorder %s23, 1
        %s333 = scalar_select %p332, %s23, 1
        %p334 = scmp.lt.s32.totalorder %s331, 31
        %s335 = scalar_select %p334, %s331, 31
        %s336 = smul.addr %s333, 32
        %s337 = sadd.s32 %s335, %s336
        %s338 = smul.addr %s337, 8
        %s339 = scalar_lea.vmem %s0, %s338
        %s340 = smul.u32 16, %s24
      $region20: #{gpt_self_attention.2} parent=15 // pred_fallthru
        _
      // Predicated region
      $region21: #{gpt_self_attention.2} parent=15 // pred_check
        %p341 = pneg %p83
      $region22: #{gpt_self_attention.2} parent=15 // pred_check_branch
        %343 = sbr.rel (%p341) target = $region24
      $region23: #{gpt_self_attention.2} parent=15 // pred_region
        %p344 = scmp.lt.s32.totalorder %s25, 3
        %s345 = scalar_select %p344, %s25, 3
        %s346 = smul.addr %s345, 16
        %s347 = smul.addr %s346, 8
        %s348 = scalar_lea.vmem %s1, %s347
      $region24: #{gpt_self_attention.2} parent=15 // pred_fallthru
        _
      // Predicated region
      $region25: #{gpt_self_attention.2} parent=15 // pred_check
        %p349 = pneg %p109
      $region26: #{gpt_self_attention.2} parent=15 // pred_check_branch
        %351 = sbr.rel (%p349) target = $region28
      $region27: #{gpt_self_attention.2} parent=15 // pred_region
        %p352 = scmp.lt.s32.totalorder %s25, 3
        %s353 = scalar_select %p352, %s25, 3
        %s354 = smul.addr %s353, 16
        %s355 = smul.addr %s354, 8
        %s356 = scalar_lea.vmem %s2, %s355
      $region28: #{gpt_self_attention.2} parent=15 // pred_fallthru
        _
      // Predicated region
      $region29: #{gpt_self_attention.2} parent=15 // pred_check
        %p357 = pneg %p135
      $region30: #{gpt_self_attention.2} parent=15 // pred_check_branch
        %359 = sbr.rel (%p357) target = $region32
      $region31: #{gpt_self_attention.2} parent=15 // pred_region
        %p360 = scmp.lt.s32.totalorder %s25, 3
        %s361 = scalar_select %p360, %s25, 3
        %s362 = smul.addr %s361, 16
        %s363 = smul.addr %s362, 8
        %s364 = scalar_lea.vmem %s3, %s363
      $region32: #{gpt_self_attention.2} parent=15 // pred_fallthru
        _
      // Predicated region
      $region33: #{gpt_self_attention.2} parent=15 // pred_check
        %p365 = pneg %p161
      $region34: #{gpt_self_attention.2} parent=15 // pred_check_branch
        %367 = sbr.rel (%p365) target = $region36
      $region35: #{gpt_self_attention.2} parent=15 // pred_region
        %p368 = scmp.lt.s32.totalorder %s25, 3
        %s369 = scalar_select %p368, %s25, 3
        %s370 = scalar_lea.vmem %s4, %s369
      $region36: #{gpt_self_attention.2} parent=15 // pred_fallthru
        _
      // Predicated region
      $region37: #{gpt_self_attention.2} parent=15 // pred_check
        %p371 = pneg %p187
      $region38: #{gpt_self_attention.2} parent=15 // pred_check_branch
        %373 = sbr.rel (%p371) target = $region40
      $region39: #{gpt_self_attention.2} parent=15 // pred_region
        %p374 = scmp.lt.s32.totalorder %s25, 3
        %s375 = scalar_select %p374, %s25, 3
        %s376 = scalar_lea.vmem %s5, %s375
      $region40: #{gpt_self_attention.2} parent=15 // pred_fallthru
        _
      // Predicated region
      $region41: #{gpt_self_attention.2} parent=15 // pred_check
        %p377 = pneg %p213
      $region42: #{gpt_self_attention.2} parent=15 // pred_check_branch
        %379 = sbr.rel (%p377) target = $region44
      $region43: #{gpt_self_attention.2} parent=15 // pred_region
        %p380 = scmp.lt.s32.totalorder %s25, 3
        %s381 = scalar_select %p380, %s25, 3
        %s382 = scalar_lea.vmem %s6, %s381
      $region44: #{gpt_self_attention.2} parent=15 // pred_fallthru
        _
    $region16: #{gpt_self_attention.2} parent=5 // pred_fallthru
      _
    %p383 = scmp.le.s32.totalorder 1, %s16
    %p384 = scmp.lt.s32.totalorder %s16, 17
    %p385 = pnand %p383, %p384
    %p386 = pneg %p385
    // Predicated region
    $region45: #{gpt_self_attention.2} parent=5 // pred_check
      _
    $region46: #{gpt_self_attention.2} parent=5 // pred_check_branch
      %388 = sbr.rel (%p385) target = $region48
    $region47: #{gpt_self_attention.2} parent=5 // pred_region
      %s389 = ssub.s32 %s16, 1
      %s390 = smul.u32 16, %s27
      %p391 = scmp.lt.s32.totalorder %s26, 1
      %s392 = scalar_select %p391, %s26, 1
      %p393 = scmp.lt.s32.totalorder %s390, 31
      %s394 = scalar_select %p393, %s390, 31
      %s395 = smul.addr %s392, 32
      %s396 = sadd.s32 %s394, %s395
      %s397 = smul.addr %s396, 8
      %s398 = scalar_lea.vmem %s0, %s397
      %p399 = pneg %p63
      %p400 = pneg %p60
      %p401 = scmp.lt.s32.totalorder %s28, 3
      %s402 = scalar_select %p401, %s28, 3
      %s403 = smul.addr %s402, 16
      %s404 = smul.addr %s403, 8
      %s405 = scalar_lea.vmem %s1, %s404
      %p406 = pneg %p89
      %p407 = pneg %p86
      %p408 = scmp.lt.s32.totalorder %s28, 3
      %s409 = scalar_select %p408, %s28, 3
      %s410 = smul.addr %s409, 16
      %s411 = smul.addr %s410, 8
      %s412 = scalar_lea.vmem %s2, %s411
      %p413 = pneg %p115
      %p414 = pneg %p112
      %p415 = scmp.lt.s32.totalorder %s28, 3
      %s416 = scalar_select %p415, %s28, 3
      %s417 = smul.addr %s416, 16
      %s418 = smul.addr %s417, 8
      %s419 = scalar_lea.vmem %s3, %s418
      %p420 = pneg %p141
      %p421 = pneg %p138
      %p422 = scmp.lt.s32.totalorder %s28, 3
      %s423 = scalar_select %p422, %s28, 3
      %s424 = scalar_lea.vmem %s4, %s423
      %p425 = pneg %p167
      %p426 = pneg %p164
      %p427 = scmp.lt.s32.totalorder %s28, 3
      %s428 = scalar_select %p427, %s28, 3
      %s429 = scalar_lea.vmem %s5, %s428
      %p430 = pneg %p193
      %p431 = pneg %p190
      %p432 = scmp.lt.s32.totalorder %s28, 3
      %s433 = scalar_select %p432, %s28, 3
      %s434 = scalar_lea.vmem %s6, %s433
      %p435 = pneg %p219
      %p436 = pneg %p216
      %p437 = pneg %p249
      %p438 = pneg %p246
      %s439 = smul.u32 16, %s27
      %p440 = scmp.lt.s32.totalorder %s26, 1
      %s441 = scalar_select %p440, %s26, 1
      %p442 = scmp.lt.s32.totalorder %s28, 3
      %s443 = scalar_select %p442, %s28, 3
      %p444 = scmp.lt.s32.totalorder %s439, 31
      %s445 = scalar_select %p444, %s439, 31
      %s446 = smul.addr %s443, 32
      %s447 = sadd.s32 %s445, %s446
      %s448 = smul.addr %s441, 128
      %s449 = sadd.s32 %s447, %s448
      %s450 = smul.addr %s449, 8
      %s451 = scalar_lea.vmem %s7, %s450
      %p452 = pneg %p279
      %p453 = pneg %p276
      %s454 = smul.u32 16, %s27
      %p455 = scmp.lt.s32.totalorder %s26, 1
      %s456 = scalar_select %p455, %s26, 1
      %p457 = scmp.lt.s32.totalorder %s28, 3
      %s458 = scalar_select %p457, %s28, 3
      %p459 = scmp.lt.s32.totalorder %s454, 31
      %s460 = scalar_select %p459, %s454, 31
      %s461 = smul.addr %s458, 32
      %s462 = sadd.s32 %s460, %s461
      %s463 = smul.addr %s456, 128
      %s464 = sadd.s32 %s462, %s463
      %s465 = smul.addr %s464, 8
      %s466 = scalar_lea.vmem %s8, %s465
      %p467 = pneg %p309
      %p468 = pneg %p306
      %s469 = smul.u32 16, %s27
      %p470 = scmp.lt.s32.totalorder %s26, 1
      %s471 = scalar_select %p470, %s26, 1
      %p472 = scmp.lt.s32.totalorder %s28, 3
      %s473 = scalar_select %p472, %s28, 3
      %p474 = scmp.lt.s32.totalorder %s469, 31
      %s475 = scalar_select %p474, %s469, 31
      %s476 = smul.addr %s473, 32
      %s477 = sadd.s32 %s475, %s476
      %s478 = smul.addr %s471, 128
      %s479 = sadd.s32 %s477, %s478
      %s480 = smul.addr %s479, 8
      %s481 = scalar_lea.vmem %s9, %s480
      %s482 = smul.u32 16, %s27
      %p483 = scmp.lt.s32.totalorder %s26, 1
      %s484 = scalar_select %p483, %s26, 1
      %p485 = scmp.lt.s32.totalorder %s482, 31
      %s486 = scalar_select %p485, %s482, 31
      %s487 = smul.addr %s484, 32
      %s488 = sadd.s32 %s486, %s487
      %s489 = smul.addr %s488, 8
      %s490 = scalar_lea.vmem %s0, %s489
      %s491 = smul.u32 16, %s27
      %p492 = scmp.lt.s32.totalorder %s28, 3
      %s493 = scalar_select %p492, %s28, 3
      %s494 = smul.addr %s493, 16
      %s495 = smul.addr %s494, 8
      %s496 = scalar_lea.vmem %s1, %s495
      %p497 = scmp.lt.s32.totalorder %s28, 3
      %s498 = scalar_select %p497, %s28, 3
      %s499 = smul.addr %s498, 16
      %s500 = smul.addr %s499, 8
      %s501 = scalar_lea.vmem %s2, %s500
      %p502 = scmp.lt.s32.totalorder %s28, 3
      %s503 = scalar_select %p502, %s28, 3
      %s504 = smul.addr %s503, 16
      %s505 = smul.addr %s504, 8
      %s506 = scalar_lea.vmem %s3, %s505
      %p507 = scmp.lt.s32.totalorder %s28, 3
      %s508 = scalar_select %p507, %s28, 3
      %s509 = scalar_lea.vmem %s4, %s508
      %p510 = scmp.lt.s32.totalorder %s28, 3
      %s511 = scalar_select %p510, %s28, 3
      %s512 = scalar_lea.vmem %s5, %s511
      %p513 = scmp.lt.s32.totalorder %s28, 3
      %s514 = scalar_select %p513, %s28, 3
      %s515 = scalar_lea.vmem %s6, %s514
      %s516 = smul.u32 16, %s27
      %p517 = scmp.lt.s32.totalorder %s26, 1
      %s518 = scalar_select %p517, %s26, 1
      %p519 = scmp.lt.s32.totalorder %s28, 3
      %s520 = scalar_select %p519, %s28, 3
      %p521 = scmp.lt.s32.totalorder %s516, 31
      %s522 = scalar_select %p521, %s516, 31
      %s523 = smul.addr %s520, 32
      %s524 = sadd.s32 %s522, %s523
      %s525 = smul.addr %s518, 128
      %s526 = sadd.s32 %s524, %s525
      %s527 = smul.addr %s526, 8
      %s528 = scalar_lea.vmem %s7, %s527
      %s529 = smul.u32 16, %s27
      %s530 = smul.u32 16, %s27
      %p531 = scmp.lt.s32.totalorder %s26, 1
      %s532 = scalar_select %p531, %s26, 1
      %p533 = scmp.lt.s32.totalorder %s28, 3
      %s534 = scalar_select %p533, %s28, 3
      %p535 = scmp.lt.s32.totalorder %s530, 31
      %s536 = scalar_select %p535, %s530, 31
      %s537 = smul.addr %s534, 32
      %s538 = sadd.s32 %s536, %s537
      %s539 = smul.addr %s532, 128
      %s540 = sadd.s32 %s538, %s539
      %s541 = smul.addr %s540, 8
      %s542 = scalar_lea.vmem %s8, %s541
      %s543 = smul.u32 16, %s27
      %s544 = smul.u32 16, %s27
      %p545 = scmp.lt.s32.totalorder %s26, 1
      %s546 = scalar_select %p545, %s26, 1
      %p547 = scmp.lt.s32.totalorder %s28, 3
      %s548 = scalar_select %p547, %s28, 3
      %p549 = scmp.lt.s32.totalorder %s544, 31
      %s550 = scalar_select %p549, %s544, 31
      %s551 = smul.addr %s548, 32
      %s552 = sadd.s32 %s550, %s551
      %s553 = smul.addr %s546, 128
      %s554 = sadd.s32 %s552, %s553
      %s555 = smul.addr %s554, 8
      %s556 = scalar_lea.vmem %s9, %s555
      %s557 = smul.u32 16, %s27
      %v558 = vld [vmem:[%s490] sm:$0xff]
      %v559 = vld [vmem:[%s490 + $0x8] sm:$0xff]
      %v560 = vld [vmem:[%s490 + $0x10] sm:$0xff]
      %v561 = vld [vmem:[%s490 + $0x18] sm:$0xff]
      %v562 = vld [vmem:[%s490 + $0x20] sm:$0xff]
      %v563 = vld [vmem:[%s490 + $0x28] sm:$0xff]
      %v564 = vld [vmem:[%s490 + $0x30] sm:$0xff]
      %v565 = vld [vmem:[%s490 + $0x38] sm:$0xff]
      %v566 = vld [vmem:[%s490 + $0x40] sm:$0xff]
      %v567 = vld [vmem:[%s490 + $0x48] sm:$0xff]
      %v568 = vld [vmem:[%s490 + $0x50] sm:$0xff]
      %v569 = vld [vmem:[%s490 + $0x58] sm:$0xff]
      %v570 = vld [vmem:[%s490 + $0x60] sm:$0xff]
      %v571 = vld [vmem:[%s490 + $0x68] sm:$0xff]
      %v572 = vld [vmem:[%s490 + $0x70] sm:$0xff]
      %v573 = vld [vmem:[%s490 + $0x78] sm:$0xff]
      %v574 = vld [vmem:[%s496] sm:$0xff]
      %v575 = vld [vmem:[%s496 + $0x8] sm:$0xff]
      %v576 = vld [vmem:[%s496 + $0x10] sm:$0xff]
      %v577 = vld [vmem:[%s496 + $0x18] sm:$0xff]
      %v578 = vld [vmem:[%s496 + $0x20] sm:$0xff]
      %v579 = vld [vmem:[%s496 + $0x28] sm:$0xff]
      %v580 = vld [vmem:[%s496 + $0x30] sm:$0xff]
      %v581 = vld [vmem:[%s496 + $0x38] sm:$0xff]
      %v582 = vld [vmem:[%s496 + $0x40] sm:$0xff]
      %v583 = vld [vmem:[%s496 + $0x48] sm:$0xff]
      %v584 = vld [vmem:[%s496 + $0x50] sm:$0xff]
      %v585 = vld [vmem:[%s496 + $0x58] sm:$0xff]
      %v586 = vld [vmem:[%s496 + $0x60] sm:$0xff]
      %v587 = vld [vmem:[%s496 + $0x68] sm:$0xff]
      %v588 = vld [vmem:[%s496 + $0x70] sm:$0xff]
      %v589 = vld [vmem:[%s496 + $0x78] sm:$0xff]
      %v590 = vld [vmem:[%s509] sm:$0x1]
      %v592 = vlaneseq
      %v593 = vshrl.u32 %v592, 7
      %v594 = vsub.s32 0, %v593
      %v595 = vrot.slane %v590, %v594
      %597 = vmatprep.subr.mxu0 0.0
      %598 = vmatpush1.msra.mxu0 %v589
      %599 = vmatprep.subr.mxu0 0.0
      %600 = vmatpush1.msra.mxu0 %v588
      %601 = vmatprep.subr.mxu0 0.0
      %602 = vmatpush1.msra.mxu0 %v587
      %603 = vmatprep.subr.mxu0 0.0
      %604 = vmatpush1.msra.mxu0 %v586
      %605 = vmatprep.subr.mxu0 0.0
      %606 = vmatpush1.msra.mxu0 %v585
      %607 = vmatprep.subr.mxu0 0.0
      %608 = vmatpush1.msra.mxu0 %v584
      %609 = vmatprep.subr.mxu0 0.0
      %610 = vmatpush1.msra.mxu0 %v583
      %611 = vmatprep.subr.mxu0 0.0
      %612 = vmatpush1.msra.mxu0 %v582
      %613 = vmatprep.subr.mxu0 0.0
      %614 = vmatpush1.msra.mxu0 %v581
      %615 = vmatprep.subr.mxu0 0.0
      %616 = vmatpush1.msra.mxu0 %v580
      %617 = vmatprep.subr.mxu0 0.0
      %618 = vmatpush1.msra.mxu0 %v579
      %619 = vmatprep.subr.mxu0 0.0
      %620 = vmatpush1.msra.mxu0 %v578
      %621 = vmatprep.subr.mxu0 0.0
      %622 = vmatpush1.msra.mxu0 %v577
      %623 = vmatprep.subr.mxu0 0.0
      %624 = vmatpush1.msra.mxu0 %v576
      %625 = vmatprep.subr.mxu0 0.0
      %626 = vmatpush1.msra.mxu0 %v575
      %627 = vmatprep.subr.mxu0 0.0
      %628 = vmatpush1.msra.mxu0 %v574
      %629 = vmatprep.subr.mxu0 0.0
      %630 = vmatpush2.msra.mxu0 0.0
      %631 = vmatprep.subr.mxu0 0.0
      %632 = vmatpush2.msra.mxu0 0.0
      %633 = vmatprep.subr.mxu0 0.0
      %634 = vmatpush2.msra.mxu0 0.0
      %635 = vmatprep.subr.mxu0 0.0
      %636 = vmatpush2.msra.mxu0 0.0
      %637 = vmatprep.subr.mxu0 0.0
      %638 = vmatpush2.msra.mxu0 0.0
      %639 = vmatprep.subr.mxu0 0.0
      %640 = vmatpush2.msra.mxu0 0.0
      %641 = vmatprep.subr.mxu0 0.0
      %642 = vmatpush2.msra.mxu0 0.0
      %643 = vmatprep.subr.mxu0 0.0
      %644 = vmatpush2.msra.mxu0 0.0
      %645 = vmatprep.subr.mxu0 0.0
      %646 = vmatpush2.msra.mxu0 0.0
      %647 = vmatprep.subr.mxu0 0.0
      %648 = vmatpush2.msra.mxu0 0.0
      %649 = vmatprep.subr.mxu0 0.0
      %650 = vmatpush2.msra.mxu0 0.0
      %651 = vmatprep.subr.mxu0 0.0
      %652 = vmatpush2.msra.mxu0 0.0
      %653 = vmatprep.subr.mxu0 0.0
      %654 = vmatpush2.msra.mxu0 0.0
      %655 = vmatprep.subr.mxu0 0.0
      %656 = vmatpush2.msra.mxu0 0.0
      %657 = vmatprep.subr.mxu0 0.0
      %658 = vmatpush2.msra.mxu0 0.0
      %659 = vmatprep.subr.mxu0 0.0
      %660 = vmatpush2.msra.mxu0 0.0
      %661 = vmatprep.mubr.f32.mxu0 0.0
      %662 = vmatmul.mubr.f32.gmra.mxu0 %v558
      %v663 = vpop.f32.mrf.mxu0
      %v664 = vadd.f32 %v595, %v663
      %v665 = vpop.f32.mrf.mxu0
      %666 = vmatprep.mubr.f32.mxu0 0.0
      %667 = vmatmul.mubr.f32.gmra.mxu0 %v559
      %v668 = vpop.f32.mrf.mxu0
      %v669 = vadd.f32 %v595, %v668
      %v670 = vpop.f32.mrf.mxu0
      %671 = vmatprep.mubr.f32.mxu0 0.0
      %672 = vmatmul.mubr.f32.gmra.mxu0 %v560
      %v673 = vpop.f32.mrf.mxu0
      %v674 = vadd.f32 %v595, %v673
      %v675 = vpop.f32.mrf.mxu0
      %676 = vmatprep.mubr.f32.mxu0 0.0
      %677 = vmatmul.mubr.f32.gmra.mxu0 %v561
      %v678 = vpop.f32.mrf.mxu0
      %v679 = vadd.f32 %v595, %v678
      %v680 = vpop.f32.mrf.mxu0
      %681 = vmatprep.mubr.f32.mxu0 0.0
      %682 = vmatmul.mubr.f32.gmra.mxu0 %v562
      %v683 = vpop.f32.mrf.mxu0
      %v684 = vadd.f32 %v595, %v683
      %v685 = vpop.f32.mrf.mxu0
      %686 = vmatprep.mubr.f32.mxu0 0.0
      %687 = vmatmul.mubr.f32.gmra.mxu0 %v563
      %v688 = vpop.f32.mrf.mxu0
      %v689 = vadd.f32 %v595, %v688
      %v690 = vpop.f32.mrf.mxu0
      %691 = vmatprep.mubr.f32.mxu0 0.0
      %692 = vmatmul.mubr.f32.gmra.mxu0 %v564
      %v693 = vpop.f32.mrf.mxu0
      %v694 = vadd.f32 %v595, %v693
      %v695 = vpop.f32.mrf.mxu0
      %696 = vmatprep.mubr.f32.mxu0 0.0
      %697 = vmatmul.mubr.f32.gmra.mxu0 %v565
      %v698 = vpop.f32.mrf.mxu0
      %v699 = vadd.f32 %v595, %v698
      %v700 = vpop.f32.mrf.mxu0
      %701 = vmatprep.mubr.f32.mxu0 0.0
      %702 = vmatmul.mubr.f32.gmra.mxu0 %v566
      %v703 = vpop.f32.mrf.mxu0
      %v704 = vadd.f32 %v595, %v703
      %v705 = vpop.f32.mrf.mxu0
      %706 = vmatprep.mubr.f32.mxu0 0.0
      %707 = vmatmul.mubr.f32.gmra.mxu0 %v567
      %v708 = vpop.f32.mrf.mxu0
      %v709 = vadd.f32 %v595, %v708
      %v710 = vpop.f32.mrf.mxu0
      %711 = vmatprep.mubr.f32.mxu0 0.0
      %712 = vmatmul.mubr.f32.gmra.mxu0 %v568
      %v713 = vpop.f32.mrf.mxu0
      %v714 = vadd.f32 %v595, %v713
      %v715 = vpop.f32.mrf.mxu0
      %716 = vmatprep.mubr.f32.mxu0 0.0
      %717 = vmatmul.mubr.f32.gmra.mxu0 %v569
      %v718 = vpop.f32.mrf.mxu0
      %v719 = vadd.f32 %v595, %v718
      %v720 = vpop.f32.mrf.mxu0
      %721 = vmatprep.mubr.f32.mxu0 0.0
      %722 = vmatmul.mubr.f32.gmra.mxu0 %v570
      %v723 = vpop.f32.mrf.mxu0
      %v724 = vadd.f32 %v595, %v723
      %v725 = vpop.f32.mrf.mxu0
      %726 = vmatprep.mubr.f32.mxu0 0.0
      %727 = vmatmul.mubr.f32.gmra.mxu0 %v571
      %v728 = vpop.f32.mrf.mxu0
      %v729 = vadd.f32 %v595, %v728
      %v730 = vpop.f32.mrf.mxu0
      %731 = vmatprep.mubr.f32.mxu0 0.0
      %732 = vmatmul.mubr.f32.gmra.mxu0 %v572
      %v733 = vpop.f32.mrf.mxu0
      %v734 = vadd.f32 %v595, %v733
      %v735 = vpop.f32.mrf.mxu0
      %736 = vmatprep.mubr.f32.mxu0 0.0
      %737 = vmatmul.mubr.f32.gmra.mxu0 %v573
      %v738 = vpop.f32.mrf.mxu0
      %v739 = vadd.f32 %v595, %v738
      %v740 = vpop.f32.mrf.mxu0
      %741 = vdwg.mxu0
      %vm742 = vcmask 261120
      %743 = vst.msk [vmem:[%s528] sm:$0xff] %vm742, %v664
      %744 = vst.msk [vmem:[%s528 + $0x8] sm:$0xff] %vm742, %v669
      %745 = vst.msk [vmem:[%s528 + $0x10] sm:$0xff] %vm742, %v674
      %746 = vst.msk [vmem:[%s528 + $0x18] sm:$0xff] %vm742, %v679
      %747 = vst.msk [vmem:[%s528 + $0x20] sm:$0xff] %vm742, %v684
      %748 = vst.msk [vmem:[%s528 + $0x28] sm:$0xff] %vm742, %v689
      %749 = vst.msk [vmem:[%s528 + $0x30] sm:$0xff] %vm742, %v694
      %750 = vst.msk [vmem:[%s528 + $0x38] sm:$0xff] %vm742, %v699
      %751 = vst.msk [vmem:[%s528 + $0x40] sm:$0xff] %vm742, %v704
      %752 = vst.msk [vmem:[%s528 + $0x48] sm:$0xff] %vm742, %v709
      %753 = vst.msk [vmem:[%s528 + $0x50] sm:$0xff] %vm742, %v714
      %754 = vst.msk [vmem:[%s528 + $0x58] sm:$0xff] %vm742, %v719
      %755 = vst.msk [vmem:[%s528 + $0x60] sm:$0xff] %vm742, %v724
      %756 = vst.msk [vmem:[%s528 + $0x68] sm:$0xff] %vm742, %v729
      %757 = vst.msk [vmem:[%s528 + $0x70] sm:$0xff] %vm742, %v734
      %758 = vst.msk [vmem:[%s528 + $0x78] sm:$0xff] %vm742, %v739
      %v759 = vld [vmem:[%s501] sm:$0xff]
      %v760 = vld [vmem:[%s501 + $0x8] sm:$0xff]
      %v761 = vld [vmem:[%s501 + $0x10] sm:$0xff]
      %v762 = vld [vmem:[%s501 + $0x18] sm:$0xff]
      %v763 = vld [vmem:[%s501 + $0x20] sm:$0xff]
      %v764 = vld [vmem:[%s501 + $0x28] sm:$0xff]
      %v765 = vld [vmem:[%s501 + $0x30] sm:$0xff]
      %v766 = vld [vmem:[%s501 + $0x38] sm:$0xff]
      %v767 = vld [vmem:[%s501 + $0x40] sm:$0xff]
      %v768 = vld [vmem:[%s501 + $0x48] sm:$0xff]
      %v769 = vld [vmem:[%s501 + $0x50] sm:$0xff]
      %v770 = vld [vmem:[%s501 + $0x58] sm:$0xff]
      %v771 = vld [vmem:[%s501 + $0x60] sm:$0xff]
      %v772 = vld [vmem:[%s501 + $0x68] sm:$0xff]
      %v773 = vld [vmem:[%s501 + $0x70] sm:$0xff]
      %v774 = vld [vmem:[%s501 + $0x78] sm:$0xff]
      %v775 = vld [vmem:[%s512] sm:$0x1]
      %v777 = vlaneseq
      %v778 = vshrl.u32 %v777, 7
      %v779 = vsub.s32 0, %v778
      %v780 = vrot.slane %v775, %v779
      %782 = vmatprep.subr.mxu0 0.0
      %783 = vmatpush1.msra.mxu0 %v774
      %784 = vmatprep.subr.mxu0 0.0
      %785 = vmatpush1.msra.mxu0 %v773
      %786 = vmatprep.subr.mxu0 0.0
      %787 = vmatpush1.msra.mxu0 %v772
      %788 = vmatprep.subr.mxu0 0.0
      %789 = vmatpush1.msra.mxu0 %v771
      %790 = vmatprep.subr.mxu0 0.0
      %791 = vmatpush1.msra.mxu0 %v770
      %792 = vmatprep.subr.mxu0 0.0
      %793 = vmatpush1.msra.mxu0 %v769
      %794 = vmatprep.subr.mxu0 0.0
      %795 = vmatpush1.msra.mxu0 %v768
      %796 = vmatprep.subr.mxu0 0.0
      %797 = vmatpush1.msra.mxu0 %v767
      %798 = vmatprep.subr.mxu0 0.0
      %799 = vmatpush1.msra.mxu0 %v766
      %800 = vmatprep.subr.mxu0 0.0
      %801 = vmatpush1.msra.mxu0 %v765
      %802 = vmatprep.subr.mxu0 0.0
      %803 = vmatpush1.msra.mxu0 %v764
      %804 = vmatprep.subr.mxu0 0.0
      %805 = vmatpush1.msra.mxu0 %v763
      %806 = vmatprep.subr.mxu0 0.0
      %807 = vmatpush1.msra.mxu0 %v762
      %808 = vmatprep.subr.mxu0 0.0
      %809 = vmatpush1.msra.mxu0 %v761
      %810 = vmatprep.subr.mxu0 0.0
      %811 = vmatpush1.msra.mxu0 %v760
      %812 = vmatprep.subr.mxu0 0.0
      %813 = vmatpush1.msra.mxu0 %v759
      %814 = vmatprep.subr.mxu0 0.0
      %815 = vmatpush2.msra.mxu0 0.0
      %816 = vmatprep.subr.mxu0 0.0
      %817 = vmatpush2.msra.mxu0 0.0
      %818 = vmatprep.subr.mxu0 0.0
      %819 = vmatpush2.msra.mxu0 0.0
      %820 = vmatprep.subr.mxu0 0.0
      %821 = vmatpush2.msra.mxu0 0.0
      %822 = vmatprep.subr.mxu0 0.0
      %823 = vmatpush2.msra.mxu0 0.0
      %824 = vmatprep.subr.mxu0 0.0
      %825 = vmatpush2.msra.mxu0 0.0
      %826 = vmatprep.subr.mxu0 0.0
      %827 = vmatpush2.msra.mxu0 0.0
      %828 = vmatprep.subr.mxu0 0.0
      %829 = vmatpush2.msra.mxu0 0.0
      %830 = vmatprep.subr.mxu0 0.0
      %831 = vmatpush2.msra.mxu0 0.0
      %832 = vmatprep.subr.mxu0 0.0
      %833 = vmatpush2.msra.mxu0 0.0
      %834 = vmatprep.subr.mxu0 0.0
      %835 = vmatpush2.msra.mxu0 0.0
      %836 = vmatprep.subr.mxu0 0.0
      %837 = vmatpush2.msra.mxu0 0.0
      %838 = vmatprep.subr.mxu0 0.0
      %839 = vmatpush2.msra.mxu0 0.0
      %840 = vmatprep.subr.mxu0 0.0
      %841 = vmatpush2.msra.mxu0 0.0
      %842 = vmatprep.subr.mxu0 0.0
      %843 = vmatpush2.msra.mxu0 0.0
      %844 = vmatprep.subr.mxu0 0.0
      %845 = vmatpush2.msra.mxu0 0.0
      %846 = vmatprep.mubr.f32.mxu0 0.0
      %847 = vmatmul.mubr.f32.gmra.mxu0 %v558
      %v848 = vpop.f32.mrf.mxu0
      %v849 = vadd.f32 %v780, %v848
      %v850 = vpop.f32.mrf.mxu0
      %851 = vmatprep.mubr.f32.mxu0 0.0
      %852 = vmatmul.mubr.f32.gmra.mxu0 %v559
      %v853 = vpop.f32.mrf.mxu0
      %v854 = vadd.f32 %v780, %v853
      %v855 = vpop.f32.mrf.mxu0
      %856 = vmatprep.mubr.f32.mxu0 0.0
      %857 = vmatmul.mubr.f32.gmra.mxu0 %v560
      %v858 = vpop.f32.mrf.mxu0
      %v859 = vadd.f32 %v780, %v858
      %v860 = vpop.f32.mrf.mxu0
      %861 = vmatprep.mubr.f32.mxu0 0.0
      %862 = vmatmul.mubr.f32.gmra.mxu0 %v561
      %v863 = vpop.f32.mrf.mxu0
      %v864 = vadd.f32 %v780, %v863
      %v865 = vpop.f32.mrf.mxu0
      %866 = vmatprep.mubr.f32.mxu0 0.0
      %867 = vmatmul.mubr.f32.gmra.mxu0 %v562
      %v868 = vpop.f32.mrf.mxu0
      %v869 = vadd.f32 %v780, %v868
      %v870 = vpop.f32.mrf.mxu0
      %871 = vmatprep.mubr.f32.mxu0 0.0
      %872 = vmatmul.mubr.f32.gmra.mxu0 %v563
      %v873 = vpop.f32.mrf.mxu0
      %v874 = vadd.f32 %v780, %v873
      %v875 = vpop.f32.mrf.mxu0
      %876 = vmatprep.mubr.f32.mxu0 0.0
      %877 = vmatmul.mubr.f32.gmra.mxu0 %v564
      %v878 = vpop.f32.mrf.mxu0
      %v879 = vadd.f32 %v780, %v878
      %v880 = vpop.f32.mrf.mxu0
      %881 = vmatprep.mubr.f32.mxu0 0.0
      %882 = vmatmul.mubr.f32.gmra.mxu0 %v565
      %v883 = vpop.f32.mrf.mxu0
      %v884 = vadd.f32 %v780, %v883
      %v885 = vpop.f32.mrf.mxu0
      %886 = vmatprep.mubr.f32.mxu0 0.0
      %887 = vmatmul.mubr.f32.gmra.mxu0 %v566
      %v888 = vpop.f32.mrf.mxu0
      %v889 = vadd.f32 %v780, %v888
      %v890 = vpop.f32.mrf.mxu0
      %891 = vmatprep.mubr.f32.mxu0 0.0
      %892 = vmatmul.mubr.f32.gmra.mxu0 %v567
      %v893 = vpop.f32.mrf.mxu0
      %v894 = vadd.f32 %v780, %v893
      %v895 = vpop.f32.mrf.mxu0
      %896 = vmatprep.mubr.f32.mxu0 0.0
      %897 = vmatmul.mubr.f32.gmra.mxu0 %v568
      %v898 = vpop.f32.mrf.mxu0
      %v899 = vadd.f32 %v780, %v898
      %v900 = vpop.f32.mrf.mxu0
      %901 = vmatprep.mubr.f32.mxu0 0.0
      %902 = vmatmul.mubr.f32.gmra.mxu0 %v569
      %v903 = vpop.f32.mrf.mxu0
      %v904 = vadd.f32 %v780, %v903
      %v905 = vpop.f32.mrf.mxu0
      %906 = vmatprep.mubr.f32.mxu0 0.0
      %907 = vmatmul.mubr.f32.gmra.mxu0 %v570
      %v908 = vpop.f32.mrf.mxu0
      %v909 = vadd.f32 %v780, %v908
      %v910 = vpop.f32.mrf.mxu0
      %911 = vmatprep.mubr.f32.mxu0 0.0
      %912 = vmatmul.mubr.f32.gmra.mxu0 %v571
      %v913 = vpop.f32.mrf.mxu0
      %v914 = vadd.f32 %v780, %v913
      %v915 = vpop.f32.mrf.mxu0
      %916 = vmatprep.mubr.f32.mxu0 0.0
      %917 = vmatmul.mubr.f32.gmra.mxu0 %v572
      %v918 = vpop.f32.mrf.mxu0
      %v919 = vadd.f32 %v780, %v918
      %v920 = vpop.f32.mrf.mxu0
      %921 = vmatprep.mubr.f32.mxu0 0.0
      %922 = vmatmul.mubr.f32.gmra.mxu0 %v573
      %v923 = vpop.f32.mrf.mxu0
      %v924 = vadd.f32 %v780, %v923
      %v925 = vpop.f32.mrf.mxu0
      %926 = vdwg.mxu0
      %927 = vst.msk [vmem:[%s542] sm:$0xff] %vm742, %v849
      %928 = vst.msk [vmem:[%s542 + $0x8] sm:$0xff] %vm742, %v854
      %929 = vst.msk [vmem:[%s542 + $0x10] sm:$0xff] %vm742, %v859
      %930 = vst.msk [vmem:[%s542 + $0x18] sm:$0xff] %vm742, %v864
      %931 = vst.msk [vmem:[%s542 + $0x20] sm:$0xff] %vm742, %v869
      %932 = vst.msk [vmem:[%s542 + $0x28] sm:$0xff] %vm742, %v874
      %933 = vst.msk [vmem:[%s542 + $0x30] sm:$0xff] %vm742, %v879
      %934 = vst.msk [vmem:[%s542 + $0x38] sm:$0xff] %vm742, %v884
      %935 = vst.msk [vmem:[%s542 + $0x40] sm:$0xff] %vm742, %v889
      %936 = vst.msk [vmem:[%s542 + $0x48] sm:$0xff] %vm742, %v894
      %937 = vst.msk [vmem:[%s542 + $0x50] sm:$0xff] %vm742, %v899
      %938 = vst.msk [vmem:[%s542 + $0x58] sm:$0xff] %vm742, %v904
      %939 = vst.msk [vmem:[%s542 + $0x60] sm:$0xff] %vm742, %v909
      %940 = vst.msk [vmem:[%s542 + $0x68] sm:$0xff] %vm742, %v914
      %941 = vst.msk [vmem:[%s542 + $0x70] sm:$0xff] %vm742, %v919
      %942 = vst.msk [vmem:[%s542 + $0x78] sm:$0xff] %vm742, %v924
      %v943 = vld [vmem:[%s506] sm:$0xff]
      %v944 = vld [vmem:[%s506 + $0x8] sm:$0xff]
      %v945 = vld [vmem:[%s506 + $0x10] sm:$0xff]
      %v946 = vld [vmem:[%s506 + $0x18] sm:$0xff]
      %v947 = vld [vmem:[%s506 + $0x20] sm:$0xff]
      %v948 = vld [vmem:[%s506 + $0x28] sm:$0xff]
      %v949 = vld [vmem:[%s506 + $0x30] sm:$0xff]
      %v950 = vld [vmem:[%s506 + $0x38] sm:$0xff]
      %v951 = vld [vmem:[%s506 + $0x40] sm:$0xff]
      %v952 = vld [vmem:[%s506 + $0x48] sm:$0xff]
      %v953 = vld [vmem:[%s506 + $0x50] sm:$0xff]
      %v954 = vld [vmem:[%s506 + $0x58] sm:$0xff]
      %v955 = vld [vmem:[%s506 + $0x60] sm:$0xff]
      %v956 = vld [vmem:[%s506 + $0x68] sm:$0xff]
      %v957 = vld [vmem:[%s506 + $0x70] sm:$0xff]
      %v958 = vld [vmem:[%s506 + $0x78] sm:$0xff]
      %v959 = vld [vmem:[%s515] sm:$0x1]
      %v961 = vlaneseq
      %v962 = vshrl.u32 %v961, 7
      %v963 = vsub.s32 0, %v962
      %v964 = vrot.slane %v959, %v963
      %966 = vmatprep.subr.mxu0 0.0
      %967 = vmatpush1.msra.mxu0 %v958
      %968 = vmatprep.subr.mxu0 0.0
      %969 = vmatpush1.msra.mxu0 %v957
      %970 = vmatprep.subr.mxu0 0.0
      %971 = vmatpush1.msra.mxu0 %v956
      %972 = vmatprep.subr.mxu0 0.0
      %973 = vmatpush1.msra.mxu0 %v955
      %974 = vmatprep.subr.mxu0 0.0
      %975 = vmatpush1.msra.mxu0 %v954
      %976 = vmatprep.subr.mxu0 0.0
      %977 = vmatpush1.msra.mxu0 %v953
      %978 = vmatprep.subr.mxu0 0.0
      %979 = vmatpush1.msra.mxu0 %v952
      %980 = vmatprep.subr.mxu0 0.0
      %981 = vmatpush1.msra.mxu0 %v951
      %982 = vmatprep.subr.mxu0 0.0
      %983 = vmatpush1.msra.mxu0 %v950
      %984 = vmatprep.subr.mxu0 0.0
      %985 = vmatpush1.msra.mxu0 %v949
      %986 = vmatprep.subr.mxu0 0.0
      %987 = vmatpush1.msra.mxu0 %v948
      %988 = vmatprep.subr.mxu0 0.0
      %989 = vmatpush1.msra.mxu0 %v947
      %990 = vmatprep.subr.mxu0 0.0
      %991 = vmatpush1.msra.mxu0 %v946
      %992 = vmatprep.subr.mxu0 0.0
      %993 = vmatpush1.msra.mxu0 %v945
      %994 = vmatprep.subr.mxu0 0.0
      %995 = vmatpush1.msra.mxu0 %v944
      %996 = vmatprep.subr.mxu0 0.0
      %997 = vmatpush1.msra.mxu0 %v943
      %998 = vmatprep.subr.mxu0 0.0
      %999 = vmatpush2.msra.mxu0 0.0
      %1000 = vmatprep.subr.mxu0 0.0
      %1001 = vmatpush2.msra.mxu0 0.0
      %1002 = vmatprep.subr.mxu0 0.0
      %1003 = vmatpush2.msra.mxu0 0.0
      %1004 = vmatprep.subr.mxu0 0.0
      %1005 = vmatpush2.msra.mxu0 0.0
      %1006 = vmatprep.subr.mxu0 0.0
      %1007 = vmatpush2.msra.mxu0 0.0
      %1008 = vmatprep.subr.mxu0 0.0
      %1009 = vmatpush2.msra.mxu0 0.0
      %1010 = vmatprep.subr.mxu0 0.0
      %1011 = vmatpush2.msra.mxu0 0.0
      %1012 = vmatprep.subr.mxu0 0.0
      %1013 = vmatpush2.msra.mxu0 0.0
      %1014 = vmatprep.subr.mxu0 0.0
      %1015 = vmatpush2.msra.mxu0 0.0
      %1016 = vmatprep.subr.mxu0 0.0
      %1017 = vmatpush2.msra.mxu0 0.0
      %1018 = vmatprep.subr.mxu0 0.0
      %1019 = vmatpush2.msra.mxu0 0.0
      %1020 = vmatprep.subr.mxu0 0.0
      %1021 = vmatpush2.msra.mxu0 0.0
      %1022 = vmatprep.subr.mxu0 0.0
      %1023 = vmatpush2.msra.mxu0 0.0
      %1024 = vmatprep.subr.mxu0 0.0
      %1025 = vmatpush2.msra.mxu0 0.0
      %1026 = vmatprep.subr.mxu0 0.0
      %1027 = vmatpush2.msra.mxu0 0.0
      %1028 = vmatprep.subr.mxu0 0.0
      %1029 = vmatpush2.msra.mxu0 0.0
      %1030 = vmatprep.mubr.f32.mxu0 0.0
      %1031 = vmatmul.mubr.f32.gmra.mxu0 %v558
      %v1032 = vpop.f32.mrf.mxu0
      %v1033 = vadd.f32 %v964, %v1032
      %v1034 = vpop.f32.mrf.mxu0
      %1035 = vmatprep.mubr.f32.mxu0 0.0
      %1036 = vmatmul.mubr.f32.gmra.mxu0 %v559
      %v1037 = vpop.f32.mrf.mxu0
      %v1038 = vadd.f32 %v964, %v1037
      %v1039 = vpop.f32.mrf.mxu0
      %1040 = vmatprep.mubr.f32.mxu0 0.0
      %1041 = vmatmul.mubr.f32.gmra.mxu0 %v560
      %v1042 = vpop.f32.mrf.mxu0
      %v1043 = vadd.f32 %v964, %v1042
      %v1044 = vpop.f32.mrf.mxu0
      %1045 = vmatprep.mubr.f32.mxu0 0.0
      %1046 = vmatmul.mubr.f32.gmra.mxu0 %v561
      %v1047 = vpop.f32.mrf.mxu0
      %v1048 = vadd.f32 %v964, %v1047
      %v1049 = vpop.f32.mrf.mxu0
      %1050 = vmatprep.mubr.f32.mxu0 0.0
      %1051 = vmatmul.mubr.f32.gmra.mxu0 %v562
      %v1052 = vpop.f32.mrf.mxu0
      %v1053 = vadd.f32 %v964, %v1052
      %v1054 = vpop.f32.mrf.mxu0
      %1055 = vmatprep.mubr.f32.mxu0 0.0
      %1056 = vmatmul.mubr.f32.gmra.mxu0 %v563
      %v1057 = vpop.f32.mrf.mxu0
      %v1058 = vadd.f32 %v964, %v1057
      %v1059 = vpop.f32.mrf.mxu0
      %1060 = vmatprep.mubr.f32.mxu0 0.0
      %1061 = vmatmul.mubr.f32.gmra.mxu0 %v564
      %v1062 = vpop.f32.mrf.mxu0
      %v1063 = vadd.f32 %v964, %v1062
      %v1064 = vpop.f32.mrf.mxu0
      %1065 = vmatprep.mubr.f32.mxu0 0.0
      %1066 = vmatmul.mubr.f32.gmra.mxu0 %v565
      %v1067 = vpop.f32.mrf.mxu0
      %v1068 = vadd.f32 %v964, %v1067
      %v1069 = vpop.f32.mrf.mxu0
      %1070 = vmatprep.mubr.f32.mxu0 0.0
      %1071 = vmatmul.mubr.f32.gmra.mxu0 %v566
      %v1072 = vpop.f32.mrf.mxu0
      %v1073 = vadd.f32 %v964, %v1072
      %v1074 = vpop.f32.mrf.mxu0
      %1075 = vmatprep.mubr.f32.mxu0 0.0
      %1076 = vmatmul.mubr.f32.gmra.mxu0 %v567
      %v1077 = vpop.f32.mrf.mxu0
      %v1078 = vadd.f32 %v964, %v1077
      %v1079 = vpop.f32.mrf.mxu0
      %1080 = vmatprep.mubr.f32.mxu0 0.0
      %1081 = vmatmul.mubr.f32.gmra.mxu0 %v568
      %v1082 = vpop.f32.mrf.mxu0
      %v1083 = vadd.f32 %v964, %v1082
      %v1084 = vpop.f32.mrf.mxu0
      %1085 = vmatprep.mubr.f32.mxu0 0.0
      %1086 = vmatmul.mubr.f32.gmra.mxu0 %v569
      %v1087 = vpop.f32.mrf.mxu0
      %v1088 = vadd.f32 %v964, %v1087
      %v1089 = vpop.f32.mrf.mxu0
      %1090 = vmatprep.mubr.f32.mxu0 0.0
      %1091 = vmatmul.mubr.f32.gmra.mxu0 %v570
      %v1092 = vpop.f32.mrf.mxu0
      %v1093 = vadd.f32 %v964, %v1092
      %v1094 = vpop.f32.mrf.mxu0
      %1095 = vmatprep.mubr.f32.mxu0 0.0
      %1096 = vmatmul.mubr.f32.gmra.mxu0 %v571
      %v1097 = vpop.f32.mrf.mxu0
      %v1098 = vadd.f32 %v964, %v1097
      %v1099 = vpop.f32.mrf.mxu0
      %1100 = vmatprep.mubr.f32.mxu0 0.0
      %1101 = vmatmul.mubr.f32.gmra.mxu0 %v572
      %v1102 = vpop.f32.mrf.mxu0
      %v1103 = vadd.f32 %v964, %v1102
      %v1104 = vpop.f32.mrf.mxu0
      %1105 = vmatprep.mubr.f32.mxu0 0.0
      %1106 = vmatmul.mubr.f32.gmra.mxu0 %v573
      %v1107 = vpop.f32.mrf.mxu0
      %v1108 = vadd.f32 %v964, %v1107
      %v1109 = vpop.f32.mrf.mxu0
      %1110 = vdwg.mxu0
      %1111 = vst.msk [vmem:[%s556] sm:$0xff] %vm742, %v1033
      %1112 = vst.msk [vmem:[%s556 + $0x8] sm:$0xff] %vm742, %v1038
      %1113 = vst.msk [vmem:[%s556 + $0x10] sm:$0xff] %vm742, %v1043
      %1114 = vst.msk [vmem:[%s556 + $0x18] sm:$0xff] %vm742, %v1048
      %1115 = vst.msk [vmem:[%s556 + $0x20] sm:$0xff] %vm742, %v1053
      %1116 = vst.msk [vmem:[%s556 + $0x28] sm:$0xff] %vm742, %v1058
      %1117 = vst.msk [vmem:[%s556 + $0x30] sm:$0xff] %vm742, %v1063
      %1118 = vst.msk [vmem:[%s556 + $0x38] sm:$0xff] %vm742, %v1068
      %1119 = vst.msk [vmem:[%s556 + $0x40] sm:$0xff] %vm742, %v1073
      %1120 = vst.msk [vmem:[%s556 + $0x48] sm:$0xff] %vm742, %v1078
      %1121 = vst.msk [vmem:[%s556 + $0x50] sm:$0xff] %vm742, %v1083
      %1122 = vst.msk [vmem:[%s556 + $0x58] sm:$0xff] %vm742, %v1088
      %1123 = vst.msk [vmem:[%s556 + $0x60] sm:$0xff] %vm742, %v1093
      %1124 = vst.msk [vmem:[%s556 + $0x68] sm:$0xff] %vm742, %v1098
      %1125 = vst.msk [vmem:[%s556 + $0x70] sm:$0xff] %vm742, %v1103
      %1126 = vst.msk [vmem:[%s556 + $0x78] sm:$0xff] %vm742, %v1108
      %s1127 = smul.u32 16, %s27
      %p1128 = scmp.lt.s32.totalorder %s26, 1
      %s1129 = scalar_select %p1128, %s26, 1
      %p1130 = scmp.lt.s32.totalorder %s28, 3
      %s1131 = scalar_select %p1130, %s28, 3
      %p1132 = scmp.lt.s32.totalorder %s1127, 31
      %s1133 = scalar_select %p1132, %s1127, 31
      %s1134 = smul.addr %s1131, 32
      %s1135 = sadd.s32 %s1133, %s1134
      %s1136 = smul.addr %s1129, 128
      %s1137 = sadd.s32 %s1135, %s1136
      %s1138 = smul.addr %s1137, 8
      %s1139 = scalar_lea.vmem %s7, %s1138
      %s1140 = smul.u32 16, %s27
      %p1141 = scmp.lt.s32.totalorder %s26, 1
      %s1142 = scalar_select %p1141, %s26, 1
      %p1143 = scmp.lt.s32.totalorder %s28, 3
      %s1144 = scalar_select %p1143, %s28, 3
      %p1145 = scmp.lt.s32.totalorder %s1140, 31
      %s1146 = scalar_select %p1145, %s1140, 31
      %s1147 = smul.addr %s1144, 32
      %s1148 = sadd.s32 %s1146, %s1147
      %s1149 = smul.addr %s1142, 128
      %s1150 = sadd.s32 %s1148, %s1149
      %s1151 = smul.addr %s1150, 8
      %s1152 = scalar_lea.vmem %s8, %s1151
      %s1153 = smul.u32 16, %s27
      %p1154 = scmp.lt.s32.totalorder %s26, 1
      %s1155 = scalar_select %p1154, %s26, 1
      %p1156 = scmp.lt.s32.totalorder %s28, 3
      %s1157 = scalar_select %p1156, %s28, 3
      %p1158 = scmp.lt.s32.totalorder %s1153, 31
      %s1159 = scalar_select %p1158, %s1153, 31
      %s1160 = smul.addr %s1157, 32
      %s1161 = sadd.s32 %s1159, %s1160
      %s1162 = smul.addr %s1155, 128
      %s1163 = sadd.s32 %s1161, %s1162
      %s1164 = smul.addr %s1163, 8
      %s1165 = scalar_lea.vmem %s9, %s1164
      // Predicated region
      $region49: #{gpt_self_attention.2} parent=47 // pred_check
        %p1166 = pneg %p246
      $region50: #{gpt_self_attention.2} parent=47 // pred_check_branch
        %1168 = sbr.rel (%p1166) target = $region52
      $region51: #{gpt_self_attention.2} parent=47 // pred_region
        %s1169 = smul.u32 16, %s27
      $region52: #{gpt_self_attention.2} parent=47 // pred_fallthru
        _
      // Predicated region
      $region53: #{gpt_self_attention.2} parent=47 // pred_check
        %p1170 = pneg %p276
      $region54: #{gpt_self_attention.2} parent=47 // pred_check_branch
        %1172 = sbr.rel (%p1170) target = $region56
      $region55: #{gpt_self_attention.2} parent=47 // pred_region
        %s1173 = smul.u32 16, %s27
      $region56: #{gpt_self_attention.2} parent=47 // pred_fallthru
        _
      // Predicated region
      $region57: #{gpt_self_attention.2} parent=47 // pred_check
        %p1174 = pneg %p306
      $region58: #{gpt_self_attention.2} parent=47 // pred_check_branch
        %1176 = sbr.rel (%p1174) target = $region60
      $region59: #{gpt_self_attention.2} parent=47 // pred_region
        %s1177 = smul.u32 16, %s27
      $region60: #{gpt_self_attention.2} parent=47 // pred_fallthru
        _
    $region48: #{gpt_self_attention.2} parent=5 // pred_fallthru
      _
    %p1178 = scmp.le.s32.totalorder 2, %s16
    // Predicated region
    $region61: #{gpt_self_attention.2} parent=5 // pred_check
      %p1179 = pneg %p1178
    $region62: #{gpt_self_attention.2} parent=5 // pred_check_branch
      %1181 = sbr.rel (%p1179) target = $region64
    $region63: #{gpt_self_attention.2} parent=5 // pred_region
      %s1182 = ssub.s32 %s16, 2
      // Predicated region
      $region65: #{gpt_self_attention.2} parent=63 // pred_check
        %p1183 = pneg %p252
      $region66: #{gpt_self_attention.2} parent=63 // pred_check_branch
        %1185 = sbr.rel (%p1183) target = $region68
      $region67: #{gpt_self_attention.2} parent=63 // pred_region
        %s1186 = smul.u32 16, %s30
        %p1187 = scmp.lt.s32.totalorder %s29, 1
        %s1188 = scalar_select %p1187, %s29, 1
        %p1189 = scmp.lt.s32.totalorder %s31, 3
        %s1190 = scalar_select %p1189, %s31, 3
        %p1191 = scmp.lt.s32.totalorder %s1186, 31
        %s1192 = scalar_select %p1191, %s1186, 31
        %s1193 = smul.addr %s1190, 32
        %s1194 = sadd.s32 %s1192, %s1193
        %s1195 = smul.addr %s1188, 128
        %s1196 = sadd.s32 %s1194, %s1195
        %s1197 = smul.addr %s1196, 8
        %s1198 = scalar_lea.vmem %s7, %s1197
      $region68: #{gpt_self_attention.2} parent=63 // pred_fallthru
        _
      // Predicated region
      $region69: #{gpt_self_attention.2} parent=63 // pred_check
        %p1199 = pneg %p282
      $region70: #{gpt_self_attention.2} parent=63 // pred_check_branch
        %1201 = sbr.rel (%p1199) target = $region72
      $region71: #{gpt_self_attention.2} parent=63 // pred_region
        %s1202 = smul.u32 16, %s30
        %p1203 = scmp.lt.s32.totalorder %s29, 1
        %s1204 = scalar_select %p1203, %s29, 1
        %p1205 = scmp.lt.s32.totalorder %s31, 3
        %s1206 = scalar_select %p1205, %s31, 3
        %p1207 = scmp.lt.s32.totalorder %s1202, 31
        %s1208 = scalar_select %p1207, %s1202, 31
        %s1209 = smul.addr %s1206, 32
        %s1210 = sadd.s32 %s1208, %s1209
        %s1211 = smul.addr %s1204, 128
        %s1212 = sadd.s32 %s1210, %s1211
        %s1213 = smul.addr %s1212, 8
        %s1214 = scalar_lea.vmem %s8, %s1213
      $region72: #{gpt_self_attention.2} parent=63 // pred_fallthru
        _
      // Predicated region
      $region73: #{gpt_self_attention.2} parent=63 // pred_check
        %p1215 = pneg %p312
      $region74: #{gpt_self_attention.2} parent=63 // pred_check_branch
        %1217 = sbr.rel (%p1215) target = $region76
      $region75: #{gpt_self_attention.2} parent=63 // pred_region
        %s1218 = smul.u32 16, %s30
        %p1219 = scmp.lt.s32.totalorder %s29, 1
        %s1220 = scalar_select %p1219, %s29, 1
        %p1221 = scmp.lt.s32.totalorder %s31, 3
        %s1222 = scalar_select %p1221, %s31, 3
        %p1223 = scmp.lt.s32.totalorder %s1218, 31
        %s1224 = scalar_select %p1223, %s1218, 31
        %s1225 = smul.addr %s1222, 32
        %s1226 = sadd.s32 %s1224, %s1225
        %s1227 = smul.addr %s1220, 128
        %s1228 = sadd.s32 %s1226, %s1227
        %s1229 = smul.addr %s1228, 8
        %s1230 = scalar_lea.vmem %s9, %s1229
      $region76: #{gpt_self_attention.2} parent=63 // pred_fallthru
        _
    $region64: #{gpt_self_attention.2} parent=5 // pred_fallthru
      _
  $region6: #{gpt_self_attention.2} parent=0 // loop_footer
    %s20 = sadd.s32 1, %s16
  $region7: #{gpt_self_attention.2} parent=0 // loop_footer_branch
    %15 = sbr.rel target = $region3
  $region8: #{gpt_self_attention.2} parent=0 // loop_exit
    _

// kernel: gpt_self_attention.3
$region0: #{gpt_self_attention.3}
  #allocation0 [shape = 'u32[]', space=smem, size = 0x4, offset = 0x4, fixed_abs, tag = 'smem constant byte address 0x4 - core index']
  #allocation1 [shape = 'u32[144,128]{1,0:T(1,128)}', space=vmem, size = 0x12000, scoped, tag = 'internal scratch']
  #allocation2 [shape = 'f32[128,1]{1,0:T(8,128)}', space=vmem, size = 0x10000, scoped, tag = 'scratch operand']
  #allocation3 [shape = 'f32[128,1]{1,0:T(8,128)}', space=vmem, size = 0x10000, scoped, tag = 'scratch operand']
  #allocation4 [shape = 'f32[128,32]{1,0:T(8,128)}', space=vmem, size = 0x10000, scoped, tag = 'scratch operand']
  #allocation5 [shape = 'f32[128,128]{1,0:T(8,128)}', space=vmem, size = 0x10000, scoped, tag = 'scratch operand']
  %s0 = inlined_call_operand.vmem [shape: f32[2,4,256,32], index: 0, kind: input, shape index: {}]
  %s1 = inlined_call_operand.vmem [shape: f32[2,4,256,32], index: 1, kind: input, shape index: {}]
  %s2 = inlined_call_operand.vmem [shape: f32[2,4,256,32], index: 2, kind: input, shape index: {}]
  %s3 = inlined_call_operand.vmem [shape: f32[4,32,128], index: 3, kind: input, shape index: {}]
  %s4 = inlined_call_operand.vmem [shape: f32[1,128], index: 4, kind: input, shape index: {}]
  %s5 = inlined_call_operand.hbm [shape: f32[2,256,128], index: 5, kind: output, shape index: {}]
  %s6 = sld [smem:[#allocation0]]
  $region73: #{gpt_self_attention.3} parent=0
    _
  %s8 = ssub.s32 1, %s6
  %s9 = scalar_select 0, %s8, %s6
  $region1: #{gpt_self_attention.3} parent=0
    #allocation6 [shape = 'u8[131072]{0}', space=vmem, size = 0x20000, scoped, tag = 'output window, operand 0']
    #allocation7 [shape = 's32[2]{0}', space=sflag, size = 0x8, scoped, tag = 'scoped memory for gpt_self_attention.3']
    %10 = vsyncpa [#allocation7], 0
    %s11 = scalar_lea.sflag [#allocation7], 1
    %12 = vsyncpa %s11, 0
    loop: start=0, step=1, limit=34
    $region2: #{gpt_self_attention.3} parent=1 // loop_pre_header
      _
    $region3: #{gpt_self_attention.3} parent=1 // loop_header
      %s14 = sphi 0, %s18
      %p15 = scmp.ge.s32.totalorder %s14, 34
      %s21 = sphi 0, %s47
      %s22 = sphi 0, %s43
      %s23 = sphi 0, %s39
      %s24 = sphi 0, %s35
      %s25 = sphi 0, %s21
      %s26 = sphi 0, %s22
      %s27 = sphi 0, %s23
      %s28 = sphi 0, %s24
      %s29 = sphi 0, %s25
      %s30 = sphi 0, %s26
      %s31 = sphi 0, %s27
      %s32 = sphi 0, %s28
      %s54 = sphi 0, %s56
      %s57 = sphi 0, %s54
      %s58 = sphi 0, %s57
      %s74 = sphi 0, %s58
      %s84 = sphi 0, %s86
      %s87 = sphi 0, %s84
      %s88 = sphi 0, %s87
      %s104 = sphi 0, %s88
      %s114 = sphi 0, %s116
      %s117 = sphi 0, %s114
      %s118 = sphi 0, %s117
      %s134 = sphi 0, %s118
      %s140 = sphi 0, %s142
      %s143 = sphi 0, %s140
      %s144 = sphi 0, %s143
      %s160 = sphi 0, %s144
      %s164 = sphi 0, %s164
      %s166 = sphi 0, %s164
      %s167 = sphi 0, %s166
      %s181 = sphi 0, %s167
      %s189 = sphi 0, %s191
      %s192 = sphi 0, %s189
      %s193 = sphi 0, %s192
      %s209 = sphi 0, %s193
    $region4: #{gpt_self_attention.3} parent=1 // loop_header_branch
      %17 = sbr.rel (%p15) target = $region8
    $region5: #{gpt_self_attention.3} parent=1 // loop_body
      %s19 = ssub.s32 %s14, 1
      %s20 = ssub.s32 %s14, 2
      %s33 = sadd.s32 1, %s24
      %p34 = scmp.ge.s32.totalorder %s33, 2
      %s35 = scalar_select %p34, 0, %s33
      %s36 = sadd.s32 1, %s23
      %s37 = scalar_select %p34, %s36, %s23
      %p38 = scmp.ge.s32.totalorder %s37, 4
      %s39 = scalar_select %p38, 0, %s37
      %s40 = sadd.s32 1, %s22
      %s41 = scalar_select %p38, %s40, %s22
      %p42 = scmp.ge.s32.totalorder %s41, 2
      %s43 = scalar_select %p42, 0, %s41
      %s44 = sadd.s32 1, %s21
      %s45 = scalar_select %p42, %s44, %s21
      %p46 = scmp.ge.s32.totalorder %s45, 2
      %s47 = scalar_select %p46, 0, %s45
      %s48 = ssub.s32 %s21, %s47
      %s49 = ssub.s32 %s23, %s39
      %s50 = sor.u32 %s48, %s49
      %s51 = ssub.s32 %s22, %s43
      %s52 = sor.u32 %s50, %s51
      %p53 = scmp.eq.s32.totalorder %s52, 0
      %s55 = sadd.s32 %s54, 1
      %s56 = scalar_select %p53, %s54, %s55
      %p59 = pneg %p53
      %p60 = scmp.eq.s32.totalorder %s14, 31
      %p61 = por %p59, %p60
      %p62 = scmp.ne.s32.totalorder %s54, %s57
      %p63 = scmp.eq.s32.totalorder %s14, 0
      %p64 = por %p62, %p63
      %p65 = scmp.ne.s32.totalorder %s54, %s57
      %p66 = scmp.eq.s32.totalorder %s19, 31
      %p67 = por %p65, %p66
      %p68 = scmp.ne.s32.totalorder %s57, %s58
      %p69 = scmp.eq.s32.totalorder %s19, 0
      %p70 = por %p68, %p69
      %p71 = scmp.ne.s32.totalorder %s57, %s58
      %p72 = scmp.eq.s32.totalorder %s20, 31
      %p73 = por %p71, %p72
      %p75 = scmp.ne.s32.totalorder %s58, %s74
      %p76 = scmp.eq.s32.totalorder %s20, 0
      %p77 = por %p75, %p76
      %s78 = ssub.s32 %s21, %s47
      %s79 = ssub.s32 %s23, %s39
      %s80 = sor.u32 %s78, %s79
      %s81 = ssub.s32 %s24, %s35
      %s82 = sor.u32 %s80, %s81
      %p83 = scmp.eq.s32.totalorder %s82, 0
      %s85 = sadd.s32 %s84, 1
      %s86 = scalar_select %p83, %s84, %s85
      %p89 = pneg %p83
      %p90 = scmp.eq.s32.totalorder %s14, 31
      %p91 = por %p89, %p90
      %p92 = scmp.ne.s32.totalorder %s84, %s87
      %p93 = scmp.eq.s32.totalorder %s14, 0
      %p94 = por %p92, %p93
      %p95 = scmp.ne.s32.totalorder %s84, %s87
      %p96 = scmp.eq.s32.totalorder %s19, 31
      %p97 = por %p95, %p96
      %p98 = scmp.ne.s32.totalorder %s87, %s88
      %p99 = scmp.eq.s32.totalorder %s19, 0
      %p100 = por %p98, %p99
      %p101 = scmp.ne.s32.totalorder %s87, %s88
      %p102 = scmp.eq.s32.totalorder %s20, 31
      %p103 = por %p101, %p102
      %p105 = scmp.ne.s32.totalorder %s88, %s104
      %p106 = scmp.eq.s32.totalorder %s20, 0
      %p107 = por %p105, %p106
      %s108 = ssub.s32 %s21, %s47
      %s109 = ssub.s32 %s23, %s39
      %s110 = sor.u32 %s108, %s109
      %s111 = ssub.s32 %s24, %s35
      %s112 = sor.u32 %s110, %s111
      %p113 = scmp.eq.s32.totalorder %s112, 0
      %s115 = sadd.s32 %s114, 1
      %s116 = scalar_select %p113, %s114, %s115
      %p119 = pneg %p113
      %p120 = scmp.eq.s32.totalorder %s14, 31
      %p121 = por %p119, %p120
      %p122 = scmp.ne.s32.totalorder %s114, %s117
      %p123 = scmp.eq.s32.totalorder %s14, 0
      %p124 = por %p122, %p123
      %p125 = scmp.ne.s32.totalorder %s114, %s117
      %p126 = scmp.eq.s32.totalorder %s19, 31
      %p127 = por %p125, %p126
      %p128 = scmp.ne.s32.totalorder %s117, %s118
      %p129 = scmp.eq.s32.totalorder %s19, 0
      %p130 = por %p128, %p129
      %p131 = scmp.ne.s32.totalorder %s117, %s118
      %p132 = scmp.eq.s32.totalorder %s20, 31
      %p133 = por %p131, %p132
      %p135 = scmp.ne.s32.totalorder %s118, %s134
      %p136 = scmp.eq.s32.totalorder %s20, 0
      %p137 = por %p135, %p136
      %s138 = ssub.s32 %s23, %s39
      %p139 = scmp.eq.s32.totalorder %s138, 0
      %s141 = sadd.s32 %s140, 1
      %s142 = scalar_select %p139, %s140, %s141
      %p145 = pneg %p139
      %p146 = scmp.eq.s32.totalorder %s14, 31
      %p147 = por %p145, %p146
      %p148 = scmp.ne.s32.totalorder %s140, %s143
      %p149 = scmp.eq.s32.totalorder %s14, 0
      %p150 = por %p148, %p149
      %p151 = scmp.ne.s32.totalorder %s140, %s143
      %p152 = scmp.eq.s32.totalorder %s19, 31
      %p153 = por %p151, %p152
      %p154 = scmp.ne.s32.totalorder %s143, %s144
      %p155 = scmp.eq.s32.totalorder %s19, 0
      %p156 = por %p154, %p155
      %p157 = scmp.ne.s32.totalorder %s143, %s144
      %p158 = scmp.eq.s32.totalorder %s20, 31
      %p159 = por %p157, %p158
      %p161 = scmp.ne.s32.totalorder %s144, %s160
      %p162 = scmp.eq.s32.totalorder %s20, 0
      %p163 = por %p161, %p162
      %s165 = sadd.s32 %s164, 1
      %p168 = scmp.eq.s32.totalorder %s14, 31
      %p169 = scmp.ne.s32.totalorder %s164, %s166
      %p170 = scmp.eq.s32.totalorder %s14, 0
      %p171 = por %p169, %p170
      %p172 = scmp.ne.s32.totalorder %s164, %s166
      %p173 = scmp.eq.s32.totalorder %s19, 31
      %p174 = por %p172, %p173
      %p175 = scmp.ne.s32.totalorder %s166, %s167
      %p176 = scmp.eq.s32.totalorder %s19, 0
      %p177 = por %p175, %p176
      %p178 = scmp.ne.s32.totalorder %s166, %s167
      %p179 = scmp.eq.s32.totalorder %s20, 31
      %p180 = por %p178, %p179
      %p182 = scmp.ne.s32.totalorder %s167, %s181
      %p183 = scmp.eq.s32.totalorder %s20, 0
      %p184 = por %p182, %p183
      %s185 = ssub.s32 %s21, %s47
      %s186 = ssub.s32 %s22, %s43
      %s187 = sor.u32 %s185, %s186
      %p188 = scmp.eq.s32.totalorder %s187, 0
      %s190 = sadd.s32 %s189, 1
      %s191 = scalar_select %p188, %s189, %s190
      %p194 = pneg %p188
      %p195 = scmp.eq.s32.totalorder %s14, 31
      %p196 = por %p194, %p195
      %p197 = scmp.ne.s32.totalorder %s189, %s192
      %p198 = scmp.eq.s32.totalorder %s14, 0
      %p199 = por %p197, %p198
      %p200 = scmp.ne.s32.totalorder %s189, %s192
      %p201 = scmp.eq.s32.totalorder %s19, 31
      %p202 = por %p200, %p201
      %p203 = scmp.ne.s32.totalorder %s192, %s193
      %p204 = scmp.eq.s32.totalorder %s19, 0
      %p205 = por %p203, %p204
      %p206 = scmp.ne.s32.totalorder %s192, %s193
      %p207 = scmp.eq.s32.totalorder %s20, 31
      %p208 = por %p206, %p207
      %p210 = scmp.ne.s32.totalorder %s193, %s209
      %p211 = scmp.eq.s32.totalorder %s20, 0
      %p212 = por %p210, %p211
      %p213 = scmp.le.s32.totalorder 1, %s14
      %p214 = scmp.lt.s32.totalorder %s14, 33
      %p215 = pnand %p213, %p214
      %p216 = pneg %p215
      // Predicated region
      $region9: #{gpt_self_attention.3} parent=5 // pred_check
        _
      $region10: #{gpt_self_attention.3} parent=5 // pred_check_branch
        %218 = sbr.rel (%p215) target = $region12
      $region11: #{gpt_self_attention.3} parent=5 // pred_region
        %s219 = ssub.s32 %s14, 1
        // Predicated region
        $region13: #{gpt_self_attention.3} parent=11 // pred_check
          %p220 = pneg %p177
        $region14: #{gpt_self_attention.3} parent=11 // pred_check_branch
          %222 = sbr.rel (%p220) target = $region16
        $region15: #{gpt_self_attention.3} parent=11 // pred_region
          _
        $region16: #{gpt_self_attention.3} parent=11 // pred_fallthru
          _
      $region12: #{gpt_self_attention.3} parent=5 // pred_fallthru
        _
      %p223 = scmp.lt.s32.totalorder %s14, 32
      // Predicated region
      $region17: #{gpt_self_attention.3} parent=5 // pred_check
        %p224 = pneg %p223
      $region18: #{gpt_self_attention.3} parent=5 // pred_check_branch
        %226 = sbr.rel (%p224) target = $region20
      $region19: #{gpt_self_attention.3} parent=5 // pred_region
        // Predicated region
        $region21: #{gpt_self_attention.3} parent=19 // pred_check
          %p227 = pneg %p64
        $region22: #{gpt_self_attention.3} parent=19 // pred_check_branch
          %229 = sbr.rel (%p227) target = $region24
        $region23: #{gpt_self_attention.3} parent=19 // pred_region
          %s230 = smul.u32 16, %s22
          %p231 = scmp.lt.s32.totalorder %s21, 1
          %s232 = scalar_select %p231, %s21, 1
          %p233 = scmp.lt.s32.totalorder %s23, 3
          %s234 = scalar_select %p233, %s23, 3
          %p235 = scmp.lt.s32.totalorder %s230, 31
          %s236 = scalar_select %p235, %s230, 31
          %s237 = smul.addr %s234, 32
          %s238 = sadd.s32 %s236, %s237
          %s239 = smul.addr %s232, 128
          %s240 = sadd.s32 %s238, %s239
          %s241 = smul.addr %s240, 8
          %s242 = scalar_lea.vmem %s0, %s241
          %s243 = smul.u32 16, %s22
        $region24: #{gpt_self_attention.3} parent=19 // pred_fallthru
          _
        // Predicated region
        $region25: #{gpt_self_attention.3} parent=19 // pred_check
          %p244 = pneg %p94
        $region26: #{gpt_self_attention.3} parent=19 // pred_check_branch
          %246 = sbr.rel (%p244) target = $region28
        $region27: #{gpt_self_attention.3} parent=19 // pred_region
          %s247 = smul.u32 16, %s24
          %p248 = scmp.lt.s32.totalorder %s21, 1
          %s249 = scalar_select %p248, %s21, 1
          %p250 = scmp.lt.s32.totalorder %s23, 3
          %s251 = scalar_select %p250, %s23, 3
          %p252 = scmp.lt.s32.totalorder %s247, 31
          %s253 = scalar_select %p252, %s247, 31
          %s254 = smul.addr %s251, 32
          %s255 = sadd.s32 %s253, %s254
          %s256 = smul.addr %s249, 128
          %s257 = sadd.s32 %s255, %s256
          %s258 = smul.addr %s257, 8
          %s259 = scalar_lea.vmem %s1, %s258
          %s260 = smul.u32 16, %s24
        $region28: #{gpt_self_attention.3} parent=19 // pred_fallthru
          _
        // Predicated region
        $region29: #{gpt_self_attention.3} parent=19 // pred_check
          %p261 = pneg %p124
        $region30: #{gpt_self_attention.3} parent=19 // pred_check_branch
          %263 = sbr.rel (%p261) target = $region32
        $region31: #{gpt_self_attention.3} parent=19 // pred_region
          %s264 = smul.u32 16, %s24
          %p265 = scmp.lt.s32.totalorder %s21, 1
          %s266 = scalar_select %p265, %s21, 1
          %p267 = scmp.lt.s32.totalorder %s23, 3
          %s268 = scalar_select %p267, %s23, 3
          %p269 = scmp.lt.s32.totalorder %s264, 31
          %s270 = scalar_select %p269, %s264, 31
          %s271 = smul.addr %s268, 32
          %s272 = sadd.s32 %s270, %s271
          %s273 = smul.addr %s266, 128
          %s274 = sadd.s32 %s272, %s273
          %s275 = smul.addr %s274, 8
          %s276 = scalar_lea.vmem %s2, %s275
          %s277 = smul.u32 16, %s24
        $region32: #{gpt_self_attention.3} parent=19 // pred_fallthru
          _
        // Predicated region
        $region33: #{gpt_self_attention.3} parent=19 // pred_check
          %p278 = pneg %p150
        $region34: #{gpt_self_attention.3} parent=19 // pred_check_branch
          %280 = sbr.rel (%p278) target = $region36
        $region35: #{gpt_self_attention.3} parent=19 // pred_region
          %p281 = scmp.lt.s32.totalorder %s23, 3
          %s282 = scalar_select %p281, %s23, 3
          %s283 = smul.addr %s282, 4
          %s284 = smul.addr %s283, 8
          %s285 = scalar_lea.vmem %s3, %s284
        $region36: #{gpt_self_attention.3} parent=19 // pred_fallthru
          _
      $region20: #{gpt_self_attention.3} parent=5 // pred_fallthru
        _
      %p286 = scmp.le.s32.totalorder 1, %s14
      %p287 = scmp.lt.s32.totalorder %s14, 33
      %p288 = pnand %p286, %p287
      %p289 = pneg %p288
      // Predicated region
      $region37: #{gpt_self_attention.3} parent=5 // pred_check
        _
      $region38: #{gpt_self_attention.3} parent=5 // pred_check_branch
        %291 = sbr.rel (%p288) target = $region40
      $region39: #{gpt_self_attention.3} parent=5 // pred_region
        %s292 = ssub.s32 %s14, 1
        %s293 = smul.u32 16, %s26
        %p294 = scmp.lt.s32.totalorder %s25, 1
        %s295 = scalar_select %p294, %s25, 1
        %p296 = scmp.lt.s32.totalorder %s27, 3
        %s297 = scalar_select %p296, %s27, 3
        %p298 = scmp.lt.s32.totalorder %s293, 31
        %s299 = scalar_select %p298, %s293, 31
        %s300 = smul.addr %s297, 32
        %s301 = sadd.s32 %s299, %s300
        %s302 = smul.addr %s295, 128
        %s303 = sadd.s32 %s301, %s302
        %s304 = smul.addr %s303, 8
        %s305 = scalar_lea.vmem %s0, %s304
        %p306 = pneg %p70
        %p307 = pneg %p67
        %s308 = smul.u32 16, %s28
        %p309 = scmp.lt.s32.totalorder %s25, 1
        %s310 = scalar_select %p309, %s25, 1
        %p311 = scmp.lt.s32.totalorder %s27, 3
        %s312 = scalar_select %p311, %s27, 3
        %p313 = scmp.lt.s32.totalorder %s308, 31
        %s314 = scalar_select %p313, %s308, 31
        %s315 = smul.addr %s312, 32
        %s316 = sadd.s32 %s314, %s315
        %s317 = smul.addr %s310, 128
        %s318 = sadd.s32 %s316, %s317
        %s319 = smul.addr %s318, 8
        %s320 = scalar_lea.vmem %s1, %s319
        %p321 = pneg %p100
        %p322 = pneg %p97
        %s323 = smul.u32 16, %s28
        %p324 = scmp.lt.s32.totalorder %s25, 1
        %s325 = scalar_select %p324, %s25, 1
        %p326 = scmp.lt.s32.totalorder %s27, 3
        %s327 = scalar_select %p326, %s27, 3
        %p328 = scmp.lt.s32.totalorder %s323, 31
        %s329 = scalar_select %p328, %s323, 31
        %s330 = smul.addr %s327, 32
        %s331 = sadd.s32 %s329, %s330
        %s332 = smul.addr %s325, 128
        %s333 = sadd.s32 %s331, %s332
        %s334 = smul.addr %s333, 8
        %s335 = scalar_lea.vmem %s2, %s334
        %p336 = pneg %p130
        %p337 = pneg %p127
        %p338 = scmp.lt.s32.totalorder %s27, 3
        %s339 = scalar_select %p338, %s27, 3
        %s340 = smul.addr %s339, 4
        %s341 = smul.addr %s340, 8
        %s342 = scalar_lea.vmem %s3, %s341
        %p343 = pneg %p156
        %p344 = pneg %p153
        %p345 = pneg %p177
        %p346 = pneg %p174
        %p347 = pneg %p205
        %p348 = pneg %p202
        %s349 = sand.u32 %s192, 1
        %s350 = scalar_lea.sflag [#allocation7], %s349
        %s351 = sand.u32 %s192, 1
        %s352 = smul.addr %s351, 128
        %s353 = scalar_lea.vmem [#allocation6], %s352
        %s354 = smul.u32 16, %s26
        %p355 = scmp.lt.s32.totalorder %s25, 1
        %s356 = scalar_select %p355, %s25, 1
        %p357 = scmp.lt.s32.totalorder %s27, 3
        %s358 = scalar_select %p357, %s27, 3
        %p359 = scmp.lt.s32.totalorder %s354, 31
        %s360 = scalar_select %p359, %s354, 31
        %s361 = smul.addr %s358, 32
        %s362 = sadd.s32 %s360, %s361
        %s363 = smul.addr %s356, 128
        %s364 = sadd.s32 %s362, %s363
        %s365 = smul.addr %s364, 8
        %s366 = scalar_lea.vmem %s0, %s365
        %s367 = smul.u32 16, %s26
        %s368 = smul.u32 16, %s28
        %p369 = scmp.lt.s32.totalorder %s25, 1
        %s370 = scalar_select %p369, %s25, 1
        %p371 = scmp.lt.s32.totalorder %s27, 3
        %s372 = scalar_select %p371, %s27, 3
        %p373 = scmp.lt.s32.totalorder %s368, 31
        %s374 = scalar_select %p373, %s368, 31
        %s375 = smul.addr %s372, 32
        %s376 = sadd.s32 %s374, %s375
        %s377 = smul.addr %s370, 128
        %s378 = sadd.s32 %s376, %s377
        %s379 = smul.addr %s378, 8
        %s380 = scalar_lea.vmem %s1, %s379
        %s381 = smul.u32 16, %s28
        %s382 = smul.u32 16, %s28
        %p383 = scmp.lt.s32.totalorder %s25, 1
        %s384 = scalar_select %p383, %s25, 1
        %p385 = scmp.lt.s32.totalorder %s27, 3
        %s386 = scalar_select %p385, %s27, 3
        %p387 = scmp.lt.s32.totalorder %s382, 31
        %s388 = scalar_select %p387, %s382, 31
        %s389 = smul.addr %s386, 32
        %s390 = sadd.s32 %s388, %s389
        %s391 = smul.addr %s384, 128
        %s392 = sadd.s32 %s390, %s391
        %s393 = smul.addr %s392, 8
        %s394 = scalar_lea.vmem %s2, %s393
        %s395 = smul.u32 16, %s28
        %p396 = scmp.lt.s32.totalorder %s27, 3
        %s397 = scalar_select %p396, %s27, 3
        %s398 = smul.addr %s397, 4
        %s399 = smul.addr %s398, 8
        %s400 = scalar_lea.vmem %s3, %s399
        %s401 = smul.u32 16, %s26
        %p402 = scmp.eq.s32.totalorder %s28, 0
        // Predicated region
        $region41: #{gpt_self_attention.3} parent=39 // pred_check
          %p403 = pneg %p402
        $region42: #{gpt_self_attention.3} parent=39 // pred_check_branch
          %405 = sbr.rel (%p403) target = $region44
        $region43: #{gpt_self_attention.3} parent=39 // pred_region
          %vm406 = vcmask 7168
          %407 = vst.msk [vmem:[#allocation2] sm:$0xff] %vm406, -inf
          %408 = vst.msk [vmem:[#allocation2 + $0x8] sm:$0xff] %vm406, -inf
          %409 = vst.msk [vmem:[#allocation2 + $0x10] sm:$0xff] %vm406, -inf
          %410 = vst.msk [vmem:[#allocation2 + $0x18] sm:$0xff] %vm406, -inf
          %411 = vst.msk [vmem:[#allocation2 + $0x20] sm:$0xff] %vm406, -inf
          %412 = vst.msk [vmem:[#allocation2 + $0x28] sm:$0xff] %vm406, -inf
          %413 = vst.msk [vmem:[#allocation2 + $0x30] sm:$0xff] %vm406, -inf
          %414 = vst.msk [vmem:[#allocation2 + $0x38] sm:$0xff] %vm406, -inf
          %415 = vst.msk [vmem:[#allocation2 + $0x40] sm:$0xff] %vm406, -inf
          %416 = vst.msk [vmem:[#allocation2 + $0x48] sm:$0xff] %vm406, -inf
          %417 = vst.msk [vmem:[#allocation2 + $0x50] sm:$0xff] %vm406, -inf
          %418 = vst.msk [vmem:[#allocation2 + $0x58] sm:$0xff] %vm406, -inf
          %419 = vst.msk [vmem:[#allocation2 + $0x60] sm:$0xff] %vm406, -inf
          %420 = vst.msk [vmem:[#allocation2 + $0x68] sm:$0xff] %vm406, -inf
          %421 = vst.msk [vmem:[#allocation2 + $0x70] sm:$0xff] %vm406, -inf
          %422 = vst.msk [vmem:[#allocation2 + $0x78] sm:$0xff] %vm406, -inf
          %423 = vst.msk [vmem:[#allocation3] sm:$0xff] %vm406, 0.0
          %424 = vst.msk [vmem:[#allocation3 + $0x8] sm:$0xff] %vm406, 0.0
          %425 = vst.msk [vmem:[#allocation3 + $0x10] sm:$0xff] %vm406, 0.0
          %426 = vst.msk [vmem:[#allocation3 + $0x18] sm:$0xff] %vm406, 0.0
          %427 = vst.msk [vmem:[#allocation3 + $0x20] sm:$0xff] %vm406, 0.0
          %428 = vst.msk [vmem:[#allocation3 + $0x28] sm:$0xff] %vm406, 0.0
          %429 = vst.msk [vmem:[#allocation3 + $0x30] sm:$0xff] %vm406, 0.0
          %430 = vst.msk [vmem:[#allocation3 + $0x38] sm:$0xff] %vm406, 0.0
          %431 = vst.msk [vmem:[#allocation3 + $0x40] sm:$0xff] %vm406, 0.0
          %432 = vst.msk [vmem:[#allocation3 + $0x48] sm:$0xff] %vm406, 0.0
          %433 = vst.msk [vmem:[#allocation3 + $0x50] sm:$0xff] %vm406, 0.0
          %434 = vst.msk [vmem:[#allocation3 + $0x58] sm:$0xff] %vm406, 0.0
          %435 = vst.msk [vmem:[#allocation3 + $0x60] sm:$0xff] %vm406, 0.0
          %436 = vst.msk [vmem:[#allocation3 + $0x68] sm:$0xff] %vm406, 0.0
          %437 = vst.msk [vmem:[#allocation3 + $0x70] sm:$0xff] %vm406, 0.0
          %438 = vst.msk [vmem:[#allocation3 + $0x78] sm:$0xff] %vm406, 0.0
          %vm439 = vcmask 261120
          %440 = vst.msk [vmem:[#allocation4] sm:$0xff] %vm439, 0.0
          %441 = vst.msk [vmem:[#allocation4 + $0x8] sm:$0xff] %vm439, 0.0
          %442 = vst.msk [vmem:[#allocation4 + $0x10] sm:$0xff] %vm439, 0.0
          %443 = vst.msk [vmem:[#allocation4 + $0x18] sm:$0xff] %vm439, 0.0
          %444 = vst.msk [vmem:[#allocation4 + $0x20] sm:$0xff] %vm439, 0.0
          %445 = vst.msk [vmem:[#allocation4 + $0x28] sm:$0xff] %vm439, 0.0
          %446 = vst.msk [vmem:[#allocation4 + $0x30] sm:$0xff] %vm439, 0.0
          %447 = vst.msk [vmem:[#allocation4 + $0x38] sm:$0xff] %vm439, 0.0
          %448 = vst.msk [vmem:[#allocation4 + $0x40] sm:$0xff] %vm439, 0.0
          %449 = vst.msk [vmem:[#allocation4 + $0x48] sm:$0xff] %vm439, 0.0
          %450 = vst.msk [vmem:[#allocation4 + $0x50] sm:$0xff] %vm439, 0.0
          %451 = vst.msk [vmem:[#allocation4 + $0x58] sm:$0xff] %vm439, 0.0
          %452 = vst.msk [vmem:[#allocation4 + $0x60] sm:$0xff] %vm439, 0.0
          %453 = vst.msk [vmem:[#allocation4 + $0x68] sm:$0xff] %vm439, 0.0
          %454 = vst.msk [vmem:[#allocation4 + $0x70] sm:$0xff] %vm439, 0.0
          %455 = vst.msk [vmem:[#allocation4 + $0x78] sm:$0xff] %vm439, 0.0
        $region44: #{gpt_self_attention.3} parent=39 // pred_fallthru
          _
        %p456 = scmp.eq.s32.totalorder %s27, 0
        %p457 = pnand %p456, %p402
        %p458 = pneg %p457
        // Predicated region
        $region45: #{gpt_self_attention.3} parent=39 // pred_check
          _
        $region46: #{gpt_self_attention.3} parent=39 // pred_check_branch
          %460 = sbr.rel (%p457) target = $region48
        $region47: #{gpt_self_attention.3} parent=39 // pred_region
          %461 = vst [vmem:[#allocation5] sm:$0xff] 0.0
          %462 = vst [vmem:[#allocation5 + $0x8] sm:$0xff] 0.0
          %463 = vst [vmem:[#allocation5 + $0x10] sm:$0xff] 0.0
          %464 = vst [vmem:[#allocation5 + $0x18] sm:$0xff] 0.0
          %465 = vst [vmem:[#allocation5 + $0x20] sm:$0xff] 0.0
          %466 = vst [vmem:[#allocation5 + $0x28] sm:$0xff] 0.0
          %467 = vst [vmem:[#allocation5 + $0x30] sm:$0xff] 0.0
          %468 = vst [vmem:[#allocation5 + $0x38] sm:$0xff] 0.0
          %469 = vst [vmem:[#allocation5 + $0x40] sm:$0xff] 0.0
          %470 = vst [vmem:[#allocation5 + $0x48] sm:$0xff] 0.0
          %471 = vst [vmem:[#allocation5 + $0x50] sm:$0xff] 0.0
          %472 = vst [vmem:[#allocation5 + $0x58] sm:$0xff] 0.0
          %473 = vst [vmem:[#allocation5 + $0x60] sm:$0xff] 0.0
          %474 = vst [vmem:[#allocation5 + $0x68] sm:$0xff] 0.0
          %475 = vst [vmem:[#allocation5 + $0x70] sm:$0xff] 0.0
          %476 = vst [vmem:[#allocation5 + $0x78] sm:$0xff] 0.0
        $region48: #{gpt_self_attention.3} parent=39 // pred_fallthru
          _
        %s477 = smul.u32 %s26, 128
        %s478 = smul.u32 %s28, 128
        %s479 = sadd.s32 %s477, 127
        %p480 = scmp.le.s32.totalorder %s478, %s479
        // Predicated region
        $region49: #{gpt_self_attention.3} parent=39 // pred_check
          %p481 = pneg %p480
        $region50: #{gpt_self_attention.3} parent=39 // pred_check_branch
          %483 = sbr.rel (%p481) target = $region52
        $region51: #{gpt_self_attention.3} parent=39 // pred_region
          %v484 = vld [vmem:[%s366] sm:$0xff]
          %v485 = vld [vmem:[%s366 + $0x8] sm:$0xff]
          %v486 = vld [vmem:[%s366 + $0x10] sm:$0xff]
          %v487 = vld [vmem:[%s366 + $0x18] sm:$0xff]
          %v488 = vld [vmem:[%s366 + $0x20] sm:$0xff]
          %v489 = vld [vmem:[%s366 + $0x28] sm:$0xff]
          %v490 = vld [vmem:[%s366 + $0x30] sm:$0xff]
          %v491 = vld [vmem:[%s366 + $0x38] sm:$0xff]
          %v492 = vld [vmem:[%s366 + $0x40] sm:$0xff]
          %v493 = vld [vmem:[%s366 + $0x48] sm:$0xff]
          %v494 = vld [vmem:[%s366 + $0x50] sm:$0xff]
          %v495 = vld [vmem:[%s366 + $0x58] sm:$0xff]
          %v496 = vld [vmem:[%s366 + $0x60] sm:$0xff]
          %v497 = vld [vmem:[%s366 + $0x68] sm:$0xff]
          %v498 = vld [vmem:[%s366 + $0x70] sm:$0xff]
          %v499 = vld [vmem:[%s366 + $0x78] sm:$0xff]
          %v500 = vld [vmem:[%s380] sm:$0xff]
          %v501 = vld [vmem:[%s380 + $0x8] sm:$0xff]
          %v502 = vld [vmem:[%s380 + $0x10] sm:$0xff]
          %v503 = vld [vmem:[%s380 + $0x18] sm:$0xff]
          %v504 = vld [vmem:[%s380 + $0x20] sm:$0xff]
          %v505 = vld [vmem:[%s380 + $0x28] sm:$0xff]
          %v506 = vld [vmem:[%s380 + $0x30] sm:$0xff]
          %v507 = vld [vmem:[%s380 + $0x38] sm:$0xff]
          %v508 = vld [vmem:[%s380 + $0x40] sm:$0xff]
          %v509 = vld [vmem:[%s380 + $0x48] sm:$0xff]
          %v510 = vld [vmem:[%s380 + $0x50] sm:$0xff]
          %v511 = vld [vmem:[%s380 + $0x58] sm:$0xff]
          %v512 = vld [vmem:[%s380 + $0x60] sm:$0xff]
          %v513 = vld [vmem:[%s380 + $0x68] sm:$0xff]
          %v514 = vld [vmem:[%s380 + $0x70] sm:$0xff]
          %v515 = vld [vmem:[%s380 + $0x78] sm:$0xff]
          %vm516 = vcmask 261120
          %v518 = vsel %vm516, %v484, 0
          %v521 = vsel %vm516, %v485, 0
          %v524 = vsel %vm516, %v486, 0
          %v527 = vsel %vm516, %v487, 0
          %v530 = vsel %vm516, %v488, 0
          %v533 = vsel %vm516, %v489, 0
          %v536 = vsel %vm516, %v490, 0
          %v539 = vsel %vm516, %v491, 0
          %v542 = vsel %vm516, %v492, 0
          %v545 = vsel %vm516, %v493, 0
          %v548 = vsel %vm516, %v494, 0
          %v551 = vsel %vm516, %v495, 0
          %v554 = vsel %vm516, %v496, 0
          %v557 = vsel %vm516, %v497, 0
          %v560 = vsel %vm516, %v498, 0
          %v563 = vsel %vm516, %v499, 0
          %v566 = vsel %vm516, %v500, 0
          %v569 = vsel %vm516, %v501, 0
          %v572 = vsel %vm516, %v502, 0
          %v575 = vsel %vm516, %v503, 0
          %v578 = vsel %vm516, %v504, 0
          %v581 = vsel %vm516, %v505, 0
          %v584 = vsel %vm516, %v506, 0
          %v587 = vsel %vm516, %v507, 0
          %v590 = vsel %vm516, %v508, 0
          %v593 = vsel %vm516, %v509, 0
          %v596 = vsel %vm516, %v510, 0
          %v599 = vsel %vm516, %v511, 0
          %v602 = vsel %vm516, %v512, 0
          %v605 = vsel %vm516, %v513, 0
          %v608 = vsel %vm516, %v514, 0
          %v611 = vsel %vm516, %v515, 0
          %613 = vmatprep.subr.mxu0 0.0
          %614 = vmatpush1.xpose.msra.mxu0 %v611
          %615 = vmatprep.subr.mxu0 0.0
          %616 = vmatpush1.xpose.msra.mxu0 %v608
          %617 = vmatprep.subr.mxu0 0.0
          %618 = vmatpush1.xpose.msra.mxu0 %v605
          %619 = vmatprep.subr.mxu0 0.0
          %620 = vmatpush1.xpose.msra.mxu0 %v602
          %621 = vmatprep.subr.mxu0 0.0
          %622 = vmatpush1.xpose.msra.mxu0 %v599
          %623 = vmatprep.subr.mxu0 0.0
          %624 = vmatpush1.xpose.msra.mxu0 %v596
          %625 = vmatprep.subr.mxu0 0.0
          %626 = vmatpush1.xpose.msra.mxu0 %v593
          %627 = vmatprep.subr.mxu0 0.0
          %628 = vmatpush1.xpose.msra.mxu0 %v590
          %629 = vmatprep.subr.mxu0 0.0
          %630 = vmatpush1.xpose.msra.mxu0 %v587
          %631 = vmatprep.subr.mxu0 0.0
          %632 = vmatpush1.xpose.msra.mxu0 %v584
          %633 = vmatprep.subr.mxu0 0.0
          %634 = vmatpush1.xpose.msra.mxu0 %v581
          %635 = vmatprep.subr.mxu0 0.0
          %636 = vmatpush1.xpose.msra.mxu0 %v578
          %637 = vmatprep.subr.mxu0 0.0
          %638 = vmatpush1.xpose.msra.mxu0 %v575
          %639 = vmatprep.subr.mxu0 0.0
          %640 = vmatpush1.xpose.msra.mxu0 %v572
          %641 = vmatprep.subr.mxu0 0.0
          %642 = vmatpush1.xpose.msra.mxu0 %v569
          %643 = vmatprep.subr.mxu0 0.0
          %644 = vmatpush1.xpose.msra.mxu0 %v566
          %645 = vmatprep.subr.mxu0 0.0
          %646 = vmatpush2.xpose.msra.mxu0 0.0
          %647 = vmatprep.subr.mxu0 0.0
          %648 = vmatpush2.xpose.msra.mxu0 0.0
          %649 = vmatprep.subr.mxu0 0.0
          %650 = vmatpush2.xpose.msra.mxu0 0.0
          %651 = vmatprep.subr.mxu0 0.0
          %652 = vmatpush2.xpose.msra.mxu0 0.0
          %653 = vmatprep.subr.mxu0 0.0
          %654 = vmatpush2.xpose.msra.mxu0 0.0
          %655 = vmatprep.subr.mxu0 0.0
          %656 = vmatpush2.xpose.msra.mxu0 0.0
          %657 = vmatprep.subr.mxu0 0.0
          %658 = vmatpush2.xpose.msra.mxu0 0.0
          %659 = vmatprep.subr.mxu0 0.0
          %660 = vmatpush2.xpose.msra.mxu0 0.0
          %661 = vmatprep.subr.mxu0 0.0
          %662 = vmatpush2.xpose.msra.mxu0 0.0
          %663 = vmatprep.subr.mxu0 0.0
          %664 = vmatpush2.xpose.msra.mxu0 0.0
          %665 = vmatprep.subr.mxu0 0.0
          %666 = vmatpush2.xpose.msra.mxu0 0.0
          %667 = vmatprep.subr.mxu0 0.0
          %668 = vmatpush2.xpose.msra.mxu0 0.0
          %669 = vmatprep.subr.mxu0 0.0
          %670 = vmatpush2.xpose.msra.mxu0 0.0
          %671 = vmatprep.subr.mxu0 0.0
          %672 = vmatpush2.xpose.msra.mxu0 0.0
          %673 = vmatprep.subr.mxu0 0.0
          %674 = vmatpush2.xpose.msra.mxu0 0.0
          %675 = vmatprep.subr.mxu0 0.0
          %676 = vmatpush2.xpose.msra.mxu0 0.0
          %677 = vmatprep.mubr.f32.mxu0 0.0
          %678 = vmatmul.mubr.f32.gmra.mxu0 %v518
          %v679 = vpop.f32.mrf.mxu0
          %v680 = vadd.f32 0.0, %v679
          %v681 = vpop.f32.mrf.mxu0
          %682 = vmatprep.mubr.f32.mxu0 0.0
          %683 = vmatmul.mubr.f32.gmra.mxu0 %v521
          %v684 = vpop.f32.mrf.mxu0
          %v685 = vadd.f32 0.0, %v684
          %v686 = vpop.f32.mrf.mxu0
          %687 = vmatprep.mubr.f32.mxu0 0.0
          %688 = vmatmul.mubr.f32.gmra.mxu0 %v524
          %v689 = vpop.f32.mrf.mxu0
          %v690 = vadd.f32 0.0, %v689
          %v691 = vpop.f32.mrf.mxu0
          %692 = vmatprep.mubr.f32.mxu0 0.0
          %693 = vmatmul.mubr.f32.gmra.mxu0 %v527
          %v694 = vpop.f32.mrf.mxu0
          %v695 = vadd.f32 0.0, %v694
          %v696 = vpop.f32.mrf.mxu0
          %697 = vmatprep.mubr.f32.mxu0 0.0
          %698 = vmatmul.mubr.f32.gmra.mxu0 %v530
          %v699 = vpop.f32.mrf.mxu0
          %v700 = vadd.f32 0.0, %v699
          %v701 = vpop.f32.mrf.mxu0
          %702 = vmatprep.mubr.f32.mxu0 0.0
          %703 = vmatmul.mubr.f32.gmra.mxu0 %v533
          %v704 = vpop.f32.mrf.mxu0
          %v705 = vadd.f32 0.0, %v704
          %v706 = vpop.f32.mrf.mxu0
          %707 = vmatprep.mubr.f32.mxu0 0.0
          %708 = vmatmul.mubr.f32.gmra.mxu0 %v536
          %v709 = vpop.f32.mrf.mxu0
          %v710 = vadd.f32 0.0, %v709
          %v711 = vpop.f32.mrf.mxu0
          %712 = vmatprep.mubr.f32.mxu0 0.0
          %713 = vmatmul.mubr.f32.gmra.mxu0 %v539
          %v714 = vpop.f32.mrf.mxu0
          %v715 = vadd.f32 0.0, %v714
          %v716 = vpop.f32.mrf.mxu0
          %717 = vmatprep.mubr.f32.mxu0 0.0
          %718 = vmatmul.mubr.f32.gmra.mxu0 %v542
          %v719 = vpop.f32.mrf.mxu0
          %v720 = vadd.f32 0.0, %v719
          %v721 = vpop.f32.mrf.mxu0
          %722 = vmatprep.mubr.f32.mxu0 0.0
          %723 = vmatmul.mubr.f32.gmra.mxu0 %v545
          %v724 = vpop.f32.mrf.mxu0
          %v725 = vadd.f32 0.0, %v724
          %v726 = vpop.f32.mrf.mxu0
          %727 = vmatprep.mubr.f32.mxu0 0.0
          %728 = vmatmul.mubr.f32.gmra.mxu0 %v548
          %v729 = vpop.f32.mrf.mxu0
          %v730 = vadd.f32 0.0, %v729
          %v731 = vpop.f32.mrf.mxu0
          %732 = vmatprep.mubr.f32.mxu0 0.0
          %733 = vmatmul.mubr.f32.gmra.mxu0 %v551
          %v734 = vpop.f32.mrf.mxu0
          %v735 = vadd.f32 0.0, %v734
          %v736 = vpop.f32.mrf.mxu0
          %737 = vmatprep.mubr.f32.mxu0 0.0
          %738 = vmatmul.mubr.f32.gmra.mxu0 %v554
          %v739 = vpop.f32.mrf.mxu0
          %v740 = vadd.f32 0.0, %v739
          %v741 = vpop.f32.mrf.mxu0
          %742 = vmatprep.mubr.f32.mxu0 0.0
          %743 = vmatmul.mubr.f32.gmra.mxu0 %v557
          %v744 = vpop.f32.mrf.mxu0
          %v745 = vadd.f32 0.0, %v744
          %v746 = vpop.f32.mrf.mxu0
          %747 = vmatprep.mubr.f32.mxu0 0.0
          %748 = vmatmul.mubr.f32.gmra.mxu0 %v560
          %v749 = vpop.f32.mrf.mxu0
          %v750 = vadd.f32 0.0, %v749
          %v751 = vpop.f32.mrf.mxu0
          %752 = vmatprep.mubr.f32.mxu0 0.0
          %753 = vmatmul.mubr.f32.gmra.mxu0 %v563
          %v754 = vpop.f32.mrf.mxu0
          %v755 = vadd.f32 0.0, %v754
          %v756 = vpop.f32.mrf.mxu0
          %757 = vdwg.mxu0
          %v758 = vmul.f32 %v680, 0.17677669
          %v759 = vmul.f32 %v685, 0.17677669
          %v760 = vmul.f32 %v690, 0.17677669
          %v761 = vmul.f32 %v695, 0.17677669
          %v762 = vmul.f32 %v700, 0.17677669
          %v763 = vmul.f32 %v705, 0.17677669
          %v764 = vmul.f32 %v710, 0.17677669
          %v765 = vmul.f32 %v715, 0.17677669
          %v766 = vmul.f32 %v720, 0.17677669
          %v767 = vmul.f32 %v725, 0.17677669
          %v768 = vmul.f32 %v730, 0.17677669
          %v769 = vmul.f32 %v735, 0.17677669
          %v770 = vmul.f32 %v740, 0.17677669
          %v771 = vmul.f32 %v745, 0.17677669
          %v772 = vmul.f32 %v750, 0.17677669
          %v773 = vmul.f32 %v755, 0.17677669
          %v774 = vlaneseq
          %v775 = vshrl.u32 %v774, 7
          %v776 = vadd.s32 %v775, 8
          %v777 = vadd.s32 %v775, 16
          %v778 = vadd.s32 %v775, 24
          %v779 = vadd.s32 %v775, 32
          %v780 = vadd.s32 %v775, 40
          %v781 = vadd.s32 %v775, 48
          %v782 = vadd.s32 %v775, 56
          %v783 = vadd.s32 %v775, 64
          %v784 = vadd.s32 %v775, 72
          %v785 = vadd.s32 %v775, 80
          %v786 = vadd.s32 %v775, 88
          %v787 = vadd.s32 %v775, 96
          %v788 = vadd.s32 %v775, 104
          %v789 = vadd.s32 %v775, 112
          %v790 = vadd.s32 %v775, 120
          %v791 = vstv %s477
          %v792 = vadd.s32 %v791, %v775
          %v793 = vadd.s32 %v791, %v776
          %v794 = vadd.s32 %v791, %v777
          %v795 = vadd.s32 %v791, %v778
          %v796 = vadd.s32 %v791, %v779
          %v797 = vadd.s32 %v791, %v780
          %v798 = vadd.s32 %v791, %v781
          %v799 = vadd.s32 %v791, %v782
          %v800 = vadd.s32 %v791, %v783
          %v801 = vadd.s32 %v791, %v784
          %v802 = vadd.s32 %v791, %v785
          %v803 = vadd.s32 %v791, %v786
          %v804 = vadd.s32 %v791, %v787
          %v805 = vadd.s32 %v791, %v788
          %v806 = vadd.s32 %v791, %v789
          %v807 = vadd.s32 %v791, %v790
          %v808 = vlaneseq
          %v809 = vand.u32 %v808, 127
          %v810 = vstv %s478
          %v811 = vadd.s32 %v810, %v809
          %vm812 = vcmp.ge.s32.totalorder %v792, %v811
          %vm813 = vcmp.ge.s32.totalorder %v793, %v811
          %vm814 = vcmp.ge.s32.totalorder %v794, %v811
          %vm815 = vcmp.ge.s32.totalorder %v795, %v811
          %vm816 = vcmp.ge.s32.totalorder %v796, %v811
          %vm817 = vcmp.ge.s32.totalorder %v797, %v811
          %vm818 = vcmp.ge.s32.totalorder %v798, %v811
          %vm819 = vcmp.ge.s32.totalorder %v799, %v811
          %vm820 = vcmp.ge.s32.totalorder %v800, %v811
          %vm821 = vcmp.ge.s32.totalorder %v801, %v811
          %vm822 = vcmp.ge.s32.totalorder %v802, %v811
          %vm823 = vcmp.ge.s32.totalorder %v803, %v811
          %vm824 = vcmp.ge.s32.totalorder %v804, %v811
          %vm825 = vcmp.ge.s32.totalorder %v805, %v811
          %vm826 = vcmp.ge.s32.totalorder %v806, %v811
          %vm827 = vcmp.ge.s32.totalorder %v807, %v811
          %v828 = vsel %vm812, %v758, -10000.0
          %v829 = vsel %vm813, %v759, -10000.0
          %v830 = vsel %vm814, %v760, -10000.0
          %v831 = vsel %vm815, %v761, -10000.0
          %v832 = vsel %vm816, %v762, -10000.0
          %v833 = vsel %vm817, %v763, -10000.0
          %v834 = vsel %vm818, %v764, -10000.0
          %v835 = vsel %vm819, %v765, -10000.0
          %v836 = vsel %vm820, %v766, -10000.0
          %v837 = vsel %vm821, %v767, -10000.0
          %v838 = vsel %vm822, %v768, -10000.0
          %v839 = vsel %vm823, %v769, -10000.0
          %v840 = vsel %vm824, %v770, -10000.0
          %v841 = vsel %vm825, %v771, -10000.0
          %v842 = vsel %vm826, %v772, -10000.0
          %v843 = vsel %vm827, %v773, -10000.0
          %v844 = vld [vmem:[#allocation2] sm:$0xff]
          %v845 = vld [vmem:[#allocation2 + $0x8] sm:$0xff]
          %v846 = vld [vmem:[#allocation2 + $0x10] sm:$0xff]
          %v847 = vld [vmem:[#allocation2 + $0x18] sm:$0xff]
          %v848 = vld [vmem:[#allocation2 + $0x20] sm:$0xff]
          %v849 = vld [vmem:[#allocation2 + $0x28] sm:$0xff]
          %v850 = vld [vmem:[#allocation2 + $0x30] sm:$0xff]
          %v851 = vld [vmem:[#allocation2 + $0x38] sm:$0xff]
          %v852 = vld [vmem:[#allocation2 + $0x40] sm:$0xff]
          %v853 = vld [vmem:[#allocation2 + $0x48] sm:$0xff]
          %v854 = vld [vmem:[#allocation2 + $0x50] sm:$0xff]
          %v855 = vld [vmem:[#allocation2 + $0x58] sm:$0xff]
          %v856 = vld [vmem:[#allocation2 + $0x60] sm:$0xff]
          %v857 = vld [vmem:[#allocation2 + $0x68] sm:$0xff]
          %v858 = vld [vmem:[#allocation2 + $0x70] sm:$0xff]
          %v859 = vld [vmem:[#allocation2 + $0x78] sm:$0xff]
          %860 = vmax.xlane.f32.xlu0 %v828
          %v861 = vpop.xlane.xlu0 %860
          %862 = vmax.xlane.f32.xlu0 %v829
          %v863 = vpop.xlane.xlu0 %862
          %864 = vmax.xlane.f32.xlu0 %v830
          %v865 = vpop.xlane.xlu0 %864
          %866 = vmax.xlane.f32.xlu0 %v831
          %v867 = vpop.xlane.xlu0 %866
          %868 = vmax.xlane.f32.xlu0 %v832
          %v869 = vpop.xlane.xlu0 %868
          %870 = vmax.xlane.f32.xlu0 %v833
          %v871 = vpop.xlane.xlu0 %870
          %872 = vmax.xlane.f32.xlu0 %v834
          %v873 = vpop.xlane.xlu0 %872
          %874 = vmax.xlane.f32.xlu0 %v835
          %v875 = vpop.xlane.xlu0 %874
          %876 = vmax.xlane.f32.xlu0 %v836
          %v877 = vpop.xlane.xlu0 %876
          %878 = vmax.xlane.f32.xlu0 %v837
          %v879 = vpop.xlane.xlu0 %878
          %880 = vmax.xlane.f32.xlu0 %v838
          %v881 = vpop.xlane.xlu0 %880
          %882 = vmax.xlane.f32.xlu0 %v839
          %v883 = vpop.xlane.xlu0 %882
          %884 = vmax.xlane.f32.xlu0 %v840
          %v885 = vpop.xlane.xlu0 %884
          %886 = vmax.xlane.f32.xlu0 %v841
          %v887 = vpop.xlane.xlu0 %886
          %888 = vmax.xlane.f32.xlu0 %v842
          %v889 = vpop.xlane.xlu0 %888
          %890 = vmax.xlane.f32.xlu0 %v843
          %v891 = vpop.xlane.xlu0 %890
          %v892 = vmax.f32 %v844, %v861
          %v893 = vmax.f32 %v845, %v863
          %v894 = vmax.f32 %v846, %v865
          %v895 = vmax.f32 %v847, %v867
          %v896 = vmax.f32 %v848, %v869
          %v897 = vmax.f32 %v849, %v871
          %v898 = vmax.f32 %v850, %v873
          %v899 = vmax.f32 %v851, %v875
          %v900 = vmax.f32 %v852, %v877
          %v901 = vmax.f32 %v853, %v879
          %v902 = vmax.f32 %v854, %v881
          %v903 = vmax.f32 %v855, %v883
          %v904 = vmax.f32 %v856, %v885
          %v905 = vmax.f32 %v857, %v887
          %v906 = vmax.f32 %v858, %v889
          %v907 = vmax.f32 %v859, %v891
          %v908 = vsub.f32 %v844, %v892
          %v909 = vsub.f32 %v845, %v893
          %v910 = vsub.f32 %v846, %v894
          %v911 = vsub.f32 %v847, %v895
          %v912 = vsub.f32 %v848, %v896
          %v913 = vsub.f32 %v849, %v897
          %v914 = vsub.f32 %v850, %v898
          %v915 = vsub.f32 %v851, %v899
          %v916 = vsub.f32 %v852, %v900
          %v917 = vsub.f32 %v853, %v901
          %v918 = vsub.f32 %v854, %v902
          %v919 = vsub.f32 %v855, %v903
          %v920 = vsub.f32 %v856, %v904
          %v921 = vsub.f32 %v857, %v905
          %v922 = vsub.f32 %v858, %v906
          %v923 = vsub.f32 %v859, %v907
          %v924 = vmul.f32 %v908, 1.442695
          %v925 = vpow.pop %v924
          %v926 = vmul.f32 %v909, 1.442695
          %v927 = vpow.pop %v926
          %v928 = vmul.f32 %v910, 1.442695
          %v929 = vpow.pop %v928
          %v930 = vmul.f32 %v911, 1.442695
          %v931 = vpow.pop %v930
          %v932 = vmul.f32 %v912, 1.442695
          %v933 = vpow.pop %v932
          %v934 = vmul.f32 %v913, 1.442695
          %v935 = vpow.pop %v934
          %v936 = vmul.f32 %v914, 1.442695
          %v937 = vpow.pop %v936
          %v938 = vmul.f32 %v915, 1.442695
          %v939 = vpow.pop %v938
          %v940 = vmul.f32 %v916, 1.442695
          %v941 = vpow.pop %v940
          %v942 = vmul.f32 %v917, 1.442695
          %v943 = vpow.pop %v942
          %v944 = vmul.f32 %v918, 1.442695
          %v945 = vpow.pop %v944
          %v946 = vmul.f32 %v919, 1.442695
          %v947 = vpow.pop %v946
          %v948 = vmul.f32 %v920, 1.442695
          %v949 = vpow.pop %v948
          %v950 = vmul.f32 %v921, 1.442695
          %v951 = vpow.pop %v950
          %v952 = vmul.f32 %v922, 1.442695
          %v953 = vpow.pop %v952
          %v954 = vmul.f32 %v923, 1.442695
          %v955 = vpow.pop %v954
          %957 = vset.pattern.permute.xlu0 0
          %958 = vperm.xlu0 %957, %v892
          %v959 = vpop.permute.xlu0 %958
          %962 = vset.pattern.permute.xlu0 0
          %963 = vperm.xlu0 %962, %v893
          %v964 = vpop.permute.xlu0 %963
          %967 = vset.pattern.permute.xlu0 0
          %968 = vperm.xlu0 %967, %v894
          %v969 = vpop.permute.xlu0 %968
          %972 = vset.pattern.permute.xlu0 0
          %973 = vperm.xlu0 %972, %v895
          %v974 = vpop.permute.xlu0 %973
          %977 = vset.pattern.permute.xlu0 0
          %978 = vperm.xlu0 %977, %v896
          %v979 = vpop.permute.xlu0 %978
          %982 = vset.pattern.permute.xlu0 0
          %983 = vperm.xlu0 %982, %v897
          %v984 = vpop.permute.xlu0 %983
          %987 = vset.pattern.permute.xlu0 0
          %988 = vperm.xlu0 %987, %v898
          %v989 = vpop.permute.xlu0 %988
          %992 = vset.pattern.permute.xlu0 0
          %993 = vperm.xlu0 %992, %v899
          %v994 = vpop.permute.xlu0 %993
          %997 = vset.pattern.permute.xlu0 0
          %998 = vperm.xlu0 %997, %v900
          %v999 = vpop.permute.xlu0 %998
          %1002 = vset.pattern.permute.xlu0 0
          %1003 = vperm.xlu0 %1002, %v901
          %v1004 = vpop.permute.xlu0 %1003
          %1007 = vset.pattern.permute.xlu0 0
          %1008 = vperm.xlu0 %1007, %v902
          %v1009 = vpop.permute.xlu0 %1008
          %1012 = vset.pattern.permute.xlu0 0
          %1013 = vperm.xlu0 %1012, %v903
          %v1014 = vpop.permute.xlu0 %1013
          %1017 = vset.pattern.permute.xlu0 0
          %1018 = vperm.xlu0 %1017, %v904
          %v1019 = vpop.permute.xlu0 %1018
          %1022 = vset.pattern.permute.xlu0 0
          %1023 = vperm.xlu0 %1022, %v905
          %v1024 = vpop.permute.xlu0 %1023
          %1027 = vset.pattern.permute.xlu0 0
          %1028 = vperm.xlu0 %1027, %v906
          %v1029 = vpop.permute.xlu0 %1028
          %1032 = vset.pattern.permute.xlu0 0
          %1033 = vperm.xlu0 %1032, %v907
          %v1034 = vpop.permute.xlu0 %1033
          %v1036 = vsub.f32 %v828, %v959
          %v1037 = vsub.f32 %v829, %v964
          %v1038 = vsub.f32 %v830, %v969
          %v1039 = vsub.f32 %v831, %v974
          %v1040 = vsub.f32 %v832, %v979
          %v1041 = vsub.f32 %v833, %v984
          %v1042 = vsub.f32 %v834, %v989
          %v1043 = vsub.f32 %v835, %v994
          %v1044 = vsub.f32 %v836, %v999
          %v1045 = vsub.f32 %v837, %v1004
          %v1046 = vsub.f32 %v838, %v1009
          %v1047 = vsub.f32 %v839, %v1014
          %v1048 = vsub.f32 %v840, %v1019
          %v1049 = vsub.f32 %v841, %v1024
          %v1050 = vsub.f32 %v842, %v1029
          %v1051 = vsub.f32 %v843, %v1034
          %v1052 = vmul.f32 %v1036, 1.442695
          %v1053 = vpow.pop %v1052
          %v1054 = vmul.f32 %v1037, 1.442695
          %v1055 = vpow.pop %v1054
          %v1056 = vmul.f32 %v1038, 1.442695
          %v1057 = vpow.pop %v1056
          %v1058 = vmul.f32 %v1039, 1.442695
          %v1059 = vpow.pop %v1058
          %v1060 = vmul.f32 %v1040, 1.442695
          %v1061 = vpow.pop %v1060
          %v1062 = vmul.f32 %v1041, 1.442695
          %v1063 = vpow.pop %v1062
          %v1064 = vmul.f32 %v1042, 1.442695
          %v1065 = vpow.pop %v1064
          %v1066 = vmul.f32 %v1043, 1.442695
          %v1067 = vpow.pop %v1066
          %v1068 = vmul.f32 %v1044, 1.442695
          %v1069 = vpow.pop %v1068
          %v1070 = vmul.f32 %v1045, 1.442695
          %v1071 = vpow.pop %v1070
          %v1072 = vmul.f32 %v1046, 1.442695
          %v1073 = vpow.pop %v1072
          %v1074 = vmul.f32 %v1047, 1.442695
          %v1075 = vpow.pop %v1074
          %v1076 = vmul.f32 %v1048, 1.442695
          %v1077 = vpow.pop %v1076
          %v1078 = vmul.f32 %v1049, 1.442695
          %v1079 = vpow.pop %v1078
          %v1080 = vmul.f32 %v1050, 1.442695
          %v1081 = vpow.pop %v1080
          %v1082 = vmul.f32 %v1051, 1.442695
          %v1083 = vpow.pop %v1082
          %v1084 = vld [vmem:[#allocation3] sm:$0xff]
          %v1085 = vld [vmem:[#allocation3 + $0x8] sm:$0xff]
          %v1086 = vld [vmem:[#allocation3 + $0x10] sm:$0xff]
          %v1087 = vld [vmem:[#allocation3 + $0x18] sm:$0xff]
          %v1088 = vld [vmem:[#allocation3 + $0x20] sm:$0xff]
          %v1089 = vld [vmem:[#allocation3 + $0x28] sm:$0xff]
          %v1090 = vld [vmem:[#allocation3 + $0x30] sm:$0xff]
          %v1091 = vld [vmem:[#allocation3 + $0x38] sm:$0xff]
          %v1092 = vld [vmem:[#allocation3 + $0x40] sm:$0xff]
          %v1093 = vld [vmem:[#allocation3 + $0x48] sm:$0xff]
          %v1094 = vld [vmem:[#allocation3 + $0x50] sm:$0xff]
          %v1095 = vld [vmem:[#allocation3 + $0x58] sm:$0xff]
          %v1096 = vld [vmem:[#allocation3 + $0x60] sm:$0xff]
          %v1097 = vld [vmem:[#allocation3 + $0x68] sm:$0xff]
          %v1098 = vld [vmem:[#allocation3 + $0x70] sm:$0xff]
          %v1099 = vld [vmem:[#allocation3 + $0x78] sm:$0xff]
          %v1100 = vmul.f32 %v925, %v1084
          %v1101 = vmul.f32 %v927, %v1085
          %v1102 = vmul.f32 %v929, %v1086
          %v1103 = vmul.f32 %v931, %v1087
          %v1104 = vmul.f32 %v933, %v1088
          %v1105 = vmul.f32 %v935, %v1089
          %v1106 = vmul.f32 %v937, %v1090
          %v1107 = vmul.f32 %v939, %v1091
          %v1108 = vmul.f32 %v941, %v1092
          %v1109 = vmul.f32 %v943, %v1093
          %v1110 = vmul.f32 %v945, %v1094
          %v1111 = vmul.f32 %v947, %v1095
          %v1112 = vmul.f32 %v949, %v1096
          %v1113 = vmul.f32 %v951, %v1097
          %v1114 = vmul.f32 %v953, %v1098
          %v1115 = vmul.f32 %v955, %v1099
          %1116 = vadd.xlane.f32.xlu0 %v1053
          %v1117 = vpop.xlane.xlu0 %1116
          %1118 = vadd.xlane.f32.xlu0 %v1055
          %v1119 = vpop.xlane.xlu0 %1118
          %1120 = vadd.xlane.f32.xlu0 %v1057
          %v1121 = vpop.xlane.xlu0 %1120
          %1122 = vadd.xlane.f32.xlu0 %v1059
          %v1123 = vpop.xlane.xlu0 %1122
          %1124 = vadd.xlane.f32.xlu0 %v1061
          %v1125 = vpop.xlane.xlu0 %1124
          %1126 = vadd.xlane.f32.xlu0 %v1063
          %v1127 = vpop.xlane.xlu0 %1126
          %1128 = vadd.xlane.f32.xlu0 %v1065
          %v1129 = vpop.xlane.xlu0 %1128
          %1130 = vadd.xlane.f32.xlu0 %v1067
          %v1131 = vpop.xlane.xlu0 %1130
          %1132 = vadd.xlane.f32.xlu0 %v1069
          %v1133 = vpop.xlane.xlu0 %1132
          %1134 = vadd.xlane.f32.xlu0 %v1071
          %v1135 = vpop.xlane.xlu0 %1134
          %1136 = vadd.xlane.f32.xlu0 %v1073
          %v1137 = vpop.xlane.xlu0 %1136
          %1138 = vadd.xlane.f32.xlu0 %v1075
          %v1139 = vpop.xlane.xlu0 %1138
          %1140 = vadd.xlane.f32.xlu0 %v1077
          %v1141 = vpop.xlane.xlu0 %1140
          %1142 = vadd.xlane.f32.xlu0 %v1079
          %v1143 = vpop.xlane.xlu0 %1142
          %1144 = vadd.xlane.f32.xlu0 %v1081
          %v1145 = vpop.xlane.xlu0 %1144
          %1146 = vadd.xlane.f32.xlu0 %v1083
          %v1147 = vpop.xlane.xlu0 %1146
          %v1148 = vadd.f32 %v1100, %v1117
          %v1149 = vadd.f32 %v1101, %v1119
          %v1150 = vadd.f32 %v1102, %v1121
          %v1151 = vadd.f32 %v1103, %v1123
          %v1152 = vadd.f32 %v1104, %v1125
          %v1153 = vadd.f32 %v1105, %v1127
          %v1154 = vadd.f32 %v1106, %v1129
          %v1155 = vadd.f32 %v1107, %v1131
          %v1156 = vadd.f32 %v1108, %v1133
          %v1157 = vadd.f32 %v1109, %v1135
          %v1158 = vadd.f32 %v1110, %v1137
          %v1159 = vadd.f32 %v1111, %v1139
          %v1160 = vadd.f32 %v1112, %v1141
          %v1161 = vadd.f32 %v1113, %v1143
          %v1162 = vadd.f32 %v1114, %v1145
          %v1163 = vadd.f32 %v1115, %v1147
          %vm1164 = vcmask 7168
          %1165 = vst.msk [vmem:[#allocation3] sm:$0xff] %vm1164, %v1148
          %1166 = vst.msk [vmem:[#allocation3 + $0x8] sm:$0xff] %vm1164, %v1149
          %1167 = vst.msk [vmem:[#allocation3 + $0x10] sm:$0xff] %vm1164, %v1150
          %1168 = vst.msk [vmem:[#allocation3 + $0x18] sm:$0xff] %vm1164, %v1151
          %1169 = vst.msk [vmem:[#allocation3 + $0x20] sm:$0xff] %vm1164, %v1152
          %1170 = vst.msk [vmem:[#allocation3 + $0x28] sm:$0xff] %vm1164, %v1153
          %1171 = vst.msk [vmem:[#allocation3 + $0x30] sm:$0xff] %vm1164, %v1154
          %1172 = vst.msk [vmem:[#allocation3 + $0x38] sm:$0xff] %vm1164, %v1155
          %1173 = vst.msk [vmem:[#allocation3 + $0x40] sm:$0xff] %vm1164, %v1156
          %1174 = vst.msk [vmem:[#allocation3 + $0x48] sm:$0xff] %vm1164, %v1157
          %1175 = vst.msk [vmem:[#allocation3 + $0x50] sm:$0xff] %vm1164, %v1158
          %1176 = vst.msk [vmem:[#allocation3 + $0x58] sm:$0xff] %vm1164, %v1159
          %1177 = vst.msk [vmem:[#allocation3 + $0x60] sm:$0xff] %vm1164, %v1160
          %1178 = vst.msk [vmem:[#allocation3 + $0x68] sm:$0xff] %vm1164, %v1161
          %1179 = vst.msk [vmem:[#allocation3 + $0x70] sm:$0xff] %vm1164, %v1162
          %1180 = vst.msk [vmem:[#allocation3 + $0x78] sm:$0xff] %vm1164, %v1163
          %v1181 = vld [vmem:[#allocation4] sm:$0xff]
          %v1182 = vld [vmem:[#allocation4 + $0x8] sm:$0xff]
          %v1183 = vld [vmem:[#allocation4 + $0x10] sm:$0xff]
          %v1184 = vld [vmem:[#allocation4 + $0x18] sm:$0xff]
          %v1185 = vld [vmem:[#allocation4 + $0x20] sm:$0xff]
          %v1186 = vld [vmem:[#allocation4 + $0x28] sm:$0xff]
          %v1187 = vld [vmem:[#allocation4 + $0x30] sm:$0xff]
          %v1188 = vld [vmem:[#allocation4 + $0x38] sm:$0xff]
          %v1189 = vld [vmem:[#allocation4 + $0x40] sm:$0xff]
          %v1190 = vld [vmem:[#allocation4 + $0x48] sm:$0xff]
          %v1191 = vld [vmem:[#allocation4 + $0x50] sm:$0xff]
          %v1192 = vld [vmem:[#allocation4 + $0x58] sm:$0xff]
          %v1193 = vld [vmem:[#allocation4 + $0x60] sm:$0xff]
          %v1194 = vld [vmem:[#allocation4 + $0x68] sm:$0xff]
          %v1195 = vld [vmem:[#allocation4 + $0x70] sm:$0xff]
          %v1196 = vld [vmem:[#allocation4 + $0x78] sm:$0xff]
          %1198 = vset.pattern.permute.xlu0 0
          %1199 = vperm.xlu0 %1198, %v925
          %v1200 = vpop.permute.xlu0 %1199
          %1203 = vset.pattern.permute.xlu0 0
          %1204 = vperm.xlu0 %1203, %v927
          %v1205 = vpop.permute.xlu0 %1204
          %1208 = vset.pattern.permute.xlu0 0
          %1209 = vperm.xlu0 %1208, %v929
          %v1210 = vpop.permute.xlu0 %1209
          %1213 = vset.pattern.permute.xlu0 0
          %1214 = vperm.xlu0 %1213, %v931
          %v1215 = vpop.permute.xlu0 %1214
          %1218 = vset.pattern.permute.xlu0 0
          %1219 = vperm.xlu0 %1218, %v933
          %v1220 = vpop.permute.xlu0 %1219
          %1223 = vset.pattern.permute.xlu0 0
          %1224 = vperm.xlu0 %1223, %v935
          %v1225 = vpop.permute.xlu0 %1224
          %1228 = vset.pattern.permute.xlu0 0
          %1229 = vperm.xlu0 %1228, %v937
          %v1230 = vpop.permute.xlu0 %1229
          %1233 = vset.pattern.permute.xlu0 0
          %1234 = vperm.xlu0 %1233, %v939
          %v1235 = vpop.permute.xlu0 %1234
          %1238 = vset.pattern.permute.xlu0 0
          %1239 = vperm.xlu0 %1238, %v941
          %v1240 = vpop.permute.xlu0 %1239
          %1243 = vset.pattern.permute.xlu0 0
          %1244 = vperm.xlu0 %1243, %v943
          %v1245 = vpop.permute.xlu0 %1244
          %1248 = vset.pattern.permute.xlu0 0
          %1249 = vperm.xlu0 %1248, %v945
          %v1250 = vpop.permute.xlu0 %1249
          %1253 = vset.pattern.permute.xlu0 0
          %1254 = vperm.xlu0 %1253, %v947
          %v1255 = vpop.permute.xlu0 %1254
          %1258 = vset.pattern.permute.xlu0 0
          %1259 = vperm.xlu0 %1258, %v949
          %v1260 = vpop.permute.xlu0 %1259
          %1263 = vset.pattern.permute.xlu0 0
          %1264 = vperm.xlu0 %1263, %v951
          %v1265 = vpop.permute.xlu0 %1264
          %1268 = vset.pattern.permute.xlu0 0
          %1269 = vperm.xlu0 %1268, %v953
          %v1270 = vpop.permute.xlu0 %1269
          %1273 = vset.pattern.permute.xlu0 0
          %1274 = vperm.xlu0 %1273, %v955
          %v1275 = vpop.permute.xlu0 %1274
          %v1277 = vmul.f32 %v1200, %v1181
          %v1278 = vmul.f32 %v1205, %v1182
          %v1279 = vmul.f32 %v1210, %v1183
          %v1280 = vmul.f32 %v1215, %v1184
          %v1281 = vmul.f32 %v1220, %v1185
          %v1282 = vmul.f32 %v1225, %v1186
          %v1283 = vmul.f32 %v1230, %v1187
          %v1284 = vmul.f32 %v1235, %v1188
          %v1285 = vmul.f32 %v1240, %v1189
          %v1286 = vmul.f32 %v1245, %v1190
          %v1287 = vmul.f32 %v1250, %v1191
          %v1288 = vmul.f32 %v1255, %v1192
          %v1289 = vmul.f32 %v1260, %v1193
          %v1290 = vmul.f32 %v1265, %v1194
          %v1291 = vmul.f32 %v1270, %v1195
          %v1292 = vmul.f32 %v1275, %v1196
          %v1293 = vld [vmem:[%s394] sm:$0xff]
          %v1294 = vld [vmem:[%s394 + $0x8] sm:$0xff]
          %v1295 = vld [vmem:[%s394 + $0x10] sm:$0xff]
          %v1296 = vld [vmem:[%s394 + $0x18] sm:$0xff]
          %v1297 = vld [vmem:[%s394 + $0x20] sm:$0xff]
          %v1298 = vld [vmem:[%s394 + $0x28] sm:$0xff]
          %v1299 = vld [vmem:[%s394 + $0x30] sm:$0xff]
          %v1300 = vld [vmem:[%s394 + $0x38] sm:$0xff]
          %v1301 = vld [vmem:[%s394 + $0x40] sm:$0xff]
          %v1302 = vld [vmem:[%s394 + $0x48] sm:$0xff]
          %v1303 = vld [vmem:[%s394 + $0x50] sm:$0xff]
          %v1304 = vld [vmem:[%s394 + $0x58] sm:$0xff]
          %v1305 = vld [vmem:[%s394 + $0x60] sm:$0xff]
          %v1306 = vld [vmem:[%s394 + $0x68] sm:$0xff]
          %v1307 = vld [vmem:[%s394 + $0x70] sm:$0xff]
          %v1308 = vld [vmem:[%s394 + $0x78] sm:$0xff]
          %1309 = vmatprep.subr.mxu0 0.0
          %1310 = vmatpush1.msra.mxu0 %v1308
          %1311 = vmatprep.subr.mxu0 0.0
          %1312 = vmatpush1.msra.mxu0 %v1307
          %1313 = vmatprep.subr.mxu0 0.0
          %1314 = vmatpush1.msra.mxu0 %v1306
          %1315 = vmatprep.subr.mxu0 0.0
          %1316 = vmatpush1.msra.mxu0 %v1305
          %1317 = vmatprep.subr.mxu0 0.0
          %1318 = vmatpush1.msra.mxu0 %v1304
          %1319 = vmatprep.subr.mxu0 0.0
          %1320 = vmatpush1.msra.mxu0 %v1303
          %1321 = vmatprep.subr.mxu0 0.0
          %1322 = vmatpush1.msra.mxu0 %v1302
          %1323 = vmatprep.subr.mxu0 0.0
          %1324 = vmatpush1.msra.mxu0 %v1301
          %1325 = vmatprep.subr.mxu0 0.0
          %1326 = vmatpush1.msra.mxu0 %v1300
          %1327 = vmatprep.subr.mxu0 0.0
          %1328 = vmatpush1.msra.mxu0 %v1299
          %1329 = vmatprep.subr.mxu0 0.0
          %1330 = vmatpush1.msra.mxu0 %v1298
          %1331 = vmatprep.subr.mxu0 0.0
          %1332 = vmatpush1.msra.mxu0 %v1297
          %1333 = vmatprep.subr.mxu0 0.0
          %1334 = vmatpush1.msra.mxu0 %v1296
          %1335 = vmatprep.subr.mxu0 0.0
          %1336 = vmatpush1.msra.mxu0 %v1295
          %1337 = vmatprep.subr.mxu0 0.0
          %1338 = vmatpush1.msra.mxu0 %v1294
          %1339 = vmatprep.subr.mxu0 0.0
          %1340 = vmatpush1.msra.mxu0 %v1293
          %1341 = vmatprep.subr.mxu0 0.0
          %1342 = vmatpush2.msra.mxu0 0.0
          %1343 = vmatprep.subr.mxu0 0.0
          %1344 = vmatpush2.msra.mxu0 0.0
          %1345 = vmatprep.subr.mxu0 0.0
          %1346 = vmatpush2.msra.mxu0 0.0
          %1347 = vmatprep.subr.mxu0 0.0
          %1348 = vmatpush2.msra.mxu0 0.0
          %1349 = vmatprep.subr.mxu0 0.0
          %1350 = vmatpush2.msra.mxu0 0.0
          %1351 = vmatprep.subr.mxu0 0.0
          %1352 = vmatpush2.msra.mxu0 0.0
          %1353 = vmatprep.subr.mxu0 0.0
          %1354 = vmatpush2.msra.mxu0 0.0
          %1355 = vmatprep.subr.mxu0 0.0
          %1356 = vmatpush2.msra.mxu0 0.0
          %1357 = vmatprep.subr.mxu0 0.0
          %1358 = vmatpush2.msra.mxu0 0.0
          %1359 = vmatprep.subr.mxu0 0.0
          %1360 = vmatpush2.msra.mxu0 0.0
          %1361 = vmatprep.subr.mxu0 0.0
          %1362 = vmatpush2.msra.mxu0 0.0
          %1363 = vmatprep.subr.mxu0 0.0
          %1364 = vmatpush2.msra.mxu0 0.0
          %1365 = vmatprep.subr.mxu0 0.0
          %1366 = vmatpush2.msra.mxu0 0.0
          %1367 = vmatprep.subr.mxu0 0.0
          %1368 = vmatpush2.msra.mxu0 0.0
          %1369 = vmatprep.subr.mxu0 0.0
          %1370 = vmatpush2.msra.mxu0 0.0
          %1371 = vmatprep.subr.mxu0 0.0
          %1372 = vmatpush2.msra.mxu0 0.0
          %1373 = vmatprep.mubr.f32.mxu0 0.0
          %1374 = vmatmul.mubr.f32.gmra.mxu0 %v1053
          %v1375 = vpop.f32.mrf.mxu0
          %v1376 = vadd.f32 0.0, %v1375
          %v1377 = vpop.f32.mrf.mxu0
          %1378 = vmatprep.mubr.f32.mxu0 0.0
          %1379 = vmatmul.mubr.f32.gmra.mxu0 %v1055
          %v1380 = vpop.f32.mrf.mxu0
          %v1381 = vadd.f32 0.0, %v1380
          %v1382 = vpop.f32.mrf.mxu0
          %1383 = vmatprep.mubr.f32.mxu0 0.0
          %1384 = vmatmul.mubr.f32.gmra.mxu0 %v1057
          %v1385 = vpop.f32.mrf.mxu0
          %v1386 = vadd.f32 0.0, %v1385
          %v1387 = vpop.f32.mrf.mxu0
          %1388 = vmatprep.mubr.f32.mxu0 0.0
          %1389 = vmatmul.mubr.f32.gmra.mxu0 %v1059
          %v1390 = vpop.f32.mrf.mxu0
          %v1391 = vadd.f32 0.0, %v1390
          %v1392 = vpop.f32.mrf.mxu0
          %1393 = vmatprep.mubr.f32.mxu0 0.0
          %1394 = vmatmul.mubr.f32.gmra.mxu0 %v1061
          %v1395 = vpop.f32.mrf.mxu0
          %v1396 = vadd.f32 0.0, %v1395
          %v1397 = vpop.f32.mrf.mxu0
          %1398 = vmatprep.mubr.f32.mxu0 0.0
          %1399 = vmatmul.mubr.f32.gmra.mxu0 %v1063
          %v1400 = vpop.f32.mrf.mxu0
          %v1401 = vadd.f32 0.0, %v1400
          %v1402 = vpop.f32.mrf.mxu0
          %1403 = vmatprep.mubr.f32.mxu0 0.0
          %1404 = vmatmul.mubr.f32.gmra.mxu0 %v1065
          %v1405 = vpop.f32.mrf.mxu0
          %v1406 = vadd.f32 0.0, %v1405
          %v1407 = vpop.f32.mrf.mxu0
          %1408 = vmatprep.mubr.f32.mxu0 0.0
          %1409 = vmatmul.mubr.f32.gmra.mxu0 %v1067
          %v1410 = vpop.f32.mrf.mxu0
          %v1411 = vadd.f32 0.0, %v1410
          %v1412 = vpop.f32.mrf.mxu0
          %1413 = vmatprep.mubr.f32.mxu0 0.0
          %1414 = vmatmul.mubr.f32.gmra.mxu0 %v1069
          %v1415 = vpop.f32.mrf.mxu0
          %v1416 = vadd.f32 0.0, %v1415
          %v1417 = vpop.f32.mrf.mxu0
          %1418 = vmatprep.mubr.f32.mxu0 0.0
          %1419 = vmatmul.mubr.f32.gmra.mxu0 %v1071
          %v1420 = vpop.f32.mrf.mxu0
          %v1421 = vadd.f32 0.0, %v1420
          %v1422 = vpop.f32.mrf.mxu0
          %1423 = vmatprep.mubr.f32.mxu0 0.0
          %1424 = vmatmul.mubr.f32.gmra.mxu0 %v1073
          %v1425 = vpop.f32.mrf.mxu0
          %v1426 = vadd.f32 0.0, %v1425
          %v1427 = vpop.f32.mrf.mxu0
          %1428 = vmatprep.mubr.f32.mxu0 0.0
          %1429 = vmatmul.mubr.f32.gmra.mxu0 %v1075
          %v1430 = vpop.f32.mrf.mxu0
          %v1431 = vadd.f32 0.0, %v1430
          %v1432 = vpop.f32.mrf.mxu0
          %1433 = vmatprep.mubr.f32.mxu0 0.0
          %1434 = vmatmul.mubr.f32.gmra.mxu0 %v1077
          %v1435 = vpop.f32.mrf.mxu0
          %v1436 = vadd.f32 0.0, %v1435
          %v1437 = vpop.f32.mrf.mxu0
          %1438 = vmatprep.mubr.f32.mxu0 0.0
          %1439 = vmatmul.mubr.f32.gmra.mxu0 %v1079
          %v1440 = vpop.f32.mrf.mxu0
          %v1441 = vadd.f32 0.0, %v1440
          %v1442 = vpop.f32.mrf.mxu0
          %1443 = vmatprep.mubr.f32.mxu0 0.0
          %1444 = vmatmul.mubr.f32.gmra.mxu0 %v1081
          %v1445 = vpop.f32.mrf.mxu0
          %v1446 = vadd.f32 0.0, %v1445
          %v1447 = vpop.f32.mrf.mxu0
          %1448 = vmatprep.mubr.f32.mxu0 0.0
          %1449 = vmatmul.mubr.f32.gmra.mxu0 %v1083
          %v1450 = vpop.f32.mrf.mxu0
          %v1451 = vadd.f32 0.0, %v1450
          %v1452 = vpop.f32.mrf.mxu0
          %1453 = vdwg.mxu0
          %v1454 = vadd.f32 %v1277, %v1376
          %v1455 = vadd.f32 %v1278, %v1381
          %v1456 = vadd.f32 %v1279, %v1386
          %v1457 = vadd.f32 %v1280, %v1391
          %v1458 = vadd.f32 %v1281, %v1396
          %v1459 = vadd.f32 %v1282, %v1401
          %v1460 = vadd.f32 %v1283, %v1406
          %v1461 = vadd.f32 %v1284, %v1411
          %v1462 = vadd.f32 %v1285, %v1416
          %v1463 = vadd.f32 %v1286, %v1421
          %v1464 = vadd.f32 %v1287, %v1426
          %v1465 = vadd.f32 %v1288, %v1431
          %v1466 = vadd.f32 %v1289, %v1436
          %v1467 = vadd.f32 %v1290, %v1441
          %v1468 = vadd.f32 %v1291, %v1446
          %v1469 = vadd.f32 %v1292, %v1451
          %1470 = vst.msk [vmem:[#allocation4] sm:$0xff] %vm516, %v1454
          %1471 = vst.msk [vmem:[#allocation4 + $0x8] sm:$0xff] %vm516, %v1455
          %1472 = vst.msk [vmem:[#allocation4 + $0x10] sm:$0xff] %vm516, %v1456
          %1473 = vst.msk [vmem:[#allocation4 + $0x18] sm:$0xff] %vm516, %v1457
          %1474 = vst.msk [vmem:[#allocation4 + $0x20] sm:$0xff] %vm516, %v1458
          %1475 = vst.msk [vmem:[#allocation4 + $0x28] sm:$0xff] %vm516, %v1459
          %1476 = vst.msk [vmem:[#allocation4 + $0x30] sm:$0xff] %vm516, %v1460
          %1477 = vst.msk [vmem:[#allocation4 + $0x38] sm:$0xff] %vm516, %v1461
          %1478 = vst.msk [vmem:[#allocation4 + $0x40] sm:$0xff] %vm516, %v1462
          %1479 = vst.msk [vmem:[#allocation4 + $0x48] sm:$0xff] %vm516, %v1463
          %1480 = vst.msk [vmem:[#allocation4 + $0x50] sm:$0xff] %vm516, %v1464
          %1481 = vst.msk [vmem:[#allocation4 + $0x58] sm:$0xff] %vm516, %v1465
          %1482 = vst.msk [vmem:[#allocation4 + $0x60] sm:$0xff] %vm516, %v1466
          %1483 = vst.msk [vmem:[#allocation4 + $0x68] sm:$0xff] %vm516, %v1467
          %1484 = vst.msk [vmem:[#allocation4 + $0x70] sm:$0xff] %vm516, %v1468
          %1485 = vst.msk [vmem:[#allocation4 + $0x78] sm:$0xff] %vm516, %v1469
          %1486 = vst.msk [vmem:[#allocation2] sm:$0xff] %vm1164, %v892
          %1487 = vst.msk [vmem:[#allocation2 + $0x8] sm:$0xff] %vm1164, %v893
          %1488 = vst.msk [vmem:[#allocation2 + $0x10] sm:$0xff] %vm1164, %v894
          %1489 = vst.msk [vmem:[#allocation2 + $0x18] sm:$0xff] %vm1164, %v895
          %1490 = vst.msk [vmem:[#allocation2 + $0x20] sm:$0xff] %vm1164, %v896
          %1491 = vst.msk [vmem:[#allocation2 + $0x28] sm:$0xff] %vm1164, %v897
          %1492 = vst.msk [vmem:[#allocation2 + $0x30] sm:$0xff] %vm1164, %v898
          %1493 = vst.msk [vmem:[#allocation2 + $0x38] sm:$0xff] %vm1164, %v899
          %1494 = vst.msk [vmem:[#allocation2 + $0x40] sm:$0xff] %vm1164, %v900
          %1495 = vst.msk [vmem:[#allocation2 + $0x48] sm:$0xff] %vm1164, %v901
          %1496 = vst.msk [vmem:[#allocation2 + $0x50] sm:$0xff] %vm1164, %v902
          %1497 = vst.msk [vmem:[#allocation2 + $0x58] sm:$0xff] %vm1164, %v903
          %1498 = vst.msk [vmem:[#allocation2 + $0x60] sm:$0xff] %vm1164, %v904
          %1499 = vst.msk [vmem:[#allocation2 + $0x68] sm:$0xff] %vm1164, %v905
          %1500 = vst.msk [vmem:[#allocation2 + $0x70] sm:$0xff] %vm1164, %v906
          %1501 = vst.msk [vmem:[#allocation2 + $0x78] sm:$0xff] %vm1164, %v907
        $region52: #{gpt_self_attention.3} parent=39 // pred_fallthru
          _
        %p1502 = scmp.eq.s32.totalorder %s28, 1
        // Predicated region
        $region53: #{gpt_self_attention.3} parent=39 // pred_check
          %p1503 = pneg %p1502
        $region54: #{gpt_self_attention.3} parent=39 // pred_check_branch
          %1505 = sbr.rel (%p1503) target = $region56
        $region55: #{gpt_self_attention.3} parent=39 // pred_region
          %v1506 = vld [vmem:[#allocation4] sm:$0xff]
          %v1507 = vld [vmem:[#allocation4 + $0x8] sm:$0xff]
          %v1508 = vld [vmem:[#allocation4 + $0x10] sm:$0xff]
          %v1509 = vld [vmem:[#allocation4 + $0x18] sm:$0xff]
          %v1510 = vld [vmem:[#allocation4 + $0x20] sm:$0xff]
          %v1511 = vld [vmem:[#allocation4 + $0x28] sm:$0xff]
          %v1512 = vld [vmem:[#allocation4 + $0x30] sm:$0xff]
          %v1513 = vld [vmem:[#allocation4 + $0x38] sm:$0xff]
          %v1514 = vld [vmem:[#allocation4 + $0x40] sm:$0xff]
          %v1515 = vld [vmem:[#allocation4 + $0x48] sm:$0xff]
          %v1516 = vld [vmem:[#allocation4 + $0x50] sm:$0xff]
          %v1517 = vld [vmem:[#allocation4 + $0x58] sm:$0xff]
          %v1518 = vld [vmem:[#allocation4 + $0x60] sm:$0xff]
          %v1519 = vld [vmem:[#allocation4 + $0x68] sm:$0xff]
          %v1520 = vld [vmem:[#allocation4 + $0x70] sm:$0xff]
          %v1521 = vld [vmem:[#allocation4 + $0x78] sm:$0xff]
          %v1522 = vld [vmem:[#allocation3] sm:$0xff]
          %v1523 = vld [vmem:[#allocation3 + $0x8] sm:$0xff]
          %v1524 = vld [vmem:[#allocation3 + $0x10] sm:$0xff]
          %v1525 = vld [vmem:[#allocation3 + $0x18] sm:$0xff]
          %v1526 = vld [vmem:[#allocation3 + $0x20] sm:$0xff]
          %v1527 = vld [vmem:[#allocation3 + $0x28] sm:$0xff]
          %v1528 = vld [vmem:[#allocation3 + $0x30] sm:$0xff]
          %v1529 = vld [vmem:[#allocation3 + $0x38] sm:$0xff]
          %v1530 = vld [vmem:[#allocation3 + $0x40] sm:$0xff]
          %v1531 = vld [vmem:[#allocation3 + $0x48] sm:$0xff]
          %v1532 = vld [vmem:[#allocation3 + $0x50] sm:$0xff]
          %v1533 = vld [vmem:[#allocation3 + $0x58] sm:$0xff]
          %v1534 = vld [vmem:[#allocation3 + $0x60] sm:$0xff]
          %v1535 = vld [vmem:[#allocation3 + $0x68] sm:$0xff]
          %v1536 = vld [vmem:[#allocation3 + $0x70] sm:$0xff]
          %v1537 = vld [vmem:[#allocation3 + $0x78] sm:$0xff]
          %v1538 = vrcp.pop %v1522
          %v1539 = vrcp.pop %v1523
          %v1540 = vrcp.pop %v1524
          %v1541 = vrcp.pop %v1525
          %v1542 = vrcp.pop %v1526
          %v1543 = vrcp.pop %v1527
          %v1544 = vrcp.pop %v1528
          %v1545 = vrcp.pop %v1529
          %v1546 = vrcp.pop %v1530
          %v1547 = vrcp.pop %v1531
          %v1548 = vrcp.pop %v1532
          %v1549 = vrcp.pop %v1533
          %v1550 = vrcp.pop %v1534
          %v1551 = vrcp.pop %v1535
          %v1552 = vrcp.pop %v1536
          %v1553 = vrcp.pop %v1537
          %1555 = vset.pattern.permute.xlu0 0
          %1556 = vperm.xlu0 %1555, %v1538
          %v1557 = vpop.permute.xlu0 %1556
          %1560 = vset.pattern.permute.xlu0 0
          %1561 = vperm.xlu0 %1560, %v1539
          %v1562 = vpop.permute.xlu0 %1561
          %1565 = vset.pattern.permute.xlu0 0
          %1566 = vperm.xlu0 %1565, %v1540
          %v1567 = vpop.permute.xlu0 %1566
          %1570 = vset.pattern.permute.xlu0 0
          %1571 = vperm.xlu0 %1570, %v1541
          %v1572 = vpop.permute.xlu0 %1571
          %1575 = vset.pattern.permute.xlu0 0
          %1576 = vperm.xlu0 %1575, %v1542
          %v1577 = vpop.permute.xlu0 %1576
          %1580 = vset.pattern.permute.xlu0 0
          %1581 = vperm.xlu0 %1580, %v1543
          %v1582 = vpop.permute.xlu0 %1581
          %1585 = vset.pattern.permute.xlu0 0
          %1586 = vperm.xlu0 %1585, %v1544
          %v1587 = vpop.permute.xlu0 %1586
          %1590 = vset.pattern.permute.xlu0 0
          %1591 = vperm.xlu0 %1590, %v1545
          %v1592 = vpop.permute.xlu0 %1591
          %1595 = vset.pattern.permute.xlu0 0
          %1596 = vperm.xlu0 %1595, %v1546
          %v1597 = vpop.permute.xlu0 %1596
          %1600 = vset.pattern.permute.xlu0 0
          %1601 = vperm.xlu0 %1600, %v1547
          %v1602 = vpop.permute.xlu0 %1601
          %1605 = vset.pattern.permute.xlu0 0
          %1606 = vperm.xlu0 %1605, %v1548
          %v1607 = vpop.permute.xlu0 %1606
          %1610 = vset.pattern.permute.xlu0 0
          %1611 = vperm.xlu0 %1610, %v1549
          %v1612 = vpop.permute.xlu0 %1611
          %1615 = vset.pattern.permute.xlu0 0
          %1616 = vperm.xlu0 %1615, %v1550
          %v1617 = vpop.permute.xlu0 %1616
          %1620 = vset.pattern.permute.xlu0 0
          %1621 = vperm.xlu0 %1620, %v1551
          %v1622 = vpop.permute.xlu0 %1621
          %1625 = vset.pattern.permute.xlu0 0
          %1626 = vperm.xlu0 %1625, %v1552
          %v1627 = vpop.permute.xlu0 %1626
          %1630 = vset.pattern.permute.xlu0 0
          %1631 = vperm.xlu0 %1630, %v1553
          %v1632 = vpop.permute.xlu0 %1631
          %v1634 = vmul.f32 %v1506, %v1557
          %v1635 = vmul.f32 %v1507, %v1562
          %v1636 = vmul.f32 %v1508, %v1567
          %v1637 = vmul.f32 %v1509, %v1572
          %v1638 = vmul.f32 %v1510, %v1577
          %v1639 = vmul.f32 %v1511, %v1582
          %v1640 = vmul.f32 %v1512, %v1587
          %v1641 = vmul.f32 %v1513, %v1592
          %v1642 = vmul.f32 %v1514, %v1597
          %v1643 = vmul.f32 %v1515, %v1602
          %v1644 = vmul.f32 %v1516, %v1607
          %v1645 = vmul.f32 %v1517, %v1612
          %v1646 = vmul.f32 %v1518, %v1617
          %v1647 = vmul.f32 %v1519, %v1622
          %v1648 = vmul.f32 %v1520, %v1627
          %v1649 = vmul.f32 %v1521, %v1632
          %v1650 = vld [vmem:[#allocation5] sm:$0xff]
          %v1651 = vld [vmem:[#allocation5 + $0x8] sm:$0xff]
          %v1652 = vld [vmem:[#allocation5 + $0x10] sm:$0xff]
          %v1653 = vld [vmem:[#allocation5 + $0x18] sm:$0xff]
          %v1654 = vld [vmem:[#allocation5 + $0x20] sm:$0xff]
          %v1655 = vld [vmem:[#allocation5 + $0x28] sm:$0xff]
          %v1656 = vld [vmem:[#allocation5 + $0x30] sm:$0xff]
          %v1657 = vld [vmem:[#allocation5 + $0x38] sm:$0xff]
          %v1658 = vld [vmem:[#allocation5 + $0x40] sm:$0xff]
          %v1659 = vld [vmem:[#allocation5 + $0x48] sm:$0xff]
          %v1660 = vld [vmem:[#allocation5 + $0x50] sm:$0xff]
          %v1661 = vld [vmem:[#allocation5 + $0x58] sm:$0xff]
          %v1662 = vld [vmem:[#allocation5 + $0x60] sm:$0xff]
          %v1663 = vld [vmem:[#allocation5 + $0x68] sm:$0xff]
          %v1664 = vld [vmem:[#allocation5 + $0x70] sm:$0xff]
          %v1665 = vld [vmem:[#allocation5 + $0x78] sm:$0xff]
          %v1666 = vld [vmem:[%s400] sm:$0xff]
          %v1667 = vld [vmem:[%s400 + $0x8] sm:$0xff]
          %v1668 = vld [vmem:[%s400 + $0x10] sm:$0xff]
          %v1669 = vld [vmem:[%s400 + $0x18] sm:$0xff]
          %vm1670 = vcmask 261120
          %v1672 = vsel %vm1670, %v1634, 0
          %v1675 = vsel %vm1670, %v1635, 0
          %v1678 = vsel %vm1670, %v1636, 0
          %v1681 = vsel %vm1670, %v1637, 0
          %v1684 = vsel %vm1670, %v1638, 0
          %v1687 = vsel %vm1670, %v1639, 0
          %v1690 = vsel %vm1670, %v1640, 0
          %v1693 = vsel %vm1670, %v1641, 0
          %v1696 = vsel %vm1670, %v1642, 0
          %v1699 = vsel %vm1670, %v1643, 0
          %v1702 = vsel %vm1670, %v1644, 0
          %v1705 = vsel %vm1670, %v1645, 0
          %v1708 = vsel %vm1670, %v1646, 0
          %v1711 = vsel %vm1670, %v1647, 0
          %v1714 = vsel %vm1670, %v1648, 0
          %v1717 = vsel %vm1670, %v1649, 0
          %1719 = vmatprep.subr.mxu0 0.0
          %1720 = vmatpush1.msra.mxu0 0.0
          %1721 = vmatprep.subr.mxu0 0.0
          %1722 = vmatpush1.msra.mxu0 0.0
          %1723 = vmatprep.subr.mxu0 0.0
          %1724 = vmatpush1.msra.mxu0 0.0
          %1725 = vmatprep.subr.mxu0 0.0
          %1726 = vmatpush1.msra.mxu0 0.0
          %1727 = vmatprep.subr.mxu0 0.0
          %1728 = vmatpush1.msra.mxu0 0.0
          %1729 = vmatprep.subr.mxu0 0.0
          %1730 = vmatpush1.msra.mxu0 0.0
          %1731 = vmatprep.subr.mxu0 0.0
          %1732 = vmatpush1.msra.mxu0 0.0
          %1733 = vmatprep.subr.mxu0 0.0
          %1734 = vmatpush1.msra.mxu0 0.0
          %1735 = vmatprep.subr.mxu0 0.0
          %1736 = vmatpush1.msra.mxu0 0.0
          %1737 = vmatprep.subr.mxu0 0.0
          %1738 = vmatpush1.msra.mxu0 0.0
          %1739 = vmatprep.subr.mxu0 0.0
          %1740 = vmatpush1.msra.mxu0 0.0
          %1741 = vmatprep.subr.mxu0 0.0
          %1742 = vmatpush1.msra.mxu0 0.0
          %1743 = vmatprep.subr.mxu0 0.0
          %1744 = vmatpush1.msra.mxu0 %v1669
          %1745 = vmatprep.subr.mxu0 0.0
          %1746 = vmatpush1.msra.mxu0 %v1668
          %1747 = vmatprep.subr.mxu0 0.0
          %1748 = vmatpush1.msra.mxu0 %v1667
          %1749 = vmatprep.subr.mxu0 0.0
          %1750 = vmatpush1.msra.mxu0 %v1666
          %1751 = vmatprep.subr.mxu0 0.0
          %1752 = vmatpush2.msra.mxu0 0.0
          %1753 = vmatprep.subr.mxu0 0.0
          %1754 = vmatpush2.msra.mxu0 0.0
          %1755 = vmatprep.subr.mxu0 0.0
          %1756 = vmatpush2.msra.mxu0 0.0
          %1757 = vmatprep.subr.mxu0 0.0
          %1758 = vmatpush2.msra.mxu0 0.0
          %1759 = vmatprep.subr.mxu0 0.0
          %1760 = vmatpush2.msra.mxu0 0.0
          %1761 = vmatprep.subr.mxu0 0.0
          %1762 = vmatpush2.msra.mxu0 0.0
          %1763 = vmatprep.subr.mxu0 0.0
          %1764 = vmatpush2.msra.mxu0 0.0
          %1765 = vmatprep.subr.mxu0 0.0
          %1766 = vmatpush2.msra.mxu0 0.0
          %1767 = vmatprep.subr.mxu0 0.0
          %1768 = vmatpush2.msra.mxu0 0.0
          %1769 = vmatprep.subr.mxu0 0.0
          %1770 = vmatpush2.msra.mxu0 0.0
          %1771 = vmatprep.subr.mxu0 0.0
          %1772 = vmatpush2.msra.mxu0 0.0
          %1773 = vmatprep.subr.mxu0 0.0
          %1774 = vmatpush2.msra.mxu0 0.0
          %1775 = vmatprep.subr.mxu0 0.0
          %1776 = vmatpush2.msra.mxu0 0.0
          %1777 = vmatprep.subr.mxu0 0.0
          %1778 = vmatpush2.msra.mxu0 0.0
          %1779 = vmatprep.subr.mxu0 0.0
          %1780 = vmatpush2.msra.mxu0 0.0
          %1781 = vmatprep.subr.mxu0 0.0
          %1782 = vmatpush2.msra.mxu0 0.0
          %1783 = vmatprep.mubr.f32.mxu0 0.0
          %1784 = vmatmul.mubr.f32.gmra.mxu0 %v1672
          %v1785 = vpop.f32.mrf.mxu0
          %v1786 = vadd.f32 0.0, %v1785
          %v1787 = vpop.f32.mrf.mxu0
          %1788 = vmatprep.mubr.f32.mxu0 0.0
          %1789 = vmatmul.mubr.f32.gmra.mxu0 %v1675
          %v1790 = vpop.f32.mrf.mxu0
          %v1791 = vadd.f32 0.0, %v1790
          %v1792 = vpop.f32.mrf.mxu0
          %1793 = vmatprep.mubr.f32.mxu0 0.0
          %1794 = vmatmul.mubr.f32.gmra.mxu0 %v1678
          %v1795 = vpop.f32.mrf.mxu0
          %v1796 = vadd.f32 0.0, %v1795
          %v1797 = vpop.f32.mrf.mxu0
          %1798 = vmatprep.mubr.f32.mxu0 0.0
          %1799 = vmatmul.mubr.f32.gmra.mxu0 %v1681
          %v1800 = vpop.f32.mrf.mxu0
          %v1801 = vadd.f32 0.0, %v1800
          %v1802 = vpop.f32.mrf.mxu0
          %1803 = vmatprep.mubr.f32.mxu0 0.0
          %1804 = vmatmul.mubr.f32.gmra.mxu0 %v1684
          %v1805 = vpop.f32.mrf.mxu0
          %v1806 = vadd.f32 0.0, %v1805
          %v1807 = vpop.f32.mrf.mxu0
          %1808 = vmatprep.mubr.f32.mxu0 0.0
          %1809 = vmatmul.mubr.f32.gmra.mxu0 %v1687
          %v1810 = vpop.f32.mrf.mxu0
          %v1811 = vadd.f32 0.0, %v1810
          %v1812 = vpop.f32.mrf.mxu0
          %1813 = vmatprep.mubr.f32.mxu0 0.0
          %1814 = vmatmul.mubr.f32.gmra.mxu0 %v1690
          %v1815 = vpop.f32.mrf.mxu0
          %v1816 = vadd.f32 0.0, %v1815
          %v1817 = vpop.f32.mrf.mxu0
          %1818 = vmatprep.mubr.f32.mxu0 0.0
          %1819 = vmatmul.mubr.f32.gmra.mxu0 %v1693
          %v1820 = vpop.f32.mrf.mxu0
          %v1821 = vadd.f32 0.0, %v1820
          %v1822 = vpop.f32.mrf.mxu0
          %1823 = vmatprep.mubr.f32.mxu0 0.0
          %1824 = vmatmul.mubr.f32.gmra.mxu0 %v1696
          %v1825 = vpop.f32.mrf.mxu0
          %v1826 = vadd.f32 0.0, %v1825
          %v1827 = vpop.f32.mrf.mxu0
          %1828 = vmatprep.mubr.f32.mxu0 0.0
          %1829 = vmatmul.mubr.f32.gmra.mxu0 %v1699
          %v1830 = vpop.f32.mrf.mxu0
          %v1831 = vadd.f32 0.0, %v1830
          %v1832 = vpop.f32.mrf.mxu0
          %1833 = vmatprep.mubr.f32.mxu0 0.0
          %1834 = vmatmul.mubr.f32.gmra.mxu0 %v1702
          %v1835 = vpop.f32.mrf.mxu0
          %v1836 = vadd.f32 0.0, %v1835
          %v1837 = vpop.f32.mrf.mxu0
          %1838 = vmatprep.mubr.f32.mxu0 0.0
          %1839 = vmatmul.mubr.f32.gmra.mxu0 %v1705
          %v1840 = vpop.f32.mrf.mxu0
          %v1841 = vadd.f32 0.0, %v1840
          %v1842 = vpop.f32.mrf.mxu0
          %1843 = vmatprep.mubr.f32.mxu0 0.0
          %1844 = vmatmul.mubr.f32.gmra.mxu0 %v1708
          %v1845 = vpop.f32.mrf.mxu0
          %v1846 = vadd.f32 0.0, %v1845
          %v1847 = vpop.f32.mrf.mxu0
          %1848 = vmatprep.mubr.f32.mxu0 0.0
          %1849 = vmatmul.mubr.f32.gmra.mxu0 %v1711
          %v1850 = vpop.f32.mrf.mxu0
          %v1851 = vadd.f32 0.0, %v1850
          %v1852 = vpop.f32.mrf.mxu0
          %1853 = vmatprep.mubr.f32.mxu0 0.0
          %1854 = vmatmul.mubr.f32.gmra.mxu0 %v1714
          %v1855 = vpop.f32.mrf.mxu0
          %v1856 = vadd.f32 0.0, %v1855
          %v1857 = vpop.f32.mrf.mxu0
          %1858 = vmatprep.mubr.f32.mxu0 0.0
          %1859 = vmatmul.mubr.f32.gmra.mxu0 %v1717
          %v1860 = vpop.f32.mrf.mxu0
          %v1861 = vadd.f32 0.0, %v1860
          %v1862 = vpop.f32.mrf.mxu0
          %1863 = vdwg.mxu0
          %v1864 = vadd.f32 %v1650, %v1786
          %v1865 = vadd.f32 %v1651, %v1791
          %v1866 = vadd.f32 %v1652, %v1796
          %v1867 = vadd.f32 %v1653, %v1801
          %v1868 = vadd.f32 %v1654, %v1806
          %v1869 = vadd.f32 %v1655, %v1811
          %v1870 = vadd.f32 %v1656, %v1816
          %v1871 = vadd.f32 %v1657, %v1821
          %v1872 = vadd.f32 %v1658, %v1826
          %v1873 = vadd.f32 %v1659, %v1831
          %v1874 = vadd.f32 %v1660, %v1836
          %v1875 = vadd.f32 %v1661, %v1841
          %v1876 = vadd.f32 %v1662, %v1846
          %v1877 = vadd.f32 %v1663, %v1851
          %v1878 = vadd.f32 %v1664, %v1856
          %v1879 = vadd.f32 %v1665, %v1861
          %1880 = vst [vmem:[#allocation5] sm:$0xff] %v1864
          %1881 = vst [vmem:[#allocation5 + $0x8] sm:$0xff] %v1865
          %1882 = vst [vmem:[#allocation5 + $0x10] sm:$0xff] %v1866
          %1883 = vst [vmem:[#allocation5 + $0x18] sm:$0xff] %v1867
          %1884 = vst [vmem:[#allocation5 + $0x20] sm:$0xff] %v1868
          %1885 = vst [vmem:[#allocation5 + $0x28] sm:$0xff] %v1869
          %1886 = vst [vmem:[#allocation5 + $0x30] sm:$0xff] %v1870
          %1887 = vst [vmem:[#allocation5 + $0x38] sm:$0xff] %v1871
          %1888 = vst [vmem:[#allocation5 + $0x40] sm:$0xff] %v1872
          %1889 = vst [vmem:[#allocation5 + $0x48] sm:$0xff] %v1873
          %1890 = vst [vmem:[#allocation5 + $0x50] sm:$0xff] %v1874
          %1891 = vst [vmem:[#allocation5 + $0x58] sm:$0xff] %v1875
          %1892 = vst [vmem:[#allocation5 + $0x60] sm:$0xff] %v1876
          %1893 = vst [vmem:[#allocation5 + $0x68] sm:$0xff] %v1877
          %1894 = vst [vmem:[#allocation5 + $0x70] sm:$0xff] %v1878
          %1895 = vst [vmem:[#allocation5 + $0x78] sm:$0xff] %v1879
        $region56: #{gpt_self_attention.3} parent=39 // pred_fallthru
          _
        %p1896 = scmp.eq.s32.totalorder %s27, 3
        %p1897 = pnand %p1896, %p1502
        %p1898 = pneg %p1897
        // Predicated region
        $region57: #{gpt_self_attention.3} parent=39 // pred_check
          _
        $region58: #{gpt_self_attention.3} parent=39 // pred_check_branch
          %1900 = sbr.rel (%p1897) target = $region60
        $region59: #{gpt_self_attention.3} parent=39 // pred_region
          %v1901 = vld [vmem:[#allocation5] sm:$0xff]
          %v1902 = vld [vmem:[#allocation5 + $0x8] sm:$0xff]
          %v1903 = vld [vmem:[#allocation5 + $0x10] sm:$0xff]
          %v1904 = vld [vmem:[#allocation5 + $0x18] sm:$0xff]
          %v1905 = vld [vmem:[#allocation5 + $0x20] sm:$0xff]
          %v1906 = vld [vmem:[#allocation5 + $0x28] sm:$0xff]
          %v1907 = vld [vmem:[#allocation5 + $0x30] sm:$0xff]
          %v1908 = vld [vmem:[#allocation5 + $0x38] sm:$0xff]
          %v1909 = vld [vmem:[#allocation5 + $0x40] sm:$0xff]
          %v1910 = vld [vmem:[#allocation5 + $0x48] sm:$0xff]
          %v1911 = vld [vmem:[#allocation5 + $0x50] sm:$0xff]
          %v1912 = vld [vmem:[#allocation5 + $0x58] sm:$0xff]
          %v1913 = vld [vmem:[#allocation5 + $0x60] sm:$0xff]
          %v1914 = vld [vmem:[#allocation5 + $0x68] sm:$0xff]
          %v1915 = vld [vmem:[#allocation5 + $0x70] sm:$0xff]
          %v1916 = vld [vmem:[#allocation5 + $0x78] sm:$0xff]
          %v1917 = vld [vmem:[%s4] sm:$0x1]
          %v1919 = vlaneseq
          %v1920 = vshrl.u32 %v1919, 7
          %v1921 = vsub.s32 0, %v1920
          %v1922 = vrot.slane %v1917, %v1921
          %v1924 = vadd.f32 %v1901, %v1922
          %v1925 = vadd.f32 %v1902, %v1922
          %v1926 = vadd.f32 %v1903, %v1922
          %v1927 = vadd.f32 %v1904, %v1922
          %v1928 = vadd.f32 %v1905, %v1922
          %v1929 = vadd.f32 %v1906, %v1922
          %v1930 = vadd.f32 %v1907, %v1922
          %v1931 = vadd.f32 %v1908, %v1922
          %v1932 = vadd.f32 %v1909, %v1922
          %v1933 = vadd.f32 %v1910, %v1922
          %v1934 = vadd.f32 %v1911, %v1922
          %v1935 = vadd.f32 %v1912, %v1922
          %v1936 = vadd.f32 %v1913, %v1922
          %v1937 = vadd.f32 %v1914, %v1922
          %v1938 = vadd.f32 %v1915, %v1922
          %v1939 = vadd.f32 %v1916, %v1922
          %1940 = vst [vmem:[%s353] sm:$0xff] %v1924
          %1941 = vst [vmem:[%s353 + $0x8] sm:$0xff] %v1925
          %1942 = vst [vmem:[%s353 + $0x10] sm:$0xff] %v1926
          %1943 = vst [vmem:[%s353 + $0x18] sm:$0xff] %v1927
          %1944 = vst [vmem:[%s353 + $0x20] sm:$0xff] %v1928
          %1945 = vst [vmem:[%s353 + $0x28] sm:$0xff] %v1929
          %1946 = vst [vmem:[%s353 + $0x30] sm:$0xff] %v1930
          %1947 = vst [vmem:[%s353 + $0x38] sm:$0xff] %v1931
          %1948 = vst [vmem:[%s353 + $0x40] sm:$0xff] %v1932
          %1949 = vst [vmem:[%s353 + $0x48] sm:$0xff] %v1933
          %1950 = vst [vmem:[%s353 + $0x50] sm:$0xff] %v1934
          %1951 = vst [vmem:[%s353 + $0x58] sm:$0xff] %v1935
          %1952 = vst [vmem:[%s353 + $0x60] sm:$0xff] %v1936
          %1953 = vst [vmem:[%s353 + $0x68] sm:$0xff] %v1937
          %1954 = vst [vmem:[%s353 + $0x70] sm:$0xff] %v1938
          %1955 = vst [vmem:[%s353 + $0x78] sm:$0xff] %v1939
        $region60: #{gpt_self_attention.3} parent=39 // pred_fallthru
          _
        %s1956 = sand.u32 %s192, 1
        %s1957 = scalar_lea.sflag [#allocation7], %s1956
        %s1958 = sand.u32 %s192, 1
        %s1959 = smul.addr %s1958, 128
        %s1960 = scalar_lea.vmem [#allocation6], %s1959
        // Predicated region
        $region61: #{gpt_self_attention.3} parent=39 // pred_check
          %p1961 = pneg %p202
        $region62: #{gpt_self_attention.3} parent=39 // pred_check_branch
          %1963 = sbr.rel (%p1961) target = $region64
        $region63: #{gpt_self_attention.3} parent=39 // pred_region
          %s1964 = smul.u32 16, %s26
          %s1966 = ssub.s32 2048, 2048
          %1967 = vsyncadd %s1957, %s1966
          %s1968 = smul.addr %s25, 32
          %s1969 = sadd.s32 %s1964, %s1968
          %s1970 = smul.addr %s1969, 128
          %s1971 = scalar_lea.hbm %s5, %s1970
          %s1972 = sshll.u32 %s1960, 4
          %s1973 = int_to_ptr.vmem [resolvable:$true] %s1972
          %1978 = dma.vmem_to_hbm [thread:$0]  %s1973, 2048, %s1971, %s1957, 128, 128, 8
        $region64: #{gpt_self_attention.3} parent=39 // pred_fallthru
          _
      $region40: #{gpt_self_attention.3} parent=5 // pred_fallthru
        _
      %p1979 = scmp.le.s32.totalorder 2, %s14
      // Predicated region
      $region65: #{gpt_self_attention.3} parent=5 // pred_check
        %p1980 = pneg %p1979
      $region66: #{gpt_self_attention.3} parent=5 // pred_check_branch
        %1982 = sbr.rel (%p1980) target = $region68
      $region67: #{gpt_self_attention.3} parent=5 // pred_region
        %s1983 = ssub.s32 %s14, 2
        // Predicated region
        $region69: #{gpt_self_attention.3} parent=67 // pred_check
          %p1984 = pneg %p208
        $region70: #{gpt_self_attention.3} parent=67 // pred_check_branch
          %1986 = sbr.rel (%p1984) target = $region72
        $region71: #{gpt_self_attention.3} parent=67 // pred_region
          %s1987 = sand.u32 %s193, 1
          %s1988 = scalar_lea.sflag [#allocation7], %s1987
          %s1989 = sand.u32 %s193, 1
          %s1990 = smul.addr %s1989, 128
          %s1991 = scalar_lea.vmem [#allocation6], %s1990
          %1992 = dma.done %s1988, 2048
        $region72: #{gpt_self_attention.3} parent=67 // pred_fallthru
          _
      $region68: #{gpt_self_attention.3} parent=5 // pred_fallthru
        _
    $region6: #{gpt_self_attention.3} parent=1 // loop_footer
      %s18 = sadd.s32 1, %s14
    $region7: #{gpt_self_attention.3} parent=1 // loop_footer_branch
      %13 = sbr.rel target = $region3
    $region8: #{gpt_self_attention.3} parent=1 // loop_exit
      _
    %1993 = vsyncpa [#allocation7], 1
    %s1994 = scalar_lea.sflag [#allocation7], 1
    %1995 = vsyncpa %s1994, 1

</llo_original>
